<compile_context>
chip_gen: v7x
topology: tpu7x:2x2x1
jax: 0.10.0
libtpu: 0.0.40
codegen_flags: <defaults>
</compile_context>

<pallas_src>
import jax
import jax.numpy as jnp
from jax.experimental import pallas as pl
from jax.experimental.pallas import tpu as pltpu

# ----------------------------- config ---------------------------------------
VOCAB = 64
VOCAB_PAD = 128        # lane-dense lm_head output width (pad lanes biased to -1e30)
N_EMBED = 32
N_HEAD = 4
BLOCK_SIZE = 8         # max sequence length
N_LAYERS = 2
HEAD_DIM = N_EMBED // N_HEAD
FF_DIM = 4 * N_EMBED
LN_EPS = 1e-5
ATTN_SCALE = 1.0 / (HEAD_DIM ** 0.5)
PER_LAYER = 12         # param arrays per transformer block
MM_DTYPE = jnp.bfloat16   # MXU operand dtype (set to jnp.float32 for exact-f32 parity)


# ----------------------------- kernel ----------------------------------------
def _layernorm(x, gamma, beta):
    # f32 elementwise path (v5e-safe)
    mu = jnp.mean(x, axis=-1, keepdims=True)
    var = jnp.mean((x - mu) ** 2, axis=-1, keepdims=True)
    return (x - mu) * jax.lax.rsqrt(var + LN_EPS) * gamma + beta


def gpt_kernel(idx_ref, tok_ref, pos_ref, *refs):
    """Fused forward.

    refs = N_LAYERS*12 block params, 4 head params, out_ref (B, T, VOCAB_PAD).
    """
    out_ref = refs[-1]
    prefs = refs[:-1]

    B, T, _ = out_ref.shape
    C = tok_ref.shape[1]
    BT = B * T

    # ---- fused token-embedding gather: one-hot(idx) @ tok_table -------------
    # Exact (one-hot is exact, table stays f32); a single tiny MXU push replaces
    # the XLA gather launch + (B,T,C) HBM round trip.
    ids = idx_ref[...]                                               # (BT, 1) int32
    vocab_iota = jax.lax.broadcasted_iota(jnp.int32, (BT, VOCAB), 1)
    onehot = (ids == vocab_iota).astype(jnp.float32)                 # (BT, VOCAB)
    x = jnp.dot(onehot, tok_ref[...], preferred_element_type=jnp.float32)
    # positional embedding: whole table passed, sliced to T here
    x = (x.reshape(B, T, C) + pos_ref[0:T, :][None, :, :]).reshape(BT, C)

    # causal additive mask, built once and reused by every layer / head
    row = jax.lax.broadcasted_iota(jnp.int32, (T, T), 0)
    col = jax.lax.broadcasted_iota(jnp.int32, (T, T), 1)
    neg_bias = jnp.where(row >= col, 0.0, -1e30).astype(jnp.float32)

    for layer in range(N_LAYERS):
        (ln1g, ln1b, wqkv, bqkv, wo, bo,
         ln2g, ln2b, w1, b1, w2, b2) = prefs[layer * PER_LAYER:
                                             (layer + 1) * PER_LAYER]

        # ---- causal multi-head self-attention --------------------------------
        xn = _layernorm(x, ln1g[...], ln1b[...])
        qkv = jnp.dot(xn.astype(MM_DTYPE), wqkv[...],
                      preferred_element_type=jnp.float32) + bqkv[...]
        q = qkv[:, 0:C] * ATTN_SCALE        # scale applied once to the q slab
        k = qkv[:, C:2 * C]
        v = qkv[:, 2 * C:3 * C]

        wo_full = wo[...]                   # load once, slice per head
        att = jnp.zeros((BT, C), jnp.float32)
        # Per-head static loop kept on purpose: at T=8/HEAD_DIM=8 the batched
        # (B*H)-form needs a 2-batch-dim dot_general / minor-dim concat whose
        # Mosaic lowering is riskier than the few extra (tiny) MXU pushes here.
        for h in range(N_HEAD):
            sl = slice(h * HEAD_DIM, (h + 1) * HEAD_DIM)
            qh = q[:, sl].reshape(B, T, HEAD_DIM).astype(MM_DTYPE)
            kh = k[:, sl].reshape(B, T, HEAD_DIM).astype(MM_DTYPE)
            vh = v[:, sl].reshape(B, T, HEAD_DIM).astype(MM_DTYPE)
            s = jnp.einsum('btd,bsd->bts', qh, kh,
                           preferred_element_type=jnp.float32)
            s = s + neg_bias[None, :, :]
            s = s - jnp.max(s, axis=-1, keepdims=True)
            p = jnp.exp(s)                                           # f32 EUP/VPU
            p = p * pl.reciprocal(jnp.sum(p, axis=-1, keepdims=True),
                                  approx=True)
            oh = jnp.einsum('bts,bsd->btd', p.astype(MM_DTYPE), vh,
                            preferred_element_type=jnp.float32)
            # fold the output projection per head -> no concat materialized
            att = att + jnp.dot(oh.reshape(BT, HEAD_DIM).astype(MM_DTYPE),
                                wo_full[sl, :],
                                preferred_element_type=jnp.float32)
        x = x + att + bo[...]

        # ---- feed-forward (4x expansion, ReLU) --------------------------------
        xn2 = _layernorm(x, ln2g[...], ln2b[...])
        h1 = jnp.dot(xn2.astype(MM_DTYPE), w1[...],
                     preferred_element_type=jnp.float32) + b1[...]
        h1 = jnp.maximum(h1, 0.0)
        x = x + jnp.dot(h1.astype(MM_DTYPE), w2[...],
                        preferred_element_type=jnp.float32) + b2[...]

    # ---- final LayerNorm + lm_head (lane-dense, VOCAB padded to 128) ----------
    # Pad-lane bias is -1e30, so logits over the full padded width are already
    # softmax/CE-safe downstream — no wrapper slice needed.
    lng, lnb, wlm, blm = prefs[N_LAYERS * PER_LAYER:]
    xn = _layernorm(x, lng[...], lnb[...])
    logits = jnp.dot(xn.astype(MM_DTYPE), wlm[...],
                     preferred_element_type=jnp.float32) + blm[...]
    out_ref[...] = logits.reshape(B, T, VOCAB_PAD)


# ----------------------------- parameter init --------------------------------
def init_params(key):
    ks = iter(jax.random.split(key, 64))

    def nrm(shape, dt=jnp.float32):
        return (0.02 * jax.random.normal(next(ks), shape, jnp.float32)).astype(dt)

    zeros = lambda shape, dt=jnp.float32: jnp.zeros(shape, dt)
    ones = lambda shape, dt=jnp.float32: jnp.ones(shape, dt)

    # lm_head: weight padded to 128 output lanes (zero pad cols, bf16 operands);
    # bias pad lanes are -1e30 so padded logits are softmax/CE-safe as-is.
    wlm = jnp.zeros((N_EMBED, VOCAB_PAD), jnp.float32)
    wlm = wlm.at[:, :VOCAB].set(
        0.02 * jax.random.normal(next(ks), (N_EMBED, VOCAB), jnp.float32))
    wlm = wlm.astype(MM_DTYPE)
    blm = jnp.full((1, VOCAB_PAD), -1e30, jnp.float32).at[:, :VOCAB].set(0.0)

    params = {
        "tok_emb": nrm((VOCAB, N_EMBED)),          # f32: gathered exactly in-kernel
        "pos_emb": nrm((BLOCK_SIZE, N_EMBED)),     # f32
        "blocks": [],
        # final LN + lm_head
        "head": [ones((1, N_EMBED)), zeros((1, N_EMBED)), wlm, blm],
    }
    for _ in range(N_LAYERS):
        layer = [
            ones((1, N_EMBED)), zeros((1, N_EMBED)),                       # ln1 g/b
            nrm((N_EMBED, 3 * N_EMBED), MM_DTYPE), zeros((1, 3 * N_EMBED)),  # Wqkv, bqkv
            nrm((N_EMBED, N_EMBED), MM_DTYPE), zeros((1, N_EMBED)),          # Wo, bo
            ones((1, N_EMBED)), zeros((1, N_EMBED)),                       # ln2 g/b
            nrm((N_EMBED, FF_DIM), MM_DTYPE), zeros((1, FF_DIM)),            # W1, b1
            nrm((FF_DIM, N_EMBED), MM_DTYPE), zeros((1, N_EMBED)),           # W2, b2
        ]
        params["blocks"].append(layer)
    return params


# ----------------------------- forward ---------------------------------------
def gpt_forward(params, idx):
    """idx: int32 [B, T] token ids.

    Returns logits [B, T, VOCAB_PAD] (loss=None path). Columns >= VOCAB carry a
    -1e30 bias, so softmax/cross-entropy over the padded width matches the
    reference model over VOCAB; slice [..., :VOCAB] only if exact shape needed.
    """
    B, T = idx.shape
    idx_col = idx.reshape(B * T, 1).astype(jnp.int32)   # 64 B of glue; gather is in-kernel

    flat = []
    for layer in params["blocks"]:
        flat.extend(layer)
    flat.extend(params["head"])
    inputs = (idx_col, params["tok_emb"], params["pos_emb"], *flat)

    # advisory cost estimate so XLA can overlap neighboring ops with this call
    BT, C, H, D, F = B * T, N_EMBED, N_HEAD, HEAD_DIM, FF_DIM
    flops = 2 * BT * VOCAB * C                                   # embedding gather
    flops += N_LAYERS * (2 * BT * C * 3 * C                      # fused qkv
                         + H * 4 * B * T * T * D                 # scores + p@v
                         + 2 * BT * C * C                        # Wo (per-head fold)
                         + 2 * BT * C * F + 2 * BT * F * C)      # FFN
    flops += 2 * BT * C * VOCAB_PAD                              # lm_head
    transcendentals = N_LAYERS * H * B * T * (T + 1)             # exp + approx recip
    bytes_accessed = (sum(int(a.size) * a.dtype.itemsize for a in inputs)
                      + BT * VOCAB_PAD * 4)

    logits_pad = pl.pallas_call(
        gpt_kernel,
        out_shape=jax.ShapeDtypeStruct((B, T, VOCAB_PAD), jnp.float32),
        in_specs=[pl.BlockSpec(memory_space=pltpu.MemorySpace.VMEM)] * len(inputs),
        out_specs=pl.BlockSpec(memory_space=pltpu.MemorySpace.VMEM),
        cost_estimate=pl.CostEstimate(flops=flops,
                                      transcendentals=transcendentals,
                                      bytes_accessed=bytes_accessed),
    )(*inputs)                                           # no grid: whole model in VMEM
    return logits_pad


# ----------------------------- main -------------------------------------------
if __name__ == "__main__":
    key = jax.random.PRNGKey(0)
    pkey, ikey = jax.random.split(key)
    params = init_params(pkey)

    B, T = 2, BLOCK_SIZE
    idx = jax.random.randint(ikey, (B, T), 0, VOCAB, dtype=jnp.int32)

    logits_pad = jax.jit(gpt_forward)(params, idx)
    jax.block_until_ready(logits_pad)
    assert logits_pad.shape == (B, T, VOCAB_PAD)
    assert logits_pad.dtype == jnp.float32

    # Exact-vocab logits (reference semantics) are a cheap view outside the hot
    # path; pad lanes are -1e30 so they are also safe to feed to softmax/CE as-is.
    logits = logits_pad[:, :, :VOCAB]
    assert logits.shape == (B, T, VOCAB)
    assert bool(jnp.all(jnp.isfinite(logits)))
    assert bool(jnp.all(logits_pad[:, :, VOCAB:] < -1e29))

    # TODO(synk): cross-entropy loss branch (targets is not None) and the
    # generate() multinomial sampling loop are host/XLA-side concerns and are
    # not implemented; the reference forward is exercised with targets=None.
    print("KERNEL_OK")
</pallas_src>

<mosaic_0001>
module attributes {stable_mosaic.version = 11 : i64} {
  func.func @gpt_kernel(%arg0: memref<16x1xi32, #tpu.memory_space<vmem>>, %arg1: memref<64x32xf32, #tpu.memory_space<vmem>>, %arg2: memref<8x32xf32, #tpu.memory_space<vmem>>, %arg3: memref<1x32xf32, #tpu.memory_space<vmem>>, %arg4: memref<1x32xf32, #tpu.memory_space<vmem>>, %arg5: memref<32x96xbf16, #tpu.memory_space<vmem>>, %arg6: memref<1x96xf32, #tpu.memory_space<vmem>>, %arg7: memref<32x32xbf16, #tpu.memory_space<vmem>>, %arg8: memref<1x32xf32, #tpu.memory_space<vmem>>, %arg9: memref<1x32xf32, #tpu.memory_space<vmem>>, %arg10: memref<1x32xf32, #tpu.memory_space<vmem>>, %arg11: memref<32x128xbf16, #tpu.memory_space<vmem>>, %arg12: memref<1x128xf32, #tpu.memory_space<vmem>>, %arg13: memref<128x32xbf16, #tpu.memory_space<vmem>>, %arg14: memref<1x32xf32, #tpu.memory_space<vmem>>, %arg15: memref<1x32xf32, #tpu.memory_space<vmem>>, %arg16: memref<1x32xf32, #tpu.memory_space<vmem>>, %arg17: memref<32x96xbf16, #tpu.memory_space<vmem>>, %arg18: memref<1x96xf32, #tpu.memory_space<vmem>>, %arg19: memref<32x32xbf16, #tpu.memory_space<vmem>>, %arg20: memref<1x32xf32, #tpu.memory_space<vmem>>, %arg21: memref<1x32xf32, #tpu.memory_space<vmem>>, %arg22: memref<1x32xf32, #tpu.memory_space<vmem>>, %arg23: memref<32x128xbf16, #tpu.memory_space<vmem>>, %arg24: memref<1x128xf32, #tpu.memory_space<vmem>>, %arg25: memref<128x32xbf16, #tpu.memory_space<vmem>>, %arg26: memref<1x32xf32, #tpu.memory_space<vmem>>, %arg27: memref<1x32xf32, #tpu.memory_space<vmem>>, %arg28: memref<1x32xf32, #tpu.memory_space<vmem>>, %arg29: memref<32x128xbf16, #tpu.memory_space<vmem>>, %arg30: memref<1x128xf32, #tpu.memory_space<vmem>>, %arg31: memref<2x8x128xf32, #tpu.memory_space<vmem>>) attributes {dimension_semantics = [], scalar_prefetch = 0 : i64, scratch_operands = 0 : i64, tpu.core_type = #tpu.core_type<tc>} {
    %c0 = arith.constant 0 : index
    %c0_0 = arith.constant 0 : index
    %0 = vector.load %arg0[%c0, %c0_0] : memref<16x1xi32, #tpu.memory_space<vmem>>, vector<16x1xi32>
    %1 = tpu.iota {dimensions = array<i32: 1>} : vector<16x64xi32>
    %2 = vector.broadcast %0 : vector<16x1xi32> to vector<16x64xi32>
    %3 = arith.cmpi eq, %2, %1 : vector<16x64xi32>
    %4 = arith.extui %3 : vector<16x64xi1> to vector<16x64xi32>
    %5 = arith.sitofp %4 : vector<16x64xi32> to vector<16x64xf32>
    %c0_1 = arith.constant 0 : index
    %c0_2 = arith.constant 0 : index
    %6 = vector.load %arg1[%c0_1, %c0_2] : memref<64x32xf32, #tpu.memory_space<vmem>>, vector<64x32xf32>
    %cst = arith.constant dense<0.000000e+00> : vector<16x32xf32>
    %7 = tpu.matmul %5, %6, %cst {dimension_numbers = #tpu.dot_dimension_numbers<[1], [0], [0], [1], [0, 0, 1, 1], [], []>} : vector<16x64xf32>, vector<64x32xf32>, vector<16x32xf32> -> vector<16x32xf32>
    %8 = vector.shape_cast %7 : vector<16x32xf32> to vector<2x8x32xf32>
    %c0_3 = arith.constant 0 : index
    %c0_4 = arith.constant 0 : index
    %9 = vector.load %arg2[%c0_3, %c0_4] : memref<8x32xf32, #tpu.memory_space<vmem>>, vector<8x32xf32>
    %10 = vector.shape_cast %9 : vector<8x32xf32> to vector<1x8x32xf32>
    %11 = vector.broadcast %10 : vector<1x8x32xf32> to vector<2x8x32xf32>
    %12 = arith.addf %8, %11 : vector<2x8x32xf32>
    %13 = vector.shape_cast %12 : vector<2x8x32xf32> to vector<16x32xf32>
    %14 = tpu.iota {dimensions = array<i32: 0>} : vector<8x8xi32>
    %15 = tpu.iota {dimensions = array<i32: 1>} : vector<8x8xi32>
    %16 = arith.cmpi sge, %14, %15 : vector<8x8xi32>
    %cst_5 = arith.constant 0.000000e+00 : f32
    %cst_6 = arith.constant -1.000000e+30 : f32
    %17 = vector.broadcast %cst_5 : f32 to vector<8x8xf32>
    %18 = vector.broadcast %cst_6 : f32 to vector<8x8xf32>
    %19 = arith.select %16, %17, %18 : vector<8x8xi1>, vector<8x8xf32>
    %c0_7 = arith.constant 0 : index
    %c0_8 = arith.constant 0 : index
    %20 = vector.load %arg3[%c0_7, %c0_8] : memref<1x32xf32, #tpu.memory_space<vmem>>, vector<1x32xf32>
    %c0_9 = arith.constant 0 : index
    %c0_10 = arith.constant 0 : index
    %21 = vector.load %arg4[%c0_9, %c0_10] : memref<1x32xf32, #tpu.memory_space<vmem>>, vector<1x32xf32>
    %cst_11 = arith.constant dense<0.000000e+00> : vector<16xf32>
    %22 = vector.multi_reduction <add>, %13, %cst_11 [1] : vector<16x32xf32> to vector<16xf32>
    %23 = vector.shape_cast %22 : vector<16xf32> to vector<16x1xf32>
    %cst_12 = arith.constant 3.200000e+01 : f32
    %24 = vector.broadcast %cst_12 : f32 to vector<16x1xf32>
    %25 = arith.divf %23, %24 : vector<16x1xf32>
    %26 = vector.broadcast %25 : vector<16x1xf32> to vector<16x32xf32>
    %27 = arith.subf %13, %26 : vector<16x32xf32>
    %28 = arith.mulf %27, %27 : vector<16x32xf32>
    %cst_13 = arith.constant dense<0.000000e+00> : vector<16xf32>
    %29 = vector.multi_reduction <add>, %28, %cst_13 [1] : vector<16x32xf32> to vector<16xf32>
    %30 = vector.shape_cast %29 : vector<16xf32> to vector<16x1xf32>
    %cst_14 = arith.constant 3.200000e+01 : f32
    %31 = vector.broadcast %cst_14 : f32 to vector<16x1xf32>
    %32 = arith.divf %30, %31 : vector<16x1xf32>
    %33 = vector.broadcast %25 : vector<16x1xf32> to vector<16x32xf32>
    %34 = arith.subf %13, %33 : vector<16x32xf32>
    %cst_15 = arith.constant 9.99999974E-6 : f32
    %35 = vector.broadcast %cst_15 : f32 to vector<16x1xf32>
    %36 = arith.addf %32, %35 : vector<16x1xf32>
    %37 = math.rsqrt %36 : vector<16x1xf32>
    %38 = vector.broadcast %37 : vector<16x1xf32> to vector<16x32xf32>
    %39 = arith.mulf %34, %38 : vector<16x32xf32>
    %40 = vector.broadcast %20 : vector<1x32xf32> to vector<16x32xf32>
    %41 = arith.mulf %39, %40 : vector<16x32xf32>
    %42 = vector.broadcast %21 : vector<1x32xf32> to vector<16x32xf32>
    %43 = arith.addf %41, %42 : vector<16x32xf32>
    %44 = arith.truncf %43 : vector<16x32xf32> to vector<16x32xbf16>
    %c0_16 = arith.constant 0 : index
    %c0_17 = arith.constant 0 : index
    %45 = vector.load %arg5[%c0_16, %c0_17] : memref<32x96xbf16, #tpu.memory_space<vmem>>, vector<32x96xbf16>
    %cst_18 = arith.constant dense<0.000000e+00> : vector<16x96xf32>
    %46 = tpu.matmul %44, %45, %cst_18 {dimension_numbers = #tpu.dot_dimension_numbers<[1], [0], [0], [1], [0, 0, 1, 1], [], []>} : vector<16x32xbf16>, vector<32x96xbf16>, vector<16x96xf32> -> vector<16x96xf32>
    %c0_19 = arith.constant 0 : index
    %c0_20 = arith.constant 0 : index
    %47 = vector.load %arg6[%c0_19, %c0_20] : memref<1x96xf32, #tpu.memory_space<vmem>>, vector<1x96xf32>
    %48 = vector.broadcast %47 : vector<1x96xf32> to vector<16x96xf32>
    %49 = arith.addf %46, %48 : vector<16x96xf32>
    %50 = vector.extract_strided_slice %49 {offsets = [0, 0], sizes = [16, 32], strides = [1, 1]} : vector<16x96xf32> to vector<16x32xf32>
    %cst_21 = arith.constant 0.353553385 : f32
    %51 = vector.broadcast %cst_21 : f32 to vector<16x32xf32>
    %52 = arith.mulf %50, %51 : vector<16x32xf32>
    %53 = vector.extract_strided_slice %49 {offsets = [0, 32], sizes = [16, 32], strides = [1, 1]} : vector<16x96xf32> to vector<16x32xf32>
    %54 = vector.extract_strided_slice %49 {offsets = [0, 64], sizes = [16, 32], strides = [1, 1]} : vector<16x96xf32> to vector<16x32xf32>
    %c0_22 = arith.constant 0 : index
    %c0_23 = arith.constant 0 : index
    %55 = vector.load %arg7[%c0_22, %c0_23] : memref<32x32xbf16, #tpu.memory_space<vmem>>, vector<32x32xbf16>
    %cst_24 = arith.constant 0.000000e+00 : f32
    %56 = vector.broadcast %cst_24 : f32 to vector<16x32xf32>
    %57 = vector.extract_strided_slice %52 {offsets = [0, 0], sizes = [16, 8], strides = [1, 1]} : vector<16x32xf32> to vector<16x8xf32>
    %58 = vector.shape_cast %57 : vector<16x8xf32> to vector<2x8x8xf32>
    %59 = arith.truncf %58 : vector<2x8x8xf32> to vector<2x8x8xbf16>
    %60 = vector.extract_strided_slice %53 {offsets = [0, 0], sizes = [16, 8], strides = [1, 1]} : vector<16x32xf32> to vector<16x8xf32>
    %61 = vector.shape_cast %60 : vector<16x8xf32> to vector<2x8x8xf32>
    %62 = arith.truncf %61 : vector<2x8x8xf32> to vector<2x8x8xbf16>
    %63 = vector.extract_strided_slice %54 {offsets = [0, 0], sizes = [16, 8], strides = [1, 1]} : vector<16x32xf32> to vector<16x8xf32>
    %64 = vector.shape_cast %63 : vector<16x8xf32> to vector<2x8x8xf32>
    %65 = arith.truncf %64 : vector<2x8x8xf32> to vector<2x8x8xbf16>
    "tpu.trace_start"() <{level = 10 : i32, message = "btd,bsd->bts"}> : () -> ()
    %cst_25 = arith.constant dense<0.000000e+00> : vector<2x8x8xf32>
    %66 = tpu.matmul %59, %62, %cst_25 {dimension_numbers = #tpu.dot_dimension_numbers<[2], [2], [1], [1], [0, 0, 0, 1, 1, 1], [0], [0]>} : vector<2x8x8xbf16>, vector<2x8x8xbf16>, vector<2x8x8xf32> -> vector<2x8x8xf32>
    "tpu.trace_stop"() : () -> ()
    %67 = vector.shape_cast %19 : vector<8x8xf32> to vector<1x8x8xf32>
    %68 = vector.broadcast %67 : vector<1x8x8xf32> to vector<2x8x8xf32>
    %69 = arith.addf %66, %68 : vector<2x8x8xf32>
    %cst_26 = arith.constant dense<0xFF800000> : vector<2x8xf32>
    %70 = vector.multi_reduction <maximumf>, %69, %cst_26 [2] : vector<2x8x8xf32> to vector<2x8xf32>
    %71 = vector.shape_cast %70 : vector<2x8xf32> to vector<2x8x1xf32>
    %72 = vector.broadcast %71 : vector<2x8x1xf32> to vector<2x8x8xf32>
    %73 = arith.subf %69, %72 : vector<2x8x8xf32>
    %74 = math.exp %73 : vector<2x8x8xf32>
    %cst_27 = arith.constant dense<0.000000e+00> : vector<2x8xf32>
    %75 = vector.multi_reduction <add>, %74, %cst_27 [2] : vector<2x8x8xf32> to vector<2x8xf32>
    %76 = vector.shape_cast %75 : vector<2x8xf32> to vector<2x8x1xf32>
    %77 = tpu.reciprocal %76 {approx = true} : vector<2x8x1xf32> -> vector<2x8x1xf32>
    %78 = vector.broadcast %77 : vector<2x8x1xf32> to vector<2x8x8xf32>
    %79 = arith.mulf %74, %78 : vector<2x8x8xf32>
    %80 = arith.truncf %79 : vector<2x8x8xf32> to vector<2x8x8xbf16>
    "tpu.trace_start"() <{level = 10 : i32, message = "bts,bsd->btd"}> : () -> ()
    %cst_28 = arith.constant dense<0.000000e+00> : vector<2x8x8xf32>
    %81 = tpu.matmul %80, %65, %cst_28 {dimension_numbers = #tpu.dot_dimension_numbers<[2], [1], [1], [2], [0, 0, 0, 1, 1, 2], [0], [0]>} : vector<2x8x8xbf16>, vector<2x8x8xbf16>, vector<2x8x8xf32> -> vector<2x8x8xf32>
    "tpu.trace_stop"() : () -> ()
    %82 = vector.shape_cast %81 : vector<2x8x8xf32> to vector<16x8xf32>
    %83 = arith.truncf %82 : vector<16x8xf32> to vector<16x8xbf16>
    %84 = vector.extract_strided_slice %55 {offsets = [0, 0], sizes = [8, 32], strides = [1, 1]} : vector<32x32xbf16> to vector<8x32xbf16>
    %cst_29 = arith.constant dense<0.000000e+00> : vector<16x32xf32>
    %85 = tpu.matmul %83, %84, %cst_29 {dimension_numbers = #tpu.dot_dimension_numbers<[1], [0], [0], [1], [0, 0, 1, 1], [], []>} : vector<16x8xbf16>, vector<8x32xbf16>, vector<16x32xf32> -> vector<16x32xf32>
    %86 = arith.addf %56, %85 : vector<16x32xf32>
    %87 = vector.extract_strided_slice %52 {offsets = [0, 8], sizes = [16, 8], strides = [1, 1]} : vector<16x32xf32> to vector<16x8xf32>
    %88 = vector.shape_cast %87 : vector<16x8xf32> to vector<2x8x8xf32>
    %89 = arith.truncf %88 : vector<2x8x8xf32> to vector<2x8x8xbf16>
    %90 = vector.extract_strided_slice %53 {offsets = [0, 8], sizes = [16, 8], strides = [1, 1]} : vector<16x32xf32> to vector<16x8xf32>
    %91 = vector.shape_cast %90 : vector<16x8xf32> to vector<2x8x8xf32>
    %92 = arith.truncf %91 : vector<2x8x8xf32> to vector<2x8x8xbf16>
    %93 = vector.extract_strided_slice %54 {offsets = [0, 8], sizes = [16, 8], strides = [1, 1]} : vector<16x32xf32> to vector<16x8xf32>
    %94 = vector.shape_cast %93 : vector<16x8xf32> to vector<2x8x8xf32>
    %95 = arith.truncf %94 : vector<2x8x8xf32> to vector<2x8x8xbf16>
    "tpu.trace_start"() <{level = 10 : i32, message = "btd,bsd->bts"}> : () -> ()
    %cst_30 = arith.constant dense<0.000000e+00> : vector<2x8x8xf32>
    %96 = tpu.matmul %89, %92, %cst_30 {dimension_numbers = #tpu.dot_dimension_numbers<[2], [2], [1], [1], [0, 0, 0, 1, 1, 1], [0], [0]>} : vector<2x8x8xbf16>, vector<2x8x8xbf16>, vector<2x8x8xf32> -> vector<2x8x8xf32>
    "tpu.trace_stop"() : () -> ()
    %97 = vector.shape_cast %19 : vector<8x8xf32> to vector<1x8x8xf32>
    %98 = vector.broadcast %97 : vector<1x8x8xf32> to vector<2x8x8xf32>
    %99 = arith.addf %96, %98 : vector<2x8x8xf32>
    %cst_31 = arith.constant dense<0xFF800000> : vector<2x8xf32>
    %100 = vector.multi_reduction <maximumf>, %99, %cst_31 [2] : vector<2x8x8xf32> to vector<2x8xf32>
    %101 = vector.shape_cast %100 : vector<2x8xf32> to vector<2x8x1xf32>
    %102 = vector.broadcast %101 : vector<2x8x1xf32> to vector<2x8x8xf32>
    %103 = arith.subf %99, %102 : vector<2x8x8xf32>
    %104 = math.exp %103 : vector<2x8x8xf32>
    %cst_32 = arith.constant dense<0.000000e+00> : vector<2x8xf32>
    %105 = vector.multi_reduction <add>, %104, %cst_32 [2] : vector<2x8x8xf32> to vector<2x8xf32>
    %106 = vector.shape_cast %105 : vector<2x8xf32> to vector<2x8x1xf32>
    %107 = tpu.reciprocal %106 {approx = true} : vector<2x8x1xf32> -> vector<2x8x1xf32>
    %108 = vector.broadcast %107 : vector<2x8x1xf32> to vector<2x8x8xf32>
    %109 = arith.mulf %104, %108 : vector<2x8x8xf32>
    %110 = arith.truncf %109 : vector<2x8x8xf32> to vector<2x8x8xbf16>
    "tpu.trace_start"() <{level = 10 : i32, message = "bts,bsd->btd"}> : () -> ()
    %cst_33 = arith.constant dense<0.000000e+00> : vector<2x8x8xf32>
    %111 = tpu.matmul %110, %95, %cst_33 {dimension_numbers = #tpu.dot_dimension_numbers<[2], [1], [1], [2], [0, 0, 0, 1, 1, 2], [0], [0]>} : vector<2x8x8xbf16>, vector<2x8x8xbf16>, vector<2x8x8xf32> -> vector<2x8x8xf32>
    "tpu.trace_stop"() : () -> ()
    %112 = vector.shape_cast %111 : vector<2x8x8xf32> to vector<16x8xf32>
    %113 = arith.truncf %112 : vector<16x8xf32> to vector<16x8xbf16>
    %114 = vector.extract_strided_slice %55 {offsets = [8, 0], sizes = [8, 32], strides = [1, 1]} : vector<32x32xbf16> to vector<8x32xbf16>
    %cst_34 = arith.constant dense<0.000000e+00> : vector<16x32xf32>
    %115 = tpu.matmul %113, %114, %cst_34 {dimension_numbers = #tpu.dot_dimension_numbers<[1], [0], [0], [1], [0, 0, 1, 1], [], []>} : vector<16x8xbf16>, vector<8x32xbf16>, vector<16x32xf32> -> vector<16x32xf32>
    %116 = arith.addf %86, %115 : vector<16x32xf32>
    %117 = vector.extract_strided_slice %52 {offsets = [0, 16], sizes = [16, 8], strides = [1, 1]} : vector<16x32xf32> to vector<16x8xf32>
    %118 = vector.shape_cast %117 : vector<16x8xf32> to vector<2x8x8xf32>
    %119 = arith.truncf %118 : vector<2x8x8xf32> to vector<2x8x8xbf16>
    %120 = vector.extract_strided_slice %53 {offsets = [0, 16], sizes = [16, 8], strides = [1, 1]} : vector<16x32xf32> to vector<16x8xf32>
    %121 = vector.shape_cast %120 : vector<16x8xf32> to vector<2x8x8xf32>
    %122 = arith.truncf %121 : vector<2x8x8xf32> to vector<2x8x8xbf16>
    %123 = vector.extract_strided_slice %54 {offsets = [0, 16], sizes = [16, 8], strides = [1, 1]} : vector<16x32xf32> to vector<16x8xf32>
    %124 = vector.shape_cast %123 : vector<16x8xf32> to vector<2x8x8xf32>
    %125 = arith.truncf %124 : vector<2x8x8xf32> to vector<2x8x8xbf16>
    "tpu.trace_start"() <{level = 10 : i32, message = "btd,bsd->bts"}> : () -> ()
    %cst_35 = arith.constant dense<0.000000e+00> : vector<2x8x8xf32>
    %126 = tpu.matmul %119, %122, %cst_35 {dimension_numbers = #tpu.dot_dimension_numbers<[2], [2], [1], [1], [0, 0, 0, 1, 1, 1], [0], [0]>} : vector<2x8x8xbf16>, vector<2x8x8xbf16>, vector<2x8x8xf32> -> vector<2x8x8xf32>
    "tpu.trace_stop"() : () -> ()
    %127 = vector.shape_cast %19 : vector<8x8xf32> to vector<1x8x8xf32>
    %128 = vector.broadcast %127 : vector<1x8x8xf32> to vector<2x8x8xf32>
    %129 = arith.addf %126, %128 : vector<2x8x8xf32>
    %cst_36 = arith.constant dense<0xFF800000> : vector<2x8xf32>
    %130 = vector.multi_reduction <maximumf>, %129, %cst_36 [2] : vector<2x8x8xf32> to vector<2x8xf32>
    %131 = vector.shape_cast %130 : vector<2x8xf32> to vector<2x8x1xf32>
    %132 = vector.broadcast %131 : vector<2x8x1xf32> to vector<2x8x8xf32>
    %133 = arith.subf %129, %132 : vector<2x8x8xf32>
    %134 = math.exp %133 : vector<2x8x8xf32>
    %cst_37 = arith.constant dense<0.000000e+00> : vector<2x8xf32>
    %135 = vector.multi_reduction <add>, %134, %cst_37 [2] : vector<2x8x8xf32> to vector<2x8xf32>
    %136 = vector.shape_cast %135 : vector<2x8xf32> to vector<2x8x1xf32>
    %137 = tpu.reciprocal %136 {approx = true} : vector<2x8x1xf32> -> vector<2x8x1xf32>
    %138 = vector.broadcast %137 : vector<2x8x1xf32> to vector<2x8x8xf32>
    %139 = arith.mulf %134, %138 : vector<2x8x8xf32>
    %140 = arith.truncf %139 : vector<2x8x8xf32> to vector<2x8x8xbf16>
    "tpu.trace_start"() <{level = 10 : i32, message = "bts,bsd->btd"}> : () -> ()
    %cst_38 = arith.constant dense<0.000000e+00> : vector<2x8x8xf32>
    %141 = tpu.matmul %140, %125, %cst_38 {dimension_numbers = #tpu.dot_dimension_numbers<[2], [1], [1], [2], [0, 0, 0, 1, 1, 2], [0], [0]>} : vector<2x8x8xbf16>, vector<2x8x8xbf16>, vector<2x8x8xf32> -> vector<2x8x8xf32>
    "tpu.trace_stop"() : () -> ()
    %142 = vector.shape_cast %141 : vector<2x8x8xf32> to vector<16x8xf32>
    %143 = arith.truncf %142 : vector<16x8xf32> to vector<16x8xbf16>
    %144 = vector.extract_strided_slice %55 {offsets = [16, 0], sizes = [8, 32], strides = [1, 1]} : vector<32x32xbf16> to vector<8x32xbf16>
    %cst_39 = arith.constant dense<0.000000e+00> : vector<16x32xf32>
    %145 = tpu.matmul %143, %144, %cst_39 {dimension_numbers = #tpu.dot_dimension_numbers<[1], [0], [0], [1], [0, 0, 1, 1], [], []>} : vector<16x8xbf16>, vector<8x32xbf16>, vector<16x32xf32> -> vector<16x32xf32>
    %146 = arith.addf %116, %145 : vector<16x32xf32>
    %147 = vector.extract_strided_slice %52 {offsets = [0, 24], sizes = [16, 8], strides = [1, 1]} : vector<16x32xf32> to vector<16x8xf32>
    %148 = vector.shape_cast %147 : vector<16x8xf32> to vector<2x8x8xf32>
    %149 = arith.truncf %148 : vector<2x8x8xf32> to vector<2x8x8xbf16>
    %150 = vector.extract_strided_slice %53 {offsets = [0, 24], sizes = [16, 8], strides = [1, 1]} : vector<16x32xf32> to vector<16x8xf32>
    %151 = vector.shape_cast %150 : vector<16x8xf32> to vector<2x8x8xf32>
    %152 = arith.truncf %151 : vector<2x8x8xf32> to vector<2x8x8xbf16>
    %153 = vector.extract_strided_slice %54 {offsets = [0, 24], sizes = [16, 8], strides = [1, 1]} : vector<16x32xf32> to vector<16x8xf32>
    %154 = vector.shape_cast %153 : vector<16x8xf32> to vector<2x8x8xf32>
    %155 = arith.truncf %154 : vector<2x8x8xf32> to vector<2x8x8xbf16>
    "tpu.trace_start"() <{level = 10 : i32, message = "btd,bsd->bts"}> : () -> ()
    %cst_40 = arith.constant dense<0.000000e+00> : vector<2x8x8xf32>
    %156 = tpu.matmul %149, %152, %cst_40 {dimension_numbers = #tpu.dot_dimension_numbers<[2], [2], [1], [1], [0, 0, 0, 1, 1, 1], [0], [0]>} : vector<2x8x8xbf16>, vector<2x8x8xbf16>, vector<2x8x8xf32> -> vector<2x8x8xf32>
    "tpu.trace_stop"() : () -> ()
    %157 = vector.shape_cast %19 : vector<8x8xf32> to vector<1x8x8xf32>
    %158 = vector.broadcast %157 : vector<1x8x8xf32> to vector<2x8x8xf32>
    %159 = arith.addf %156, %158 : vector<2x8x8xf32>
    %cst_41 = arith.constant dense<0xFF800000> : vector<2x8xf32>
    %160 = vector.multi_reduction <maximumf>, %159, %cst_41 [2] : vector<2x8x8xf32> to vector<2x8xf32>
    %161 = vector.shape_cast %160 : vector<2x8xf32> to vector<2x8x1xf32>
    %162 = vector.broadcast %161 : vector<2x8x1xf32> to vector<2x8x8xf32>
    %163 = arith.subf %159, %162 : vector<2x8x8xf32>
    %164 = math.exp %163 : vector<2x8x8xf32>
    %cst_42 = arith.constant dense<0.000000e+00> : vector<2x8xf32>
    %165 = vector.multi_reduction <add>, %164, %cst_42 [2] : vector<2x8x8xf32> to vector<2x8xf32>
    %166 = vector.shape_cast %165 : vector<2x8xf32> to vector<2x8x1xf32>
    %167 = tpu.reciprocal %166 {approx = true} : vector<2x8x1xf32> -> vector<2x8x1xf32>
    %168 = vector.broadcast %167 : vector<2x8x1xf32> to vector<2x8x8xf32>
    %169 = arith.mulf %164, %168 : vector<2x8x8xf32>
    %170 = arith.truncf %169 : vector<2x8x8xf32> to vector<2x8x8xbf16>
    "tpu.trace_start"() <{level = 10 : i32, message = "bts,bsd->btd"}> : () -> ()
    %cst_43 = arith.constant dense<0.000000e+00> : vector<2x8x8xf32>
    %171 = tpu.matmul %170, %155, %cst_43 {dimension_numbers = #tpu.dot_dimension_numbers<[2], [1], [1], [2], [0, 0, 0, 1, 1, 2], [0], [0]>} : vector<2x8x8xbf16>, vector<2x8x8xbf16>, vector<2x8x8xf32> -> vector<2x8x8xf32>
    "tpu.trace_stop"() : () -> ()
    %172 = vector.shape_cast %171 : vector<2x8x8xf32> to vector<16x8xf32>
    %173 = arith.truncf %172 : vector<16x8xf32> to vector<16x8xbf16>
    %174 = vector.extract_strided_slice %55 {offsets = [24, 0], sizes = [8, 32], strides = [1, 1]} : vector<32x32xbf16> to vector<8x32xbf16>
    %cst_44 = arith.constant dense<0.000000e+00> : vector<16x32xf32>
    %175 = tpu.matmul %173, %174, %cst_44 {dimension_numbers = #tpu.dot_dimension_numbers<[1], [0], [0], [1], [0, 0, 1, 1], [], []>} : vector<16x8xbf16>, vector<8x32xbf16>, vector<16x32xf32> -> vector<16x32xf32>
    %176 = arith.addf %146, %175 : vector<16x32xf32>
    %177 = arith.addf %13, %176 : vector<16x32xf32>
    %c0_45 = arith.constant 0 : index
    %c0_46 = arith.constant 0 : index
    %178 = vector.load %arg8[%c0_45, %c0_46] : memref<1x32xf32, #tpu.memory_space<vmem>>, vector<1x32xf32>
    %179 = vector.broadcast %178 : vector<1x32xf32> to vector<16x32xf32>
    %180 = arith.addf %177, %179 : vector<16x32xf32>
    %c0_47 = arith.constant 0 : index
    %c0_48 = arith.constant 0 : index
    %181 = vector.load %arg9[%c0_47, %c0_48] : memref<1x32xf32, #tpu.memory_space<vmem>>, vector<1x32xf32>
    %c0_49 = arith.constant 0 : index
    %c0_50 = arith.constant 0 : index
    %182 = vector.load %arg10[%c0_49, %c0_50] : memref<1x32xf32, #tpu.memory_space<vmem>>, vector<1x32xf32>
    %cst_51 = arith.constant dense<0.000000e+00> : vector<16xf32>
    %183 = vector.multi_reduction <add>, %180, %cst_51 [1] : vector<16x32xf32> to vector<16xf32>
    %184 = vector.shape_cast %183 : vector<16xf32> to vector<16x1xf32>
    %cst_52 = arith.constant 3.200000e+01 : f32
    %185 = vector.broadcast %cst_52 : f32 to vector<16x1xf32>
    %186 = arith.divf %184, %185 : vector<16x1xf32>
    %187 = vector.broadcast %186 : vector<16x1xf32> to vector<16x32xf32>
    %188 = arith.subf %180, %187 : vector<16x32xf32>
    %189 = arith.mulf %188, %188 : vector<16x32xf32>
    %cst_53 = arith.constant dense<0.000000e+00> : vector<16xf32>
    %190 = vector.multi_reduction <add>, %189, %cst_53 [1] : vector<16x32xf32> to vector<16xf32>
    %191 = vector.shape_cast %190 : vector<16xf32> to vector<16x1xf32>
    %cst_54 = arith.constant 3.200000e+01 : f32
    %192 = vector.broadcast %cst_54 : f32 to vector<16x1xf32>
    %193 = arith.divf %191, %192 : vector<16x1xf32>
    %194 = vector.broadcast %186 : vector<16x1xf32> to vector<16x32xf32>
    %195 = arith.subf %180, %194 : vector<16x32xf32>
    %cst_55 = arith.constant 9.99999974E-6 : f32
    %196 = vector.broadcast %cst_55 : f32 to vector<16x1xf32>
    %197 = arith.addf %193, %196 : vector<16x1xf32>
    %198 = math.rsqrt %197 : vector<16x1xf32>
    %199 = vector.broadcast %198 : vector<16x1xf32> to vector<16x32xf32>
    %200 = arith.mulf %195, %199 : vector<16x32xf32>
    %201 = vector.broadcast %181 : vector<1x32xf32> to vector<16x32xf32>
    %202 = arith.mulf %200, %201 : vector<16x32xf32>
    %203 = vector.broadcast %182 : vector<1x32xf32> to vector<16x32xf32>
    %204 = arith.addf %202, %203 : vector<16x32xf32>
    %205 = arith.truncf %204 : vector<16x32xf32> to vector<16x32xbf16>
    %c0_56 = arith.constant 0 : index
    %c0_57 = arith.constant 0 : index
    %206 = vector.load %arg11[%c0_56, %c0_57] : memref<32x128xbf16, #tpu.memory_space<vmem>>, vector<32x128xbf16>
    %cst_58 = arith.constant dense<0.000000e+00> : vector<16x128xf32>
    %207 = tpu.matmul %205, %206, %cst_58 {dimension_numbers = #tpu.dot_dimension_numbers<[1], [0], [0], [1], [0, 0, 1, 1], [], []>} : vector<16x32xbf16>, vector<32x128xbf16>, vector<16x128xf32> -> vector<16x128xf32>
    %c0_59 = arith.constant 0 : index
    %c0_60 = arith.constant 0 : index
    %208 = vector.load %arg12[%c0_59, %c0_60] : memref<1x128xf32, #tpu.memory_space<vmem>>, vector<1x128xf32>
    %209 = vector.broadcast %208 : vector<1x128xf32> to vector<16x128xf32>
    %210 = arith.addf %207, %209 : vector<16x128xf32>
    %cst_61 = arith.constant 0.000000e+00 : f32
    %211 = vector.broadcast %cst_61 : f32 to vector<16x128xf32>
    %212 = arith.maximumf %210, %211 : vector<16x128xf32>
    %213 = arith.truncf %212 : vector<16x128xf32> to vector<16x128xbf16>
    %c0_62 = arith.constant 0 : index
    %c0_63 = arith.constant 0 : index
    %214 = vector.load %arg13[%c0_62, %c0_63] : memref<128x32xbf16, #tpu.memory_space<vmem>>, vector<128x32xbf16>
    %cst_64 = arith.constant dense<0.000000e+00> : vector<16x32xf32>
    %215 = tpu.matmul %213, %214, %cst_64 {dimension_numbers = #tpu.dot_dimension_numbers<[1], [0], [0], [1], [0, 0, 1, 1], [], []>} : vector<16x128xbf16>, vector<128x32xbf16>, vector<16x32xf32> -> vector<16x32xf32>
    %216 = arith.addf %180, %215 : vector<16x32xf32>
    %c0_65 = arith.constant 0 : index
    %c0_66 = arith.constant 0 : index
    %217 = vector.load %arg14[%c0_65, %c0_66] : memref<1x32xf32, #tpu.memory_space<vmem>>, vector<1x32xf32>
    %218 = vector.broadcast %217 : vector<1x32xf32> to vector<16x32xf32>
    %219 = arith.addf %216, %218 : vector<16x32xf32>
    %c0_67 = arith.constant 0 : index
    %c0_68 = arith.constant 0 : index
    %220 = vector.load %arg15[%c0_67, %c0_68] : memref<1x32xf32, #tpu.memory_space<vmem>>, vector<1x32xf32>
    %c0_69 = arith.constant 0 : index
    %c0_70 = arith.constant 0 : index
    %221 = vector.load %arg16[%c0_69, %c0_70] : memref<1x32xf32, #tpu.memory_space<vmem>>, vector<1x32xf32>
    %cst_71 = arith.constant dense<0.000000e+00> : vector<16xf32>
    %222 = vector.multi_reduction <add>, %219, %cst_71 [1] : vector<16x32xf32> to vector<16xf32>
    %223 = vector.shape_cast %222 : vector<16xf32> to vector<16x1xf32>
    %cst_72 = arith.constant 3.200000e+01 : f32
    %224 = vector.broadcast %cst_72 : f32 to vector<16x1xf32>
    %225 = arith.divf %223, %224 : vector<16x1xf32>
    %226 = vector.broadcast %225 : vector<16x1xf32> to vector<16x32xf32>
    %227 = arith.subf %219, %226 : vector<16x32xf32>
    %228 = arith.mulf %227, %227 : vector<16x32xf32>
    %cst_73 = arith.constant dense<0.000000e+00> : vector<16xf32>
    %229 = vector.multi_reduction <add>, %228, %cst_73 [1] : vector<16x32xf32> to vector<16xf32>
    %230 = vector.shape_cast %229 : vector<16xf32> to vector<16x1xf32>
    %cst_74 = arith.constant 3.200000e+01 : f32
    %231 = vector.broadcast %cst_74 : f32 to vector<16x1xf32>
    %232 = arith.divf %230, %231 : vector<16x1xf32>
    %233 = vector.broadcast %225 : vector<16x1xf32> to vector<16x32xf32>
    %234 = arith.subf %219, %233 : vector<16x32xf32>
    %cst_75 = arith.constant 9.99999974E-6 : f32
    %235 = vector.broadcast %cst_75 : f32 to vector<16x1xf32>
    %236 = arith.addf %232, %235 : vector<16x1xf32>
    %237 = math.rsqrt %236 : vector<16x1xf32>
    %238 = vector.broadcast %237 : vector<16x1xf32> to vector<16x32xf32>
    %239 = arith.mulf %234, %238 : vector<16x32xf32>
    %240 = vector.broadcast %220 : vector<1x32xf32> to vector<16x32xf32>
    %241 = arith.mulf %239, %240 : vector<16x32xf32>
    %242 = vector.broadcast %221 : vector<1x32xf32> to vector<16x32xf32>
    %243 = arith.addf %241, %242 : vector<16x32xf32>
    %244 = arith.truncf %243 : vector<16x32xf32> to vector<16x32xbf16>
    %c0_76 = arith.constant 0 : index
    %c0_77 = arith.constant 0 : index
    %245 = vector.load %arg17[%c0_76, %c0_77] : memref<32x96xbf16, #tpu.memory_space<vmem>>, vector<32x96xbf16>
    %cst_78 = arith.constant dense<0.000000e+00> : vector<16x96xf32>
    %246 = tpu.matmul %244, %245, %cst_78 {dimension_numbers = #tpu.dot_dimension_numbers<[1], [0], [0], [1], [0, 0, 1, 1], [], []>} : vector<16x32xbf16>, vector<32x96xbf16>, vector<16x96xf32> -> vector<16x96xf32>
    %c0_79 = arith.constant 0 : index
    %c0_80 = arith.constant 0 : index
    %247 = vector.load %arg18[%c0_79, %c0_80] : memref<1x96xf32, #tpu.memory_space<vmem>>, vector<1x96xf32>
    %248 = vector.broadcast %247 : vector<1x96xf32> to vector<16x96xf32>
    %249 = arith.addf %246, %248 : vector<16x96xf32>
    %250 = vector.extract_strided_slice %249 {offsets = [0, 0], sizes = [16, 32], strides = [1, 1]} : vector<16x96xf32> to vector<16x32xf32>
    %cst_81 = arith.constant 0.353553385 : f32
    %251 = vector.broadcast %cst_81 : f32 to vector<16x32xf32>
    %252 = arith.mulf %250, %251 : vector<16x32xf32>
    %253 = vector.extract_strided_slice %249 {offsets = [0, 32], sizes = [16, 32], strides = [1, 1]} : vector<16x96xf32> to vector<16x32xf32>
    %254 = vector.extract_strided_slice %249 {offsets = [0, 64], sizes = [16, 32], strides = [1, 1]} : vector<16x96xf32> to vector<16x32xf32>
    %c0_82 = arith.constant 0 : index
    %c0_83 = arith.constant 0 : index
    %255 = vector.load %arg19[%c0_82, %c0_83] : memref<32x32xbf16, #tpu.memory_space<vmem>>, vector<32x32xbf16>
    %cst_84 = arith.constant 0.000000e+00 : f32
    %256 = vector.broadcast %cst_84 : f32 to vector<16x32xf32>
    %257 = vector.extract_strided_slice %252 {offsets = [0, 0], sizes = [16, 8], strides = [1, 1]} : vector<16x32xf32> to vector<16x8xf32>
    %258 = vector.shape_cast %257 : vector<16x8xf32> to vector<2x8x8xf32>
    %259 = arith.truncf %258 : vector<2x8x8xf32> to vector<2x8x8xbf16>
    %260 = vector.extract_strided_slice %253 {offsets = [0, 0], sizes = [16, 8], strides = [1, 1]} : vector<16x32xf32> to vector<16x8xf32>
    %261 = vector.shape_cast %260 : vector<16x8xf32> to vector<2x8x8xf32>
    %262 = arith.truncf %261 : vector<2x8x8xf32> to vector<2x8x8xbf16>
    %263 = vector.extract_strided_slice %254 {offsets = [0, 0], sizes = [16, 8], strides = [1, 1]} : vector<16x32xf32> to vector<16x8xf32>
    %264 = vector.shape_cast %263 : vector<16x8xf32> to vector<2x8x8xf32>
    %265 = arith.truncf %264 : vector<2x8x8xf32> to vector<2x8x8xbf16>
    "tpu.trace_start"() <{level = 10 : i32, message = "btd,bsd->bts"}> : () -> ()
    %cst_85 = arith.constant dense<0.000000e+00> : vector<2x8x8xf32>
    %266 = tpu.matmul %259, %262, %cst_85 {dimension_numbers = #tpu.dot_dimension_numbers<[2], [2], [1], [1], [0, 0, 0, 1, 1, 1], [0], [0]>} : vector<2x8x8xbf16>, vector<2x8x8xbf16>, vector<2x8x8xf32> -> vector<2x8x8xf32>
    "tpu.trace_stop"() : () -> ()
    %267 = vector.shape_cast %19 : vector<8x8xf32> to vector<1x8x8xf32>
    %268 = vector.broadcast %267 : vector<1x8x8xf32> to vector<2x8x8xf32>
    %269 = arith.addf %266, %268 : vector<2x8x8xf32>
    %cst_86 = arith.constant dense<0xFF800000> : vector<2x8xf32>
    %270 = vector.multi_reduction <maximumf>, %269, %cst_86 [2] : vector<2x8x8xf32> to vector<2x8xf32>
    %271 = vector.shape_cast %270 : vector<2x8xf32> to vector<2x8x1xf32>
    %272 = vector.broadcast %271 : vector<2x8x1xf32> to vector<2x8x8xf32>
    %273 = arith.subf %269, %272 : vector<2x8x8xf32>
    %274 = math.exp %273 : vector<2x8x8xf32>
    %cst_87 = arith.constant dense<0.000000e+00> : vector<2x8xf32>
    %275 = vector.multi_reduction <add>, %274, %cst_87 [2] : vector<2x8x8xf32> to vector<2x8xf32>
    %276 = vector.shape_cast %275 : vector<2x8xf32> to vector<2x8x1xf32>
    %277 = tpu.reciprocal %276 {approx = true} : vector<2x8x1xf32> -> vector<2x8x1xf32>
    %278 = vector.broadcast %277 : vector<2x8x1xf32> to vector<2x8x8xf32>
    %279 = arith.mulf %274, %278 : vector<2x8x8xf32>
    %280 = arith.truncf %279 : vector<2x8x8xf32> to vector<2x8x8xbf16>
    "tpu.trace_start"() <{level = 10 : i32, message = "bts,bsd->btd"}> : () -> ()
    %cst_88 = arith.constant dense<0.000000e+00> : vector<2x8x8xf32>
    %281 = tpu.matmul %280, %265, %cst_88 {dimension_numbers = #tpu.dot_dimension_numbers<[2], [1], [1], [2], [0, 0, 0, 1, 1, 2], [0], [0]>} : vector<2x8x8xbf16>, vector<2x8x8xbf16>, vector<2x8x8xf32> -> vector<2x8x8xf32>
    "tpu.trace_stop"() : () -> ()
    %282 = vector.shape_cast %281 : vector<2x8x8xf32> to vector<16x8xf32>
    %283 = arith.truncf %282 : vector<16x8xf32> to vector<16x8xbf16>
    %284 = vector.extract_strided_slice %255 {offsets = [0, 0], sizes = [8, 32], strides = [1, 1]} : vector<32x32xbf16> to vector<8x32xbf16>
    %cst_89 = arith.constant dense<0.000000e+00> : vector<16x32xf32>
    %285 = tpu.matmul %283, %284, %cst_89 {dimension_numbers = #tpu.dot_dimension_numbers<[1], [0], [0], [1], [0, 0, 1, 1], [], []>} : vector<16x8xbf16>, vector<8x32xbf16>, vector<16x32xf32> -> vector<16x32xf32>
    %286 = arith.addf %256, %285 : vector<16x32xf32>
    %287 = vector.extract_strided_slice %252 {offsets = [0, 8], sizes = [16, 8], strides = [1, 1]} : vector<16x32xf32> to vector<16x8xf32>
    %288 = vector.shape_cast %287 : vector<16x8xf32> to vector<2x8x8xf32>
    %289 = arith.truncf %288 : vector<2x8x8xf32> to vector<2x8x8xbf16>
    %290 = vector.extract_strided_slice %253 {offsets = [0, 8], sizes = [16, 8], strides = [1, 1]} : vector<16x32xf32> to vector<16x8xf32>
    %291 = vector.shape_cast %290 : vector<16x8xf32> to vector<2x8x8xf32>
    %292 = arith.truncf %291 : vector<2x8x8xf32> to vector<2x8x8xbf16>
    %293 = vector.extract_strided_slice %254 {offsets = [0, 8], sizes = [16, 8], strides = [1, 1]} : vector<16x32xf32> to vector<16x8xf32>
    %294 = vector.shape_cast %293 : vector<16x8xf32> to vector<2x8x8xf32>
    %295 = arith.truncf %294 : vector<2x8x8xf32> to vector<2x8x8xbf16>
    "tpu.trace_start"() <{level = 10 : i32, message = "btd,bsd->bts"}> : () -> ()
    %cst_90 = arith.constant dense<0.000000e+00> : vector<2x8x8xf32>
    %296 = tpu.matmul %289, %292, %cst_90 {dimension_numbers = #tpu.dot_dimension_numbers<[2], [2], [1], [1], [0, 0, 0, 1, 1, 1], [0], [0]>} : vector<2x8x8xbf16>, vector<2x8x8xbf16>, vector<2x8x8xf32> -> vector<2x8x8xf32>
    "tpu.trace_stop"() : () -> ()
    %297 = vector.shape_cast %19 : vector<8x8xf32> to vector<1x8x8xf32>
    %298 = vector.broadcast %297 : vector<1x8x8xf32> to vector<2x8x8xf32>
    %299 = arith.addf %296, %298 : vector<2x8x8xf32>
    %cst_91 = arith.constant dense<0xFF800000> : vector<2x8xf32>
    %300 = vector.multi_reduction <maximumf>, %299, %cst_91 [2] : vector<2x8x8xf32> to vector<2x8xf32>
    %301 = vector.shape_cast %300 : vector<2x8xf32> to vector<2x8x1xf32>
    %302 = vector.broadcast %301 : vector<2x8x1xf32> to vector<2x8x8xf32>
    %303 = arith.subf %299, %302 : vector<2x8x8xf32>
    %304 = math.exp %303 : vector<2x8x8xf32>
    %cst_92 = arith.constant dense<0.000000e+00> : vector<2x8xf32>
    %305 = vector.multi_reduction <add>, %304, %cst_92 [2] : vector<2x8x8xf32> to vector<2x8xf32>
    %306 = vector.shape_cast %305 : vector<2x8xf32> to vector<2x8x1xf32>
    %307 = tpu.reciprocal %306 {approx = true} : vector<2x8x1xf32> -> vector<2x8x1xf32>
    %308 = vector.broadcast %307 : vector<2x8x1xf32> to vector<2x8x8xf32>
    %309 = arith.mulf %304, %308 : vector<2x8x8xf32>
    %310 = arith.truncf %309 : vector<2x8x8xf32> to vector<2x8x8xbf16>
    "tpu.trace_start"() <{level = 10 : i32, message = "bts,bsd->btd"}> : () -> ()
    %cst_93 = arith.constant dense<0.000000e+00> : vector<2x8x8xf32>
    %311 = tpu.matmul %310, %295, %cst_93 {dimension_numbers = #tpu.dot_dimension_numbers<[2], [1], [1], [2], [0, 0, 0, 1, 1, 2], [0], [0]>} : vector<2x8x8xbf16>, vector<2x8x8xbf16>, vector<2x8x8xf32> -> vector<2x8x8xf32>
    "tpu.trace_stop"() : () -> ()
    %312 = vector.shape_cast %311 : vector<2x8x8xf32> to vector<16x8xf32>
    %313 = arith.truncf %312 : vector<16x8xf32> to vector<16x8xbf16>
    %314 = vector.extract_strided_slice %255 {offsets = [8, 0], sizes = [8, 32], strides = [1, 1]} : vector<32x32xbf16> to vector<8x32xbf16>
    %cst_94 = arith.constant dense<0.000000e+00> : vector<16x32xf32>
    %315 = tpu.matmul %313, %314, %cst_94 {dimension_numbers = #tpu.dot_dimension_numbers<[1], [0], [0], [1], [0, 0, 1, 1], [], []>} : vector<16x8xbf16>, vector<8x32xbf16>, vector<16x32xf32> -> vector<16x32xf32>
    %316 = arith.addf %286, %315 : vector<16x32xf32>
    %317 = vector.extract_strided_slice %252 {offsets = [0, 16], sizes = [16, 8], strides = [1, 1]} : vector<16x32xf32> to vector<16x8xf32>
    %318 = vector.shape_cast %317 : vector<16x8xf32> to vector<2x8x8xf32>
    %319 = arith.truncf %318 : vector<2x8x8xf32> to vector<2x8x8xbf16>
    %320 = vector.extract_strided_slice %253 {offsets = [0, 16], sizes = [16, 8], strides = [1, 1]} : vector<16x32xf32> to vector<16x8xf32>
    %321 = vector.shape_cast %320 : vector<16x8xf32> to vector<2x8x8xf32>
    %322 = arith.truncf %321 : vector<2x8x8xf32> to vector<2x8x8xbf16>
    %323 = vector.extract_strided_slice %254 {offsets = [0, 16], sizes = [16, 8], strides = [1, 1]} : vector<16x32xf32> to vector<16x8xf32>
    %324 = vector.shape_cast %323 : vector<16x8xf32> to vector<2x8x8xf32>
    %325 = arith.truncf %324 : vector<2x8x8xf32> to vector<2x8x8xbf16>
    "tpu.trace_start"() <{level = 10 : i32, message = "btd,bsd->bts"}> : () -> ()
    %cst_95 = arith.constant dense<0.000000e+00> : vector<2x8x8xf32>
    %326 = tpu.matmul %319, %322, %cst_95 {dimension_numbers = #tpu.dot_dimension_numbers<[2], [2], [1], [1], [0, 0, 0, 1, 1, 1], [0], [0]>} : vector<2x8x8xbf16>, vector<2x8x8xbf16>, vector<2x8x8xf32> -> vector<2x8x8xf32>
    "tpu.trace_stop"() : () -> ()
    %327 = vector.shape_cast %19 : vector<8x8xf32> to vector<1x8x8xf32>
    %328 = vector.broadcast %327 : vector<1x8x8xf32> to vector<2x8x8xf32>
    %329 = arith.addf %326, %328 : vector<2x8x8xf32>
    %cst_96 = arith.constant dense<0xFF800000> : vector<2x8xf32>
    %330 = vector.multi_reduction <maximumf>, %329, %cst_96 [2] : vector<2x8x8xf32> to vector<2x8xf32>
    %331 = vector.shape_cast %330 : vector<2x8xf32> to vector<2x8x1xf32>
    %332 = vector.broadcast %331 : vector<2x8x1xf32> to vector<2x8x8xf32>
    %333 = arith.subf %329, %332 : vector<2x8x8xf32>
    %334 = math.exp %333 : vector<2x8x8xf32>
    %cst_97 = arith.constant dense<0.000000e+00> : vector<2x8xf32>
    %335 = vector.multi_reduction <add>, %334, %cst_97 [2] : vector<2x8x8xf32> to vector<2x8xf32>
    %336 = vector.shape_cast %335 : vector<2x8xf32> to vector<2x8x1xf32>
    %337 = tpu.reciprocal %336 {approx = true} : vector<2x8x1xf32> -> vector<2x8x1xf32>
    %338 = vector.broadcast %337 : vector<2x8x1xf32> to vector<2x8x8xf32>
    %339 = arith.mulf %334, %338 : vector<2x8x8xf32>
    %340 = arith.truncf %339 : vector<2x8x8xf32> to vector<2x8x8xbf16>
    "tpu.trace_start"() <{level = 10 : i32, message = "bts,bsd->btd"}> : () -> ()
    %cst_98 = arith.constant dense<0.000000e+00> : vector<2x8x8xf32>
    %341 = tpu.matmul %340, %325, %cst_98 {dimension_numbers = #tpu.dot_dimension_numbers<[2], [1], [1], [2], [0, 0, 0, 1, 1, 2], [0], [0]>} : vector<2x8x8xbf16>, vector<2x8x8xbf16>, vector<2x8x8xf32> -> vector<2x8x8xf32>
    "tpu.trace_stop"() : () -> ()
    %342 = vector.shape_cast %341 : vector<2x8x8xf32> to vector<16x8xf32>
    %343 = arith.truncf %342 : vector<16x8xf32> to vector<16x8xbf16>
    %344 = vector.extract_strided_slice %255 {offsets = [16, 0], sizes = [8, 32], strides = [1, 1]} : vector<32x32xbf16> to vector<8x32xbf16>
    %cst_99 = arith.constant dense<0.000000e+00> : vector<16x32xf32>
    %345 = tpu.matmul %343, %344, %cst_99 {dimension_numbers = #tpu.dot_dimension_numbers<[1], [0], [0], [1], [0, 0, 1, 1], [], []>} : vector<16x8xbf16>, vector<8x32xbf16>, vector<16x32xf32> -> vector<16x32xf32>
    %346 = arith.addf %316, %345 : vector<16x32xf32>
    %347 = vector.extract_strided_slice %252 {offsets = [0, 24], sizes = [16, 8], strides = [1, 1]} : vector<16x32xf32> to vector<16x8xf32>
    %348 = vector.shape_cast %347 : vector<16x8xf32> to vector<2x8x8xf32>
    %349 = arith.truncf %348 : vector<2x8x8xf32> to vector<2x8x8xbf16>
    %350 = vector.extract_strided_slice %253 {offsets = [0, 24], sizes = [16, 8], strides = [1, 1]} : vector<16x32xf32> to vector<16x8xf32>
    %351 = vector.shape_cast %350 : vector<16x8xf32> to vector<2x8x8xf32>
    %352 = arith.truncf %351 : vector<2x8x8xf32> to vector<2x8x8xbf16>
    %353 = vector.extract_strided_slice %254 {offsets = [0, 24], sizes = [16, 8], strides = [1, 1]} : vector<16x32xf32> to vector<16x8xf32>
    %354 = vector.shape_cast %353 : vector<16x8xf32> to vector<2x8x8xf32>
    %355 = arith.truncf %354 : vector<2x8x8xf32> to vector<2x8x8xbf16>
    "tpu.trace_start"() <{level = 10 : i32, message = "btd,bsd->bts"}> : () -> ()
    %cst_100 = arith.constant dense<0.000000e+00> : vector<2x8x8xf32>
    %356 = tpu.matmul %349, %352, %cst_100 {dimension_numbers = #tpu.dot_dimension_numbers<[2], [2], [1], [1], [0, 0, 0, 1, 1, 1], [0], [0]>} : vector<2x8x8xbf16>, vector<2x8x8xbf16>, vector<2x8x8xf32> -> vector<2x8x8xf32>
    "tpu.trace_stop"() : () -> ()
    %357 = vector.shape_cast %19 : vector<8x8xf32> to vector<1x8x8xf32>
    %358 = vector.broadcast %357 : vector<1x8x8xf32> to vector<2x8x8xf32>
    %359 = arith.addf %356, %358 : vector<2x8x8xf32>
    %cst_101 = arith.constant dense<0xFF800000> : vector<2x8xf32>
    %360 = vector.multi_reduction <maximumf>, %359, %cst_101 [2] : vector<2x8x8xf32> to vector<2x8xf32>
    %361 = vector.shape_cast %360 : vector<2x8xf32> to vector<2x8x1xf32>
    %362 = vector.broadcast %361 : vector<2x8x1xf32> to vector<2x8x8xf32>
    %363 = arith.subf %359, %362 : vector<2x8x8xf32>
    %364 = math.exp %363 : vector<2x8x8xf32>
    %cst_102 = arith.constant dense<0.000000e+00> : vector<2x8xf32>
    %365 = vector.multi_reduction <add>, %364, %cst_102 [2] : vector<2x8x8xf32> to vector<2x8xf32>
    %366 = vector.shape_cast %365 : vector<2x8xf32> to vector<2x8x1xf32>
    %367 = tpu.reciprocal %366 {approx = true} : vector<2x8x1xf32> -> vector<2x8x1xf32>
    %368 = vector.broadcast %367 : vector<2x8x1xf32> to vector<2x8x8xf32>
    %369 = arith.mulf %364, %368 : vector<2x8x8xf32>
    %370 = arith.truncf %369 : vector<2x8x8xf32> to vector<2x8x8xbf16>
    "tpu.trace_start"() <{level = 10 : i32, message = "bts,bsd->btd"}> : () -> ()
    %cst_103 = arith.constant dense<0.000000e+00> : vector<2x8x8xf32>
    %371 = tpu.matmul %370, %355, %cst_103 {dimension_numbers = #tpu.dot_dimension_numbers<[2], [1], [1], [2], [0, 0, 0, 1, 1, 2], [0], [0]>} : vector<2x8x8xbf16>, vector<2x8x8xbf16>, vector<2x8x8xf32> -> vector<2x8x8xf32>
    "tpu.trace_stop"() : () -> ()
    %372 = vector.shape_cast %371 : vector<2x8x8xf32> to vector<16x8xf32>
    %373 = arith.truncf %372 : vector<16x8xf32> to vector<16x8xbf16>
    %374 = vector.extract_strided_slice %255 {offsets = [24, 0], sizes = [8, 32], strides = [1, 1]} : vector<32x32xbf16> to vector<8x32xbf16>
    %cst_104 = arith.constant dense<0.000000e+00> : vector<16x32xf32>
    %375 = tpu.matmul %373, %374, %cst_104 {dimension_numbers = #tpu.dot_dimension_numbers<[1], [0], [0], [1], [0, 0, 1, 1], [], []>} : vector<16x8xbf16>, vector<8x32xbf16>, vector<16x32xf32> -> vector<16x32xf32>
    %376 = arith.addf %346, %375 : vector<16x32xf32>
    %377 = arith.addf %219, %376 : vector<16x32xf32>
    %c0_105 = arith.constant 0 : index
    %c0_106 = arith.constant 0 : index
    %378 = vector.load %arg20[%c0_105, %c0_106] : memref<1x32xf32, #tpu.memory_space<vmem>>, vector<1x32xf32>
    %379 = vector.broadcast %378 : vector<1x32xf32> to vector<16x32xf32>
    %380 = arith.addf %377, %379 : vector<16x32xf32>
    %c0_107 = arith.constant 0 : index
    %c0_108 = arith.constant 0 : index
    %381 = vector.load %arg21[%c0_107, %c0_108] : memref<1x32xf32, #tpu.memory_space<vmem>>, vector<1x32xf32>
    %c0_109 = arith.constant 0 : index
    %c0_110 = arith.constant 0 : index
    %382 = vector.load %arg22[%c0_109, %c0_110] : memref<1x32xf32, #tpu.memory_space<vmem>>, vector<1x32xf32>
    %cst_111 = arith.constant dense<0.000000e+00> : vector<16xf32>
    %383 = vector.multi_reduction <add>, %380, %cst_111 [1] : vector<16x32xf32> to vector<16xf32>
    %384 = vector.shape_cast %383 : vector<16xf32> to vector<16x1xf32>
    %cst_112 = arith.constant 3.200000e+01 : f32
    %385 = vector.broadcast %cst_112 : f32 to vector<16x1xf32>
    %386 = arith.divf %384, %385 : vector<16x1xf32>
    %387 = vector.broadcast %386 : vector<16x1xf32> to vector<16x32xf32>
    %388 = arith.subf %380, %387 : vector<16x32xf32>
    %389 = arith.mulf %388, %388 : vector<16x32xf32>
    %cst_113 = arith.constant dense<0.000000e+00> : vector<16xf32>
    %390 = vector.multi_reduction <add>, %389, %cst_113 [1] : vector<16x32xf32> to vector<16xf32>
    %391 = vector.shape_cast %390 : vector<16xf32> to vector<16x1xf32>
    %cst_114 = arith.constant 3.200000e+01 : f32
    %392 = vector.broadcast %cst_114 : f32 to vector<16x1xf32>
    %393 = arith.divf %391, %392 : vector<16x1xf32>
    %394 = vector.broadcast %386 : vector<16x1xf32> to vector<16x32xf32>
    %395 = arith.subf %380, %394 : vector<16x32xf32>
    %cst_115 = arith.constant 9.99999974E-6 : f32
    %396 = vector.broadcast %cst_115 : f32 to vector<16x1xf32>
    %397 = arith.addf %393, %396 : vector<16x1xf32>
    %398 = math.rsqrt %397 : vector<16x1xf32>
    %399 = vector.broadcast %398 : vector<16x1xf32> to vector<16x32xf32>
    %400 = arith.mulf %395, %399 : vector<16x32xf32>
    %401 = vector.broadcast %381 : vector<1x32xf32> to vector<16x32xf32>
    %402 = arith.mulf %400, %401 : vector<16x32xf32>
    %403 = vector.broadcast %382 : vector<1x32xf32> to vector<16x32xf32>
    %404 = arith.addf %402, %403 : vector<16x32xf32>
    %405 = arith.truncf %404 : vector<16x32xf32> to vector<16x32xbf16>
    %c0_116 = arith.constant 0 : index
    %c0_117 = arith.constant 0 : index
    %406 = vector.load %arg23[%c0_116, %c0_117] : memref<32x128xbf16, #tpu.memory_space<vmem>>, vector<32x128xbf16>
    %cst_118 = arith.constant dense<0.000000e+00> : vector<16x128xf32>
    %407 = tpu.matmul %405, %406, %cst_118 {dimension_numbers = #tpu.dot_dimension_numbers<[1], [0], [0], [1], [0, 0, 1, 1], [], []>} : vector<16x32xbf16>, vector<32x128xbf16>, vector<16x128xf32> -> vector<16x128xf32>
    %c0_119 = arith.constant 0 : index
    %c0_120 = arith.constant 0 : index
    %408 = vector.load %arg24[%c0_119, %c0_120] : memref<1x128xf32, #tpu.memory_space<vmem>>, vector<1x128xf32>
    %409 = vector.broadcast %408 : vector<1x128xf32> to vector<16x128xf32>
    %410 = arith.addf %407, %409 : vector<16x128xf32>
    %cst_121 = arith.constant 0.000000e+00 : f32
    %411 = vector.broadcast %cst_121 : f32 to vector<16x128xf32>
    %412 = arith.maximumf %410, %411 : vector<16x128xf32>
    %413 = arith.truncf %412 : vector<16x128xf32> to vector<16x128xbf16>
    %c0_122 = arith.constant 0 : index
    %c0_123 = arith.constant 0 : index
    %414 = vector.load %arg25[%c0_122, %c0_123] : memref<128x32xbf16, #tpu.memory_space<vmem>>, vector<128x32xbf16>
    %cst_124 = arith.constant dense<0.000000e+00> : vector<16x32xf32>
    %415 = tpu.matmul %413, %414, %cst_124 {dimension_numbers = #tpu.dot_dimension_numbers<[1], [0], [0], [1], [0, 0, 1, 1], [], []>} : vector<16x128xbf16>, vector<128x32xbf16>, vector<16x32xf32> -> vector<16x32xf32>
    %416 = arith.addf %380, %415 : vector<16x32xf32>
    %c0_125 = arith.constant 0 : index
    %c0_126 = arith.constant 0 : index
    %417 = vector.load %arg26[%c0_125, %c0_126] : memref<1x32xf32, #tpu.memory_space<vmem>>, vector<1x32xf32>
    %418 = vector.broadcast %417 : vector<1x32xf32> to vector<16x32xf32>
    %419 = arith.addf %416, %418 : vector<16x32xf32>
    %c0_127 = arith.constant 0 : index
    %c0_128 = arith.constant 0 : index
    %420 = vector.load %arg27[%c0_127, %c0_128] : memref<1x32xf32, #tpu.memory_space<vmem>>, vector<1x32xf32>
    %c0_129 = arith.constant 0 : index
    %c0_130 = arith.constant 0 : index
    %421 = vector.load %arg28[%c0_129, %c0_130] : memref<1x32xf32, #tpu.memory_space<vmem>>, vector<1x32xf32>
    %cst_131 = arith.constant dense<0.000000e+00> : vector<16xf32>
    %422 = vector.multi_reduction <add>, %419, %cst_131 [1] : vector<16x32xf32> to vector<16xf32>
    %423 = vector.shape_cast %422 : vector<16xf32> to vector<16x1xf32>
    %cst_132 = arith.constant 3.200000e+01 : f32
    %424 = vector.broadcast %cst_132 : f32 to vector<16x1xf32>
    %425 = arith.divf %423, %424 : vector<16x1xf32>
    %426 = vector.broadcast %425 : vector<16x1xf32> to vector<16x32xf32>
    %427 = arith.subf %419, %426 : vector<16x32xf32>
    %428 = arith.mulf %427, %427 : vector<16x32xf32>
    %cst_133 = arith.constant dense<0.000000e+00> : vector<16xf32>
    %429 = vector.multi_reduction <add>, %428, %cst_133 [1] : vector<16x32xf32> to vector<16xf32>
    %430 = vector.shape_cast %429 : vector<16xf32> to vector<16x1xf32>
    %cst_134 = arith.constant 3.200000e+01 : f32
    %431 = vector.broadcast %cst_134 : f32 to vector<16x1xf32>
    %432 = arith.divf %430, %431 : vector<16x1xf32>
    %433 = vector.broadcast %425 : vector<16x1xf32> to vector<16x32xf32>
    %434 = arith.subf %419, %433 : vector<16x32xf32>
    %cst_135 = arith.constant 9.99999974E-6 : f32
    %435 = vector.broadcast %cst_135 : f32 to vector<16x1xf32>
    %436 = arith.addf %432, %435 : vector<16x1xf32>
    %437 = math.rsqrt %436 : vector<16x1xf32>
    %438 = vector.broadcast %437 : vector<16x1xf32> to vector<16x32xf32>
    %439 = arith.mulf %434, %438 : vector<16x32xf32>
    %440 = vector.broadcast %420 : vector<1x32xf32> to vector<16x32xf32>
    %441 = arith.mulf %439, %440 : vector<16x32xf32>
    %442 = vector.broadcast %421 : vector<1x32xf32> to vector<16x32xf32>
    %443 = arith.addf %441, %442 : vector<16x32xf32>
    %444 = arith.truncf %443 : vector<16x32xf32> to vector<16x32xbf16>
    %c0_136 = arith.constant 0 : index
    %c0_137 = arith.constant 0 : index
    %445 = vector.load %arg29[%c0_136, %c0_137] : memref<32x128xbf16, #tpu.memory_space<vmem>>, vector<32x128xbf16>
    %cst_138 = arith.constant dense<0.000000e+00> : vector<16x128xf32>
    %446 = tpu.matmul %444, %445, %cst_138 {dimension_numbers = #tpu.dot_dimension_numbers<[1], [0], [0], [1], [0, 0, 1, 1], [], []>} : vector<16x32xbf16>, vector<32x128xbf16>, vector<16x128xf32> -> vector<16x128xf32>
    %c0_139 = arith.constant 0 : index
    %c0_140 = arith.constant 0 : index
    %447 = vector.load %arg30[%c0_139, %c0_140] : memref<1x128xf32, #tpu.memory_space<vmem>>, vector<1x128xf32>
    %448 = vector.broadcast %447 : vector<1x128xf32> to vector<16x128xf32>
    %449 = arith.addf %446, %448 : vector<16x128xf32>
    %450 = vector.shape_cast %449 : vector<16x128xf32> to vector<2x8x128xf32>
    %c0_141 = arith.constant 0 : index
    %c0_142 = arith.constant 0 : index
    %c0_143 = arith.constant 0 : index
    %451 = vector.load %arg31[%c0_141, %c0_142, %c0_143] : memref<2x8x128xf32, #tpu.memory_space<vmem>>, vector<2x8x128xf32>
    tpu.vector_store %arg31[%c0_141, %c0_142, %c0_143], %450 {strides = array<i32>} : memref<2x8x128xf32, #tpu.memory_space<vmem>>, vector<2x8x128xf32>,
    return
  }
}

</mosaic_0001>

<llo_original>
// kernel: gpt_forward.1
$region0: #{gpt_forward.1}
  #allocation0 [shape = 'u32[]', space=smem, size = 0x4, offset = 0x4, fixed_abs, tag = 'smem constant byte address 0x4 - core index']
  #allocation1 [shape = 'u32[144,128]{1,0:T(1,128)}', space=vmem, size = 0x12000, scoped, tag = 'internal scratch']
  %s0 = inlined_call_operand.smem [shape: u32[32], index: -1, kind: input, shape index: {}]
  %s1 = sld [smem:[%s0]]
  %s2 = scalar_lea.smem %s0, 1
  %s3 = sld [smem:[%s2]]
  %s4 = scalar_lea.smem %s0, 2
  %s5 = sld [smem:[%s4]]
  %s6 = scalar_lea.smem %s0, 3
  %s7 = sld [smem:[%s6]]
  %s8 = scalar_lea.smem %s0, 4
  %s9 = sld [smem:[%s8]]
  %s10 = scalar_lea.smem %s0, 5
  %s11 = sld [smem:[%s10]]
  %s12 = scalar_lea.smem %s0, 6
  %s13 = sld [smem:[%s12]]
  %s14 = scalar_lea.smem %s0, 7
  %s15 = sld [smem:[%s14]]
  %s16 = scalar_lea.smem %s0, 8
  %s17 = sld [smem:[%s16]]
  %s18 = scalar_lea.smem %s0, 9
  %s19 = sld [smem:[%s18]]
  %s20 = scalar_lea.smem %s0, 10
  %s21 = sld [smem:[%s20]]
  %s22 = scalar_lea.smem %s0, 11
  %s23 = sld [smem:[%s22]]
  %s24 = scalar_lea.smem %s0, 12
  %s25 = sld [smem:[%s24]]
  %s26 = scalar_lea.smem %s0, 13
  %s27 = sld [smem:[%s26]]
  %s28 = scalar_lea.smem %s0, 14
  %s29 = sld [smem:[%s28]]
  %s30 = scalar_lea.smem %s0, 15
  %s31 = sld [smem:[%s30]]
  %s32 = scalar_lea.smem %s0, 16
  %s33 = sld [smem:[%s32]]
  %s34 = scalar_lea.smem %s0, 17
  %s35 = sld [smem:[%s34]]
  %s36 = scalar_lea.smem %s0, 18
  %s37 = sld [smem:[%s36]]
  %s38 = scalar_lea.smem %s0, 19
  %s39 = sld [smem:[%s38]]
  %s40 = scalar_lea.smem %s0, 20
  %s41 = sld [smem:[%s40]]
  %s42 = scalar_lea.smem %s0, 21
  %s43 = sld [smem:[%s42]]
  %s44 = scalar_lea.smem %s0, 22
  %s45 = sld [smem:[%s44]]
  %s46 = scalar_lea.smem %s0, 23
  %s47 = sld [smem:[%s46]]
  %s48 = scalar_lea.smem %s0, 24
  %s49 = sld [smem:[%s48]]
  %s50 = scalar_lea.smem %s0, 25
  %s51 = sld [smem:[%s50]]
  %s52 = scalar_lea.smem %s0, 26
  %s53 = sld [smem:[%s52]]
  %s54 = scalar_lea.smem %s0, 27
  %s55 = sld [smem:[%s54]]
  %s56 = scalar_lea.smem %s0, 28
  %s57 = sld [smem:[%s56]]
  %s58 = scalar_lea.smem %s0, 29
  %s59 = sld [smem:[%s58]]
  %s60 = scalar_lea.smem %s0, 30
  %s61 = sld [smem:[%s60]]
  %s62 = scalar_lea.smem %s0, 31
  %s63 = sld [smem:[%s62]]
  %s64 = sld [smem:[#allocation0]]
  $region134: #{gpt_forward.1} parent=0
    _
  %s66 = ssub.s32 1, %s64
  %s67 = scalar_select 0, %s66, %s64
  $region1: #{gpt_forward.1} parent=0
    #allocation2 [shape = 'u8[8192]{0}', space=vmem, size = 0x2000, scoped, tag = 'output window, operand 0, single buffered']
    #allocation3 [shape = 's32[1]{0}', space=sflag, size = 0x4, scoped, tag = 'scoped memory for gpt_forward.1']
    %68 = vsyncpa [#allocation3], 0
    // Predicated region
    $region2: #{gpt_forward.1} parent=1 // pred_check
      _
    $region3: #{gpt_forward.1} parent=1 // pred_check_branch
      %70 = sbr.rel (0) target = $region5
    $region4: #{gpt_forward.1} parent=1 // pred_region
      _
    $region5: #{gpt_forward.1} parent=1 // pred_fallthru
      _
    // Predicated region
    $region6: #{gpt_forward.1} parent=1 // pred_check
      _
    $region7: #{gpt_forward.1} parent=1 // pred_check_branch
      %72 = sbr.rel (0) target = $region9
    $region8: #{gpt_forward.1} parent=1 // pred_region
      _
    $region9: #{gpt_forward.1} parent=1 // pred_fallthru
      _
    // Predicated region
    $region10: #{gpt_forward.1} parent=1 // pred_check
      _
    $region11: #{gpt_forward.1} parent=1 // pred_check_branch
      %74 = sbr.rel (0) target = $region13
    $region12: #{gpt_forward.1} parent=1 // pred_region
      _
    $region13: #{gpt_forward.1} parent=1 // pred_fallthru
      _
    // Predicated region
    $region14: #{gpt_forward.1} parent=1 // pred_check
      _
    $region15: #{gpt_forward.1} parent=1 // pred_check_branch
      %76 = sbr.rel (0) target = $region17
    $region16: #{gpt_forward.1} parent=1 // pred_region
      _
    $region17: #{gpt_forward.1} parent=1 // pred_fallthru
      _
    // Predicated region
    $region18: #{gpt_forward.1} parent=1 // pred_check
      _
    $region19: #{gpt_forward.1} parent=1 // pred_check_branch
      %78 = sbr.rel (0) target = $region21
    $region20: #{gpt_forward.1} parent=1 // pred_region
      _
    $region21: #{gpt_forward.1} parent=1 // pred_fallthru
      _
    // Predicated region
    $region22: #{gpt_forward.1} parent=1 // pred_check
      _
    $region23: #{gpt_forward.1} parent=1 // pred_check_branch
      %80 = sbr.rel (0) target = $region25
    $region24: #{gpt_forward.1} parent=1 // pred_region
      _
    $region25: #{gpt_forward.1} parent=1 // pred_fallthru
      _
    // Predicated region
    $region26: #{gpt_forward.1} parent=1 // pred_check
      _
    $region27: #{gpt_forward.1} parent=1 // pred_check_branch
      %82 = sbr.rel (0) target = $region29
    $region28: #{gpt_forward.1} parent=1 // pred_region
      _
    $region29: #{gpt_forward.1} parent=1 // pred_fallthru
      _
    // Predicated region
    $region30: #{gpt_forward.1} parent=1 // pred_check
      _
    $region31: #{gpt_forward.1} parent=1 // pred_check_branch
      %84 = sbr.rel (0) target = $region33
    $region32: #{gpt_forward.1} parent=1 // pred_region
      _
    $region33: #{gpt_forward.1} parent=1 // pred_fallthru
      _
    // Predicated region
    $region34: #{gpt_forward.1} parent=1 // pred_check
      _
    $region35: #{gpt_forward.1} parent=1 // pred_check_branch
      %86 = sbr.rel (0) target = $region37
    $region36: #{gpt_forward.1} parent=1 // pred_region
      _
    $region37: #{gpt_forward.1} parent=1 // pred_fallthru
      _
    // Predicated region
    $region38: #{gpt_forward.1} parent=1 // pred_check
      _
    $region39: #{gpt_forward.1} parent=1 // pred_check_branch
      %88 = sbr.rel (0) target = $region41
    $region40: #{gpt_forward.1} parent=1 // pred_region
      _
    $region41: #{gpt_forward.1} parent=1 // pred_fallthru
      _
    // Predicated region
    $region42: #{gpt_forward.1} parent=1 // pred_check
      _
    $region43: #{gpt_forward.1} parent=1 // pred_check_branch
      %90 = sbr.rel (0) target = $region45
    $region44: #{gpt_forward.1} parent=1 // pred_region
      _
    $region45: #{gpt_forward.1} parent=1 // pred_fallthru
      _
    // Predicated region
    $region46: #{gpt_forward.1} parent=1 // pred_check
      _
    $region47: #{gpt_forward.1} parent=1 // pred_check_branch
      %92 = sbr.rel (0) target = $region49
    $region48: #{gpt_forward.1} parent=1 // pred_region
      _
    $region49: #{gpt_forward.1} parent=1 // pred_fallthru
      _
    // Predicated region
    $region50: #{gpt_forward.1} parent=1 // pred_check
      _
    $region51: #{gpt_forward.1} parent=1 // pred_check_branch
      %94 = sbr.rel (0) target = $region53
    $region52: #{gpt_forward.1} parent=1 // pred_region
      _
    $region53: #{gpt_forward.1} parent=1 // pred_fallthru
      _
    // Predicated region
    $region54: #{gpt_forward.1} parent=1 // pred_check
      _
    $region55: #{gpt_forward.1} parent=1 // pred_check_branch
      %96 = sbr.rel (0) target = $region57
    $region56: #{gpt_forward.1} parent=1 // pred_region
      _
    $region57: #{gpt_forward.1} parent=1 // pred_fallthru
      _
    // Predicated region
    $region58: #{gpt_forward.1} parent=1 // pred_check
      _
    $region59: #{gpt_forward.1} parent=1 // pred_check_branch
      %98 = sbr.rel (0) target = $region61
    $region60: #{gpt_forward.1} parent=1 // pred_region
      _
    $region61: #{gpt_forward.1} parent=1 // pred_fallthru
      _
    // Predicated region
    $region62: #{gpt_forward.1} parent=1 // pred_check
      _
    $region63: #{gpt_forward.1} parent=1 // pred_check_branch
      %100 = sbr.rel (0) target = $region65
    $region64: #{gpt_forward.1} parent=1 // pred_region
      _
    $region65: #{gpt_forward.1} parent=1 // pred_fallthru
      _
    // Predicated region
    $region66: #{gpt_forward.1} parent=1 // pred_check
      _
    $region67: #{gpt_forward.1} parent=1 // pred_check_branch
      %102 = sbr.rel (0) target = $region69
    $region68: #{gpt_forward.1} parent=1 // pred_region
      _
    $region69: #{gpt_forward.1} parent=1 // pred_fallthru
      _
    // Predicated region
    $region70: #{gpt_forward.1} parent=1 // pred_check
      _
    $region71: #{gpt_forward.1} parent=1 // pred_check_branch
      %104 = sbr.rel (0) target = $region73
    $region72: #{gpt_forward.1} parent=1 // pred_region
      _
    $region73: #{gpt_forward.1} parent=1 // pred_fallthru
      _
    // Predicated region
    $region74: #{gpt_forward.1} parent=1 // pred_check
      _
    $region75: #{gpt_forward.1} parent=1 // pred_check_branch
      %106 = sbr.rel (0) target = $region77
    $region76: #{gpt_forward.1} parent=1 // pred_region
      _
    $region77: #{gpt_forward.1} parent=1 // pred_fallthru
      _
    // Predicated region
    $region78: #{gpt_forward.1} parent=1 // pred_check
      _
    $region79: #{gpt_forward.1} parent=1 // pred_check_branch
      %108 = sbr.rel (0) target = $region81
    $region80: #{gpt_forward.1} parent=1 // pred_region
      _
    $region81: #{gpt_forward.1} parent=1 // pred_fallthru
      _
    // Predicated region
    $region82: #{gpt_forward.1} parent=1 // pred_check
      _
    $region83: #{gpt_forward.1} parent=1 // pred_check_branch
      %110 = sbr.rel (0) target = $region85
    $region84: #{gpt_forward.1} parent=1 // pred_region
      _
    $region85: #{gpt_forward.1} parent=1 // pred_fallthru
      _
    // Predicated region
    $region86: #{gpt_forward.1} parent=1 // pred_check
      _
    $region87: #{gpt_forward.1} parent=1 // pred_check_branch
      %112 = sbr.rel (0) target = $region89
    $region88: #{gpt_forward.1} parent=1 // pred_region
      _
    $region89: #{gpt_forward.1} parent=1 // pred_fallthru
      _
    // Predicated region
    $region90: #{gpt_forward.1} parent=1 // pred_check
      _
    $region91: #{gpt_forward.1} parent=1 // pred_check_branch
      %114 = sbr.rel (0) target = $region93
    $region92: #{gpt_forward.1} parent=1 // pred_region
      _
    $region93: #{gpt_forward.1} parent=1 // pred_fallthru
      _
    // Predicated region
    $region94: #{gpt_forward.1} parent=1 // pred_check
      _
    $region95: #{gpt_forward.1} parent=1 // pred_check_branch
      %116 = sbr.rel (0) target = $region97
    $region96: #{gpt_forward.1} parent=1 // pred_region
      _
    $region97: #{gpt_forward.1} parent=1 // pred_fallthru
      _
    // Predicated region
    $region98: #{gpt_forward.1} parent=1 // pred_check
      _
    $region99: #{gpt_forward.1} parent=1 // pred_check_branch
      %118 = sbr.rel (0) target = $region101
    $region100: #{gpt_forward.1} parent=1 // pred_region
      _
    $region101: #{gpt_forward.1} parent=1 // pred_fallthru
      _
    // Predicated region
    $region102: #{gpt_forward.1} parent=1 // pred_check
      _
    $region103: #{gpt_forward.1} parent=1 // pred_check_branch
      %120 = sbr.rel (0) target = $region105
    $region104: #{gpt_forward.1} parent=1 // pred_region
      _
    $region105: #{gpt_forward.1} parent=1 // pred_fallthru
      _
    // Predicated region
    $region106: #{gpt_forward.1} parent=1 // pred_check
      _
    $region107: #{gpt_forward.1} parent=1 // pred_check_branch
      %122 = sbr.rel (0) target = $region109
    $region108: #{gpt_forward.1} parent=1 // pred_region
      _
    $region109: #{gpt_forward.1} parent=1 // pred_fallthru
      _
    // Predicated region
    $region110: #{gpt_forward.1} parent=1 // pred_check
      _
    $region111: #{gpt_forward.1} parent=1 // pred_check_branch
      %124 = sbr.rel (0) target = $region113
    $region112: #{gpt_forward.1} parent=1 // pred_region
      _
    $region113: #{gpt_forward.1} parent=1 // pred_fallthru
      _
    // Predicated region
    $region114: #{gpt_forward.1} parent=1 // pred_check
      _
    $region115: #{gpt_forward.1} parent=1 // pred_check_branch
      %126 = sbr.rel (0) target = $region117
    $region116: #{gpt_forward.1} parent=1 // pred_region
      _
    $region117: #{gpt_forward.1} parent=1 // pred_fallthru
      _
    // Predicated region
    $region118: #{gpt_forward.1} parent=1 // pred_check
      _
    $region119: #{gpt_forward.1} parent=1 // pred_check_branch
      %128 = sbr.rel (0) target = $region121
    $region120: #{gpt_forward.1} parent=1 // pred_region
      _
    $region121: #{gpt_forward.1} parent=1 // pred_fallthru
      _
    // Predicated region
    $region122: #{gpt_forward.1} parent=1 // pred_check
      _
    $region123: #{gpt_forward.1} parent=1 // pred_check_branch
      %130 = sbr.rel (0) target = $region125
    $region124: #{gpt_forward.1} parent=1 // pred_region
      _
    $region125: #{gpt_forward.1} parent=1 // pred_fallthru
      _
    %v132 = vld [vmem:[%s1] sm:$0xff]
    %v133 = vld [vmem:[%s1 + $0x8] sm:$0xff]
    %v134 = vlaneseq
    %v135 = vand.u32 %v134, 127
    %136 = vset.pattern.permute.xlu0 0
    %137 = vperm.xlu0 %136, %v132
    %v138 = vpop.permute.xlu0 %137
    %139 = vset.pattern.permute.xlu0 0
    %140 = vperm.xlu0 %139, %v133
    %v141 = vpop.permute.xlu0 %140
    %vm142 = vcmp.eq.s32.totalorder %v138, %v135
    %vm143 = vcmp.eq.s32.totalorder %v141, %v135
    %v144 = vsel %vm142, 1, 0
    %v145 = vsel %vm143, 1, 0
    %v146 = vcvt.s32.f32 %v144
    %v147 = vcvt.s32.f32 %v145
    %v148 = vld [vmem:[%s3] sm:$0xff]
    %v149 = vld [vmem:[%s3 + $0x8] sm:$0xff]
    %v150 = vld [vmem:[%s3 + $0x10] sm:$0xff]
    %v151 = vld [vmem:[%s3 + $0x18] sm:$0xff]
    %v152 = vld [vmem:[%s3 + $0x20] sm:$0xff]
    %v153 = vld [vmem:[%s3 + $0x28] sm:$0xff]
    %v154 = vld [vmem:[%s3 + $0x30] sm:$0xff]
    %v155 = vld [vmem:[%s3 + $0x38] sm:$0xff]
    %vm156 = vcmask 523264
    %v158 = vsel %vm156, %v146, 0
    %v161 = vsel %vm156, %v147, 0
    %163 = vmatprep.subr.mxu0 0.0
    %164 = vmatpush1.msra.mxu0 %v148
    %165 = vmatprep.subr.mxu0 0.0
    %166 = vmatpush1.msra.mxu0 %v149
    %167 = vmatprep.subr.mxu0 0.0
    %168 = vmatpush1.msra.mxu0 %v150
    %169 = vmatprep.subr.mxu0 0.0
    %170 = vmatpush1.msra.mxu0 %v151
    %171 = vmatprep.subr.mxu0 0.0
    %172 = vmatpush1.msra.mxu0 %v152
    %173 = vmatprep.subr.mxu0 0.0
    %174 = vmatpush1.msra.mxu0 %v153
    %175 = vmatprep.subr.mxu0 0.0
    %176 = vmatpush1.msra.mxu0 %v154
    %177 = vmatprep.subr.mxu0 0.0
    %178 = vmatpush1.msra.mxu0 %v155
    %179 = vmatprep.subr.mxu0 0.0
    %180 = vmatpush1.msra.mxu0 0.0
    %181 = vmatprep.subr.mxu0 0.0
    %182 = vmatpush1.msra.mxu0 0.0
    %183 = vmatprep.subr.mxu0 0.0
    %184 = vmatpush1.msra.mxu0 0.0
    %185 = vmatprep.subr.mxu0 0.0
    %186 = vmatpush1.msra.mxu0 0.0
    %187 = vmatprep.subr.mxu0 0.0
    %188 = vmatpush1.msra.mxu0 0.0
    %189 = vmatprep.subr.mxu0 0.0
    %190 = vmatpush1.msra.mxu0 0.0
    %191 = vmatprep.subr.mxu0 0.0
    %192 = vmatpush1.msra.mxu0 0.0
    %193 = vmatprep.subr.mxu0 0.0
    %194 = vmatpush1.msra.mxu0 0.0
    %195 = vmatprep.subr.mxu0 0.0
    %196 = vmatpush1.msra.mxu0 0.0
    %197 = vmatprep.subr.mxu0 0.0
    %198 = vmatpush1.msra.mxu0 0.0
    %199 = vmatprep.subr.mxu0 0.0
    %200 = vmatpush1.msra.mxu0 0.0
    %201 = vmatprep.subr.mxu0 0.0
    %202 = vmatpush1.msra.mxu0 0.0
    %203 = vmatprep.subr.mxu0 0.0
    %204 = vmatpush1.msra.mxu0 0.0
    %205 = vmatprep.subr.mxu0 0.0
    %206 = vmatpush1.msra.mxu0 0.0
    %207 = vmatprep.subr.mxu0 0.0
    %208 = vmatpush1.msra.mxu0 0.0
    %209 = vmatprep.subr.mxu0 0.0
    %210 = vmatpush1.msra.mxu0 0.0
    %211 = vmatprep.subr.mxu0 0.0
    %212 = vmatpush1.msra.mxu0 0.0
    %213 = vmatprep.subr.mxu0 0.0
    %214 = vmatpush1.msra.mxu0 0.0
    %215 = vmatprep.subr.mxu0 0.0
    %216 = vmatpush1.msra.mxu0 0.0
    %217 = vmatprep.subr.mxu0 0.0
    %218 = vmatpush1.msra.mxu0 0.0
    %219 = vmatprep.subr.mxu0 0.0
    %220 = vmatpush1.msra.mxu0 0.0
    %221 = vmatprep.subr.mxu0 0.0
    %222 = vmatpush1.msra.mxu0 0.0
    %223 = vmatprep.subr.mxu0 0.0
    %224 = vmatpush1.msra.mxu0 0.0
    %225 = vmatprep.subr.mxu0 0.0
    %226 = vmatpush1.msra.mxu0 0.0
    %227 = vmatprep.mubr.f32.mxu0 0.0
    %228 = vmatmul.mubr.f32.gmra.mrb[0].mxu0 %v158
    %v229 = vpop.f32.mrb[0].mxu0
    %v230 = vadd.f32 0.0, %v229
    %v231 = vpop.f32.mrb[0].mxu0
    %232 = vmatprep.mubr.f32.mxu0 0.0
    %233 = vmatmul.mubr.f32.gmra.mrb[0].mxu0 %v161
    %v234 = vpop.f32.mrb[0].mxu0
    %v235 = vadd.f32 0.0, %v234
    %v236 = vpop.f32.mrb[0].mxu0
    %237 = vdwg.mxu0
    %v238 = vld [vmem:[%s5] sm:$0xff]
    %v239 = vadd.f32 %v230, %v238
    %v240 = vadd.f32 %v235, %v238
    %v241 = vlaneseq
    %v242 = vshrl.u32 %v241, 7
    %vm243 = vcmp.ge.s32.totalorder %v242, %v135
    %v244 = vsel %vm243, 0.0, -1e+30
    %v245 = vld [vmem:[%s7] sm:$0x1]
    %v246 = vld [vmem:[%s9] sm:$0x1]
    %vm247 = vcmask 261120
    %v248 = vsel %vm247, %v239, 0.0
    %249 = vadd.xlane.f32.xlu0 %v248
    %v250 = vpop.xlane.xlu0 %249
    %v251 = vsel %vm247, %v240, 0.0
    %252 = vadd.xlane.f32.xlu0 %v251
    %v253 = vpop.xlane.xlu0 %252
    %v254 = vrcp.pop 32.0
    %v255 = vmul.f32 %v250, %v254
    %v256 = vmul.f32 %v253, %v254
    %v257 = vsub.f32 %v239, %v255
    %v258 = vsub.f32 %v240, %v256
    %v259 = vmul.f32 %v257, %v257
    %v260 = vmul.f32 %v258, %v258
    %v261 = vsel %vm247, %v259, 0.0
    %262 = vadd.xlane.f32.xlu0 %v261
    %v263 = vpop.xlane.xlu0 %262
    %v264 = vsel %vm247, %v260, 0.0
    %265 = vadd.xlane.f32.xlu0 %v264
    %v266 = vpop.xlane.xlu0 %265
    %v267 = vmul.f32 %v263, %v254
    %v268 = vmul.f32 %v266, %v254
    %v269 = vadd.f32 %v267, 1e-05
    %v270 = vadd.f32 %v268, 1e-05
    %v271 = vrsqrt.pop %v269
    %v272 = vrsqrt.pop %v270
    %v273 = vmul.f32 %v257, %v271
    %v274 = vmul.f32 %v258, %v272
    %v276 = vlaneseq
    %v277 = vshrl.u32 %v276, 7
    %v278 = vsub.s32 0, %v277
    %v279 = vrot.slane %v245, %v278
    %v281 = vmul.f32 %v273, %v279
    %v282 = vmul.f32 %v274, %v279
    %v284 = vlaneseq
    %v285 = vshrl.u32 %v284, 7
    %v286 = vsub.s32 0, %v285
    %v287 = vrot.slane %v246, %v286
    %v289 = vadd.f32 %v281, %v287
    %v290 = vadd.f32 %v282, %v287
    %v291 = vpack.c.bf16 %v290, %v289
    %v292 = vld [vmem:[%s11] sm:$0xf]
    %v293 = vld [vmem:[%s11 + $0x4] sm:$0xf]
    %v294 = vld [vmem:[%s11 + $0x8] sm:$0xf]
    %v295 = vld [vmem:[%s11 + $0xc] sm:$0xf]
    %v296 = vld [vmem:[%s13] sm:$0x1]
    %v298 = vlaneseq
    %v299 = vshrl.u32 %v298, 7
    %v300 = vsub.s32 0, %v299
    %v301 = vrot.slane %v296, %v300
    %v307 = vunpack.c.l.b16 %v292
    %v308 = vunpack.c.l.b16 %v293
    %v309 = vunpack.c.l.b16 %v294
    %v310 = vunpack.c.l.b16 %v295
    %v311 = vpack.c.b16 %v308, %v307
    %v312 = vpack.c.b16 %v310, %v309
    %v316 = vsel %vm247, %v291, 0
    %318 = vmatprep.subr.bf16.mxu0 0
    %319 = vmatpush1.bf16.msra.mxu0 %v311
    %320 = vmatprep.subr.bf16.mxu0 0
    %321 = vmatpush1.bf16.msra.mxu0 %v312
    %322 = vmatprep.subr.bf16.mxu0 0
    %323 = vmatpush1.bf16.msra.mxu0 0
    %324 = vmatprep.subr.bf16.mxu0 0
    %325 = vmatpush1.bf16.msra.mxu0 0
    %326 = vmatprep.subr.bf16.mxu0 0
    %327 = vmatpush1.bf16.msra.mxu0 0
    %328 = vmatprep.subr.bf16.mxu0 0
    %329 = vmatpush1.bf16.msra.mxu0 0
    %330 = vmatprep.subr.bf16.mxu0 0
    %331 = vmatpush1.bf16.msra.mxu0 0
    %332 = vmatprep.subr.bf16.mxu0 0
    %333 = vmatpush1.bf16.msra.mxu0 0
    %334 = vmatprep.subr.bf16.mxu0 0
    %335 = vmatpush1.bf16.msra.mxu0 0
    %336 = vmatprep.subr.bf16.mxu0 0
    %337 = vmatpush1.bf16.msra.mxu0 0
    %338 = vmatprep.subr.bf16.mxu0 0
    %339 = vmatpush1.bf16.msra.mxu0 0
    %340 = vmatprep.subr.bf16.mxu0 0
    %341 = vmatpush1.bf16.msra.mxu0 0
    %342 = vmatprep.subr.bf16.mxu0 0
    %343 = vmatpush1.bf16.msra.mxu0 0
    %344 = vmatprep.subr.bf16.mxu0 0
    %345 = vmatpush1.bf16.msra.mxu0 0
    %346 = vmatprep.subr.bf16.mxu0 0
    %347 = vmatpush1.bf16.msra.mxu0 0
    %348 = vmatprep.subr.bf16.mxu0 0
    %349 = vmatpush1.bf16.msra.mxu0 0
    %350 = vmatprep.mubr.bf16.mxu0 0
    %351 = vmatmul.mubr.bf16.gmra.mrb[0].mxu0 %v316
    %v352 = vpop.f32.mrb[0].mxu0
    %v353 = vadd.f32 %v301, %v352
    %v354 = vpop.f32.mrb[0].mxu0
    %v355 = vpop.f32.mrb[0].mxu0
    %v356 = vadd.f32 %v301, %v355
    %v357 = vpop.f32.mrb[0].mxu0
    %358 = vdwg.mxu0
    %v359 = vmul.f32 %v353, 0.35355338
    %v360 = vmul.f32 %v356, 0.35355338
    %v361 = vld [vmem:[%s15] sm:$0xf]
    %v362 = vld [vmem:[%s15 + $0x4] sm:$0xf]
    %v363 = vld [vmem:[%s15 + $0x8] sm:$0xf]
    %v364 = vld [vmem:[%s15 + $0xc] sm:$0xf]
    %v365 = vpack.c.bf16 %v359, %v359
    %v366 = vpack.c.bf16 %v360, %v360
    %v367 = vpack.c.bf16 %v353, %v353
    %v368 = vpack.c.bf16 %v356, %v356
    %370 = vrot.lane.b32.xlu0 %v367, 96
    %v371 = vpop.permute.xlu0 %370
    %vm372 = vcmask 64512
    %v374 = vsel %vm372, %v365, 0
    %v377 = vsel %vm372, %v371, 0
    %379 = vmatprep.subr.bf16.mxu0 0
    %380 = vmatpush1.bf16.xpose.msra.mxu0 %v377
    %381 = vmatprep.subr.bf16.mxu0 0
    %382 = vmatpush1.bf16.xpose.msra.mxu0 0
    %383 = vmatprep.subr.bf16.mxu0 0
    %384 = vmatpush1.bf16.xpose.msra.mxu0 0
    %385 = vmatprep.subr.bf16.mxu0 0
    %386 = vmatpush1.bf16.xpose.msra.mxu0 0
    %387 = vmatprep.subr.bf16.mxu0 0
    %388 = vmatpush1.bf16.xpose.msra.mxu0 0
    %389 = vmatprep.subr.bf16.mxu0 0
    %390 = vmatpush1.bf16.xpose.msra.mxu0 0
    %391 = vmatprep.subr.bf16.mxu0 0
    %392 = vmatpush1.bf16.xpose.msra.mxu0 0
    %393 = vmatprep.subr.bf16.mxu0 0
    %394 = vmatpush1.bf16.xpose.msra.mxu0 0
    %395 = vmatprep.subr.bf16.mxu0 0
    %396 = vmatpush1.bf16.xpose.msra.mxu0 0
    %397 = vmatprep.subr.bf16.mxu0 0
    %398 = vmatpush1.bf16.xpose.msra.mxu0 0
    %399 = vmatprep.subr.bf16.mxu0 0
    %400 = vmatpush1.bf16.xpose.msra.mxu0 0
    %401 = vmatprep.subr.bf16.mxu0 0
    %402 = vmatpush1.bf16.xpose.msra.mxu0 0
    %403 = vmatprep.subr.bf16.mxu0 0
    %404 = vmatpush1.bf16.xpose.msra.mxu0 0
    %405 = vmatprep.subr.bf16.mxu0 0
    %406 = vmatpush1.bf16.xpose.msra.mxu0 0
    %407 = vmatprep.subr.bf16.mxu0 0
    %408 = vmatpush1.bf16.xpose.msra.mxu0 0
    %409 = vmatprep.subr.bf16.mxu0 0
    %410 = vmatpush1.bf16.xpose.msra.mxu0 0
    %411 = vmatprep.mubr.bf16.mxu0 0
    %412 = vmatmul.mubr.bf16.gmra.mrb[0].mxu0 %v374
    %v413 = vpop.f32.mrb[0].mxu0
    %v414 = vadd.f32 %v244, %v413
    %v415 = vpop.f32.mrb[0].mxu0
    %v416 = vpop.f32.mrb[0].mxu0
    %v417 = vpop.f32.mrb[0].mxu0
    %418 = vdwg.mxu0
    %420 = vrot.lane.b32.xlu0 %v368, 96
    %v421 = vpop.permute.xlu0 %420
    %v423 = vsel %vm372, %v366, 0
    %v426 = vsel %vm372, %v421, 0
    %428 = vmatprep.subr.bf16.mxu0 0
    %429 = vmatpush1.bf16.xpose.msra.mxu0 %v426
    %430 = vmatprep.subr.bf16.mxu0 0
    %431 = vmatpush1.bf16.xpose.msra.mxu0 0
    %432 = vmatprep.subr.bf16.mxu0 0
    %433 = vmatpush1.bf16.xpose.msra.mxu0 0
    %434 = vmatprep.subr.bf16.mxu0 0
    %435 = vmatpush1.bf16.xpose.msra.mxu0 0
    %436 = vmatprep.subr.bf16.mxu0 0
    %437 = vmatpush1.bf16.xpose.msra.mxu0 0
    %438 = vmatprep.subr.bf16.mxu0 0
    %439 = vmatpush1.bf16.xpose.msra.mxu0 0
    %440 = vmatprep.subr.bf16.mxu0 0
    %441 = vmatpush1.bf16.xpose.msra.mxu0 0
    %442 = vmatprep.subr.bf16.mxu0 0
    %443 = vmatpush1.bf16.xpose.msra.mxu0 0
    %444 = vmatprep.subr.bf16.mxu0 0
    %445 = vmatpush1.bf16.xpose.msra.mxu0 0
    %446 = vmatprep.subr.bf16.mxu0 0
    %447 = vmatpush1.bf16.xpose.msra.mxu0 0
    %448 = vmatprep.subr.bf16.mxu0 0
    %449 = vmatpush1.bf16.xpose.msra.mxu0 0
    %450 = vmatprep.subr.bf16.mxu0 0
    %451 = vmatpush1.bf16.xpose.msra.mxu0 0
    %452 = vmatprep.subr.bf16.mxu0 0
    %453 = vmatpush1.bf16.xpose.msra.mxu0 0
    %454 = vmatprep.subr.bf16.mxu0 0
    %455 = vmatpush1.bf16.xpose.msra.mxu0 0
    %456 = vmatprep.subr.bf16.mxu0 0
    %457 = vmatpush1.bf16.xpose.msra.mxu0 0
    %458 = vmatprep.subr.bf16.mxu0 0
    %459 = vmatpush1.bf16.xpose.msra.mxu0 0
    %460 = vmatprep.mubr.bf16.mxu0 0
    %461 = vmatmul.mubr.bf16.gmra.mrb[0].mxu0 %v423
    %v462 = vpop.f32.mrb[0].mxu0
    %v463 = vadd.f32 %v244, %v462
    %v464 = vpop.f32.mrb[0].mxu0
    %v465 = vpop.f32.mrb[0].mxu0
    %v466 = vpop.f32.mrb[0].mxu0
    %467 = vdwg.mxu0
    %v468 = vsel %vm372, %v414, -inf
    %469 = vmax.xlane.f32.xlu0 %v468
    %v470 = vpop.xlane.xlu0 %469
    %v471 = vsel %vm372, %v463, -inf
    %472 = vmax.xlane.f32.xlu0 %v471
    %v473 = vpop.xlane.xlu0 %472
    %v474 = vsub.f32 %v414, %v470
    %v475 = vsub.f32 %v463, %v473
    %v476 = vmul.f32 %v474, 1.442695
    %v477 = vpow.pop %v476
    %v478 = vmul.f32 %v475, 1.442695
    %v479 = vpow.pop %v478
    %v480 = vsel %vm372, %v477, 0.0
    %481 = vadd.xlane.f32.xlu0 %v480
    %v482 = vpop.xlane.xlu0 %481
    %v483 = vsel %vm372, %v479, 0.0
    %484 = vadd.xlane.f32.xlu0 %v483
    %v485 = vpop.xlane.xlu0 %484
    %v486 = vrcp.pop %v482
    %v487 = vrcp.pop %v485
    %v488 = vmul.f32 %v477, %v486
    %v489 = vmul.f32 %v479, %v487
    %v490 = vpack.c.bf16 %v488, %v488
    %v491 = vpack.c.bf16 %v489, %v489
    %492 = vrot.lane.b32.xlu0 %v367, 64
    %v493 = vpop.permute.xlu0 %492
    %v495 = vsel %vm372, %v490, 0
    %vm497 = vcmask 1043456
    %v499 = vsel %vm497, %v493, 0
    %501 = vmatprep.subr.bf16.mxu0 0
    %502 = vmatpush1.bf16.msra.mxu0 %v499
    %503 = vmatprep.subr.bf16.mxu0 0
    %504 = vmatpush1.bf16.msra.mxu0 0
    %505 = vmatprep.subr.bf16.mxu0 0
    %506 = vmatpush1.bf16.msra.mxu0 0
    %507 = vmatprep.subr.bf16.mxu0 0
    %508 = vmatpush1.bf16.msra.mxu0 0
    %509 = vmatprep.subr.bf16.mxu0 0
    %510 = vmatpush1.bf16.msra.mxu0 0
    %511 = vmatprep.subr.bf16.mxu0 0
    %512 = vmatpush1.bf16.msra.mxu0 0
    %513 = vmatprep.subr.bf16.mxu0 0
    %514 = vmatpush1.bf16.msra.mxu0 0
    %515 = vmatprep.subr.bf16.mxu0 0
    %516 = vmatpush1.bf16.msra.mxu0 0
    %517 = vmatprep.subr.bf16.mxu0 0
    %518 = vmatpush1.bf16.msra.mxu0 0
    %519 = vmatprep.subr.bf16.mxu0 0
    %520 = vmatpush1.bf16.msra.mxu0 0
    %521 = vmatprep.subr.bf16.mxu0 0
    %522 = vmatpush1.bf16.msra.mxu0 0
    %523 = vmatprep.subr.bf16.mxu0 0
    %524 = vmatpush1.bf16.msra.mxu0 0
    %525 = vmatprep.subr.bf16.mxu0 0
    %526 = vmatpush1.bf16.msra.mxu0 0
    %527 = vmatprep.subr.bf16.mxu0 0
    %528 = vmatpush1.bf16.msra.mxu0 0
    %529 = vmatprep.subr.bf16.mxu0 0
    %530 = vmatpush1.bf16.msra.mxu0 0
    %531 = vmatprep.subr.bf16.mxu0 0
    %532 = vmatpush1.bf16.msra.mxu0 0
    %533 = vmatprep.mubr.bf16.mxu0 0
    %534 = vmatmul.mubr.bf16.gmra.mrb[0].mxu0 %v495
    %v535 = vpop.f32.mrb[0].mxu0
    %v536 = vadd.f32 0.0, %v535
    %v537 = vpop.f32.mrb[0].mxu0
    %v538 = vpop.f32.mrb[0].mxu0
    %v539 = vpop.f32.mrb[0].mxu0
    %540 = vdwg.mxu0
    %541 = vrot.lane.b32.xlu0 %v368, 64
    %v542 = vpop.permute.xlu0 %541
    %v544 = vsel %vm372, %v491, 0
    %v547 = vsel %vm497, %v542, 0
    %549 = vmatprep.subr.bf16.mxu0 0
    %550 = vmatpush1.bf16.msra.mxu0 %v547
    %551 = vmatprep.subr.bf16.mxu0 0
    %552 = vmatpush1.bf16.msra.mxu0 0
    %553 = vmatprep.subr.bf16.mxu0 0
    %554 = vmatpush1.bf16.msra.mxu0 0
    %555 = vmatprep.subr.bf16.mxu0 0
    %556 = vmatpush1.bf16.msra.mxu0 0
    %557 = vmatprep.subr.bf16.mxu0 0
    %558 = vmatpush1.bf16.msra.mxu0 0
    %559 = vmatprep.subr.bf16.mxu0 0
    %560 = vmatpush1.bf16.msra.mxu0 0
    %561 = vmatprep.subr.bf16.mxu0 0
    %562 = vmatpush1.bf16.msra.mxu0 0
    %563 = vmatprep.subr.bf16.mxu0 0
    %564 = vmatpush1.bf16.msra.mxu0 0
    %565 = vmatprep.subr.bf16.mxu0 0
    %566 = vmatpush1.bf16.msra.mxu0 0
    %567 = vmatprep.subr.bf16.mxu0 0
    %568 = vmatpush1.bf16.msra.mxu0 0
    %569 = vmatprep.subr.bf16.mxu0 0
    %570 = vmatpush1.bf16.msra.mxu0 0
    %571 = vmatprep.subr.bf16.mxu0 0
    %572 = vmatpush1.bf16.msra.mxu0 0
    %573 = vmatprep.subr.bf16.mxu0 0
    %574 = vmatpush1.bf16.msra.mxu0 0
    %575 = vmatprep.subr.bf16.mxu0 0
    %576 = vmatpush1.bf16.msra.mxu0 0
    %577 = vmatprep.subr.bf16.mxu0 0
    %578 = vmatpush1.bf16.msra.mxu0 0
    %579 = vmatprep.subr.bf16.mxu0 0
    %580 = vmatpush1.bf16.msra.mxu0 0
    %581 = vmatprep.mubr.bf16.mxu0 0
    %582 = vmatmul.mubr.bf16.gmra.mrb[0].mxu0 %v544
    %v583 = vpop.f32.mrb[0].mxu0
    %v584 = vadd.f32 0.0, %v583
    %v585 = vpop.f32.mrb[0].mxu0
    %v586 = vpop.f32.mrb[0].mxu0
    %v587 = vpop.f32.mrb[0].mxu0
    %588 = vdwg.mxu0
    %v589 = vpack.c.bf16 %v584, %v536
    %591 = vrot.lane.b32.xlu0 %v365, 120
    %v592 = vpop.permute.xlu0 %591
    %593 = vrot.lane.b32.xlu0 %v367, 88
    %v594 = vpop.permute.xlu0 %593
    %v596 = vsel %vm372, %v592, 0
    %v599 = vsel %vm372, %v594, 0
    %601 = vmatprep.subr.bf16.mxu0 0
    %602 = vmatpush1.bf16.xpose.msra.mxu0 %v599
    %603 = vmatprep.subr.bf16.mxu0 0
    %604 = vmatpush1.bf16.xpose.msra.mxu0 0
    %605 = vmatprep.subr.bf16.mxu0 0
    %606 = vmatpush1.bf16.xpose.msra.mxu0 0
    %607 = vmatprep.subr.bf16.mxu0 0
    %608 = vmatpush1.bf16.xpose.msra.mxu0 0
    %609 = vmatprep.subr.bf16.mxu0 0
    %610 = vmatpush1.bf16.xpose.msra.mxu0 0
    %611 = vmatprep.subr.bf16.mxu0 0
    %612 = vmatpush1.bf16.xpose.msra.mxu0 0
    %613 = vmatprep.subr.bf16.mxu0 0
    %614 = vmatpush1.bf16.xpose.msra.mxu0 0
    %615 = vmatprep.subr.bf16.mxu0 0
    %616 = vmatpush1.bf16.xpose.msra.mxu0 0
    %617 = vmatprep.subr.bf16.mxu0 0
    %618 = vmatpush1.bf16.xpose.msra.mxu0 0
    %619 = vmatprep.subr.bf16.mxu0 0
    %620 = vmatpush1.bf16.xpose.msra.mxu0 0
    %621 = vmatprep.subr.bf16.mxu0 0
    %622 = vmatpush1.bf16.xpose.msra.mxu0 0
    %623 = vmatprep.subr.bf16.mxu0 0
    %624 = vmatpush1.bf16.xpose.msra.mxu0 0
    %625 = vmatprep.subr.bf16.mxu0 0
    %626 = vmatpush1.bf16.xpose.msra.mxu0 0
    %627 = vmatprep.subr.bf16.mxu0 0
    %628 = vmatpush1.bf16.xpose.msra.mxu0 0
    %629 = vmatprep.subr.bf16.mxu0 0
    %630 = vmatpush1.bf16.xpose.msra.mxu0 0
    %631 = vmatprep.subr.bf16.mxu0 0
    %632 = vmatpush1.bf16.xpose.msra.mxu0 0
    %633 = vmatprep.mubr.bf16.mxu0 0
    %634 = vmatmul.mubr.bf16.gmra.mrb[0].mxu0 %v596
    %v635 = vpop.f32.mrb[0].mxu0
    %v636 = vadd.f32 %v244, %v635
    %v637 = vpop.f32.mrb[0].mxu0
    %v638 = vpop.f32.mrb[0].mxu0
    %v639 = vpop.f32.mrb[0].mxu0
    %640 = vdwg.mxu0
    %642 = vrot.lane.b32.xlu0 %v366, 120
    %v643 = vpop.permute.xlu0 %642
    %644 = vrot.lane.b32.xlu0 %v368, 88
    %v645 = vpop.permute.xlu0 %644
    %v647 = vsel %vm372, %v643, 0
    %v650 = vsel %vm372, %v645, 0
    %652 = vmatprep.subr.bf16.mxu0 0
    %653 = vmatpush1.bf16.xpose.msra.mxu0 %v650
    %654 = vmatprep.subr.bf16.mxu0 0
    %655 = vmatpush1.bf16.xpose.msra.mxu0 0
    %656 = vmatprep.subr.bf16.mxu0 0
    %657 = vmatpush1.bf16.xpose.msra.mxu0 0
    %658 = vmatprep.subr.bf16.mxu0 0
    %659 = vmatpush1.bf16.xpose.msra.mxu0 0
    %660 = vmatprep.subr.bf16.mxu0 0
    %661 = vmatpush1.bf16.xpose.msra.mxu0 0
    %662 = vmatprep.subr.bf16.mxu0 0
    %663 = vmatpush1.bf16.xpose.msra.mxu0 0
    %664 = vmatprep.subr.bf16.mxu0 0
    %665 = vmatpush1.bf16.xpose.msra.mxu0 0
    %666 = vmatprep.subr.bf16.mxu0 0
    %667 = vmatpush1.bf16.xpose.msra.mxu0 0
    %668 = vmatprep.subr.bf16.mxu0 0
    %669 = vmatpush1.bf16.xpose.msra.mxu0 0
    %670 = vmatprep.subr.bf16.mxu0 0
    %671 = vmatpush1.bf16.xpose.msra.mxu0 0
    %672 = vmatprep.subr.bf16.mxu0 0
    %673 = vmatpush1.bf16.xpose.msra.mxu0 0
    %674 = vmatprep.subr.bf16.mxu0 0
    %675 = vmatpush1.bf16.xpose.msra.mxu0 0
    %676 = vmatprep.subr.bf16.mxu0 0
    %677 = vmatpush1.bf16.xpose.msra.mxu0 0
    %678 = vmatprep.subr.bf16.mxu0 0
    %679 = vmatpush1.bf16.xpose.msra.mxu0 0
    %680 = vmatprep.subr.bf16.mxu0 0
    %681 = vmatpush1.bf16.xpose.msra.mxu0 0
    %682 = vmatprep.subr.bf16.mxu0 0
    %683 = vmatpush1.bf16.xpose.msra.mxu0 0
    %684 = vmatprep.mubr.bf16.mxu0 0
    %685 = vmatmul.mubr.bf16.gmra.mrb[0].mxu0 %v647
    %v686 = vpop.f32.mrb[0].mxu0
    %v687 = vadd.f32 %v244, %v686
    %v688 = vpop.f32.mrb[0].mxu0
    %v689 = vpop.f32.mrb[0].mxu0
    %v690 = vpop.f32.mrb[0].mxu0
    %691 = vdwg.mxu0
    %v692 = vsel %vm372, %v636, -inf
    %693 = vmax.xlane.f32.xlu0 %v692
    %v694 = vpop.xlane.xlu0 %693
    %v695 = vsel %vm372, %v687, -inf
    %696 = vmax.xlane.f32.xlu0 %v695
    %v697 = vpop.xlane.xlu0 %696
    %v698 = vsub.f32 %v636, %v694
    %v699 = vsub.f32 %v687, %v697
    %v700 = vmul.f32 %v698, 1.442695
    %v701 = vpow.pop %v700
    %v702 = vmul.f32 %v699, 1.442695
    %v703 = vpow.pop %v702
    %v704 = vsel %vm372, %v701, 0.0
    %705 = vadd.xlane.f32.xlu0 %v704
    %v706 = vpop.xlane.xlu0 %705
    %v707 = vsel %vm372, %v703, 0.0
    %708 = vadd.xlane.f32.xlu0 %v707
    %v709 = vpop.xlane.xlu0 %708
    %v710 = vrcp.pop %v706
    %v711 = vrcp.pop %v709
    %v712 = vmul.f32 %v701, %v710
    %v713 = vmul.f32 %v703, %v711
    %v714 = vpack.c.bf16 %v712, %v712
    %v715 = vpack.c.bf16 %v713, %v713
    %716 = vrot.lane.b32.xlu0 %v367, 56
    %v717 = vpop.permute.xlu0 %716
    %v719 = vsel %vm372, %v714, 0
    %v722 = vsel %vm497, %v717, 0
    %724 = vmatprep.subr.bf16.mxu0 0
    %725 = vmatpush1.bf16.msra.mxu0 %v722
    %726 = vmatprep.subr.bf16.mxu0 0
    %727 = vmatpush1.bf16.msra.mxu0 0
    %728 = vmatprep.subr.bf16.mxu0 0
    %729 = vmatpush1.bf16.msra.mxu0 0
    %730 = vmatprep.subr.bf16.mxu0 0
    %731 = vmatpush1.bf16.msra.mxu0 0
    %732 = vmatprep.subr.bf16.mxu0 0
    %733 = vmatpush1.bf16.msra.mxu0 0
    %734 = vmatprep.subr.bf16.mxu0 0
    %735 = vmatpush1.bf16.msra.mxu0 0
    %736 = vmatprep.subr.bf16.mxu0 0
    %737 = vmatpush1.bf16.msra.mxu0 0
    %738 = vmatprep.subr.bf16.mxu0 0
    %739 = vmatpush1.bf16.msra.mxu0 0
    %740 = vmatprep.subr.bf16.mxu0 0
    %741 = vmatpush1.bf16.msra.mxu0 0
    %742 = vmatprep.subr.bf16.mxu0 0
    %743 = vmatpush1.bf16.msra.mxu0 0
    %744 = vmatprep.subr.bf16.mxu0 0
    %745 = vmatpush1.bf16.msra.mxu0 0
    %746 = vmatprep.subr.bf16.mxu0 0
    %747 = vmatpush1.bf16.msra.mxu0 0
    %748 = vmatprep.subr.bf16.mxu0 0
    %749 = vmatpush1.bf16.msra.mxu0 0
    %750 = vmatprep.subr.bf16.mxu0 0
    %751 = vmatpush1.bf16.msra.mxu0 0
    %752 = vmatprep.subr.bf16.mxu0 0
    %753 = vmatpush1.bf16.msra.mxu0 0
    %754 = vmatprep.subr.bf16.mxu0 0
    %755 = vmatpush1.bf16.msra.mxu0 0
    %756 = vmatprep.mubr.bf16.mxu0 0
    %757 = vmatmul.mubr.bf16.gmra.mrb[0].mxu0 %v719
    %v758 = vpop.f32.mrb[0].mxu0
    %v759 = vadd.f32 0.0, %v758
    %v760 = vpop.f32.mrb[0].mxu0
    %v761 = vpop.f32.mrb[0].mxu0
    %v762 = vpop.f32.mrb[0].mxu0
    %763 = vdwg.mxu0
    %764 = vrot.lane.b32.xlu0 %v368, 56
    %v765 = vpop.permute.xlu0 %764
    %v767 = vsel %vm372, %v715, 0
    %v770 = vsel %vm497, %v765, 0
    %772 = vmatprep.subr.bf16.mxu0 0
    %773 = vmatpush1.bf16.msra.mxu0 %v770
    %774 = vmatprep.subr.bf16.mxu0 0
    %775 = vmatpush1.bf16.msra.mxu0 0
    %776 = vmatprep.subr.bf16.mxu0 0
    %777 = vmatpush1.bf16.msra.mxu0 0
    %778 = vmatprep.subr.bf16.mxu0 0
    %779 = vmatpush1.bf16.msra.mxu0 0
    %780 = vmatprep.subr.bf16.mxu0 0
    %781 = vmatpush1.bf16.msra.mxu0 0
    %782 = vmatprep.subr.bf16.mxu0 0
    %783 = vmatpush1.bf16.msra.mxu0 0
    %784 = vmatprep.subr.bf16.mxu0 0
    %785 = vmatpush1.bf16.msra.mxu0 0
    %786 = vmatprep.subr.bf16.mxu0 0
    %787 = vmatpush1.bf16.msra.mxu0 0
    %788 = vmatprep.subr.bf16.mxu0 0
    %789 = vmatpush1.bf16.msra.mxu0 0
    %790 = vmatprep.subr.bf16.mxu0 0
    %791 = vmatpush1.bf16.msra.mxu0 0
    %792 = vmatprep.subr.bf16.mxu0 0
    %793 = vmatpush1.bf16.msra.mxu0 0
    %794 = vmatprep.subr.bf16.mxu0 0
    %795 = vmatpush1.bf16.msra.mxu0 0
    %796 = vmatprep.subr.bf16.mxu0 0
    %797 = vmatpush1.bf16.msra.mxu0 0
    %798 = vmatprep.subr.bf16.mxu0 0
    %799 = vmatpush1.bf16.msra.mxu0 0
    %800 = vmatprep.subr.bf16.mxu0 0
    %801 = vmatpush1.bf16.msra.mxu0 0
    %802 = vmatprep.subr.bf16.mxu0 0
    %803 = vmatpush1.bf16.msra.mxu0 0
    %804 = vmatprep.mubr.bf16.mxu0 0
    %805 = vmatmul.mubr.bf16.gmra.mrb[0].mxu0 %v767
    %v806 = vpop.f32.mrb[0].mxu0
    %v807 = vadd.f32 0.0, %v806
    %v808 = vpop.f32.mrb[0].mxu0
    %v809 = vpop.f32.mrb[0].mxu0
    %v810 = vpop.f32.mrb[0].mxu0
    %811 = vdwg.mxu0
    %v812 = vpack.c.bf16 %v807, %v759
    %v814 = vsel %vm372, %v812, 0
    %v817 = vsel %vm497, %v362, 0
    %819 = vmatprep.subr.bf16.mxu0 0
    %820 = vmatpush1.bf16.msra.mxu0 %v817
    %821 = vmatprep.subr.bf16.mxu0 0
    %822 = vmatpush1.bf16.msra.mxu0 0
    %823 = vmatprep.subr.bf16.mxu0 0
    %824 = vmatpush1.bf16.msra.mxu0 0
    %825 = vmatprep.subr.bf16.mxu0 0
    %826 = vmatpush1.bf16.msra.mxu0 0
    %827 = vmatprep.subr.bf16.mxu0 0
    %828 = vmatpush1.bf16.msra.mxu0 0
    %829 = vmatprep.subr.bf16.mxu0 0
    %830 = vmatpush1.bf16.msra.mxu0 0
    %831 = vmatprep.subr.bf16.mxu0 0
    %832 = vmatpush1.bf16.msra.mxu0 0
    %833 = vmatprep.subr.bf16.mxu0 0
    %834 = vmatpush1.bf16.msra.mxu0 0
    %835 = vmatprep.subr.bf16.mxu0 0
    %836 = vmatpush1.bf16.msra.mxu0 0
    %837 = vmatprep.subr.bf16.mxu0 0
    %838 = vmatpush1.bf16.msra.mxu0 0
    %839 = vmatprep.subr.bf16.mxu0 0
    %840 = vmatpush1.bf16.msra.mxu0 0
    %841 = vmatprep.subr.bf16.mxu0 0
    %842 = vmatpush1.bf16.msra.mxu0 0
    %843 = vmatprep.subr.bf16.mxu0 0
    %844 = vmatpush1.bf16.msra.mxu0 0
    %845 = vmatprep.subr.bf16.mxu0 0
    %846 = vmatpush1.bf16.msra.mxu0 0
    %847 = vmatprep.subr.bf16.mxu0 0
    %848 = vmatpush1.bf16.msra.mxu0 0
    %849 = vmatprep.subr.bf16.mxu0 0
    %850 = vmatpush1.bf16.msra.mxu0 0
    %851 = vmatprep.mubr.bf16.mxu0 0
    %852 = vmatmul.mubr.bf16.gmra.mrb[0].mxu0 %v814
    %v853 = vpop.f32.mrb[0].mxu0
    %v854 = vadd.f32 0.0, %v853
    %v855 = vpop.f32.mrb[0].mxu0
    %v856 = vpop.f32.mrb[0].mxu0
    %v857 = vadd.f32 0.0, %v856
    %v858 = vpop.f32.mrb[0].mxu0
    %859 = vdwg.mxu0
    %v861 = vsel %vm372, %v589, 0
    %v864 = vsel %vm497, %v361, 0
    %866 = vmatprep.subr.bf16.mxu0 0
    %867 = vmatpush1.bf16.msra.mxu0 %v864
    %868 = vmatprep.subr.bf16.mxu0 0
    %869 = vmatpush1.bf16.msra.mxu0 0
    %870 = vmatprep.subr.bf16.mxu0 0
    %871 = vmatpush1.bf16.msra.mxu0 0
    %872 = vmatprep.subr.bf16.mxu0 0
    %873 = vmatpush1.bf16.msra.mxu0 0
    %874 = vmatprep.subr.bf16.mxu0 0
    %875 = vmatpush1.bf16.msra.mxu0 0
    %876 = vmatprep.subr.bf16.mxu0 0
    %877 = vmatpush1.bf16.msra.mxu0 0
    %878 = vmatprep.subr.bf16.mxu0 0
    %879 = vmatpush1.bf16.msra.mxu0 0
    %880 = vmatprep.subr.bf16.mxu0 0
    %881 = vmatpush1.bf16.msra.mxu0 0
    %882 = vmatprep.subr.bf16.mxu0 0
    %883 = vmatpush1.bf16.msra.mxu0 0
    %884 = vmatprep.subr.bf16.mxu0 0
    %885 = vmatpush1.bf16.msra.mxu0 0
    %886 = vmatprep.subr.bf16.mxu0 0
    %887 = vmatpush1.bf16.msra.mxu0 0
    %888 = vmatprep.subr.bf16.mxu0 0
    %889 = vmatpush1.bf16.msra.mxu0 0
    %890 = vmatprep.subr.bf16.mxu0 0
    %891 = vmatpush1.bf16.msra.mxu0 0
    %892 = vmatprep.subr.bf16.mxu0 0
    %893 = vmatpush1.bf16.msra.mxu0 0
    %894 = vmatprep.subr.bf16.mxu0 0
    %895 = vmatpush1.bf16.msra.mxu0 0
    %896 = vmatprep.subr.bf16.mxu0 0
    %897 = vmatpush1.bf16.msra.mxu0 0
    %898 = vmatprep.mubr.bf16.mxu0 0
    %899 = vmatmul.mubr.bf16.gmra.mrb[0].mxu0 %v861
    %v900 = vpop.f32.mrb[0].mxu0
    %v901 = vadd.f32 %v854, %v900
    %v902 = vpop.f32.mrb[0].mxu0
    %v903 = vpop.f32.mrb[0].mxu0
    %v904 = vadd.f32 %v857, %v903
    %v905 = vpop.f32.mrb[0].mxu0
    %906 = vdwg.mxu0
    %907 = vrot.lane.b32.xlu0 %v365, 112
    %v908 = vpop.permute.xlu0 %907
    %909 = vrot.lane.b32.xlu0 %v367, 80
    %v910 = vpop.permute.xlu0 %909
    %v912 = vsel %vm372, %v908, 0
    %v915 = vsel %vm372, %v910, 0
    %917 = vmatprep.subr.bf16.mxu0 0
    %918 = vmatpush1.bf16.xpose.msra.mxu0 %v915
    %919 = vmatprep.subr.bf16.mxu0 0
    %920 = vmatpush1.bf16.xpose.msra.mxu0 0
    %921 = vmatprep.subr.bf16.mxu0 0
    %922 = vmatpush1.bf16.xpose.msra.mxu0 0
    %923 = vmatprep.subr.bf16.mxu0 0
    %924 = vmatpush1.bf16.xpose.msra.mxu0 0
    %925 = vmatprep.subr.bf16.mxu0 0
    %926 = vmatpush1.bf16.xpose.msra.mxu0 0
    %927 = vmatprep.subr.bf16.mxu0 0
    %928 = vmatpush1.bf16.xpose.msra.mxu0 0
    %929 = vmatprep.subr.bf16.mxu0 0
    %930 = vmatpush1.bf16.xpose.msra.mxu0 0
    %931 = vmatprep.subr.bf16.mxu0 0
    %932 = vmatpush1.bf16.xpose.msra.mxu0 0
    %933 = vmatprep.subr.bf16.mxu0 0
    %934 = vmatpush1.bf16.xpose.msra.mxu0 0
    %935 = vmatprep.subr.bf16.mxu0 0
    %936 = vmatpush1.bf16.xpose.msra.mxu0 0
    %937 = vmatprep.subr.bf16.mxu0 0
    %938 = vmatpush1.bf16.xpose.msra.mxu0 0
    %939 = vmatprep.subr.bf16.mxu0 0
    %940 = vmatpush1.bf16.xpose.msra.mxu0 0
    %941 = vmatprep.subr.bf16.mxu0 0
    %942 = vmatpush1.bf16.xpose.msra.mxu0 0
    %943 = vmatprep.subr.bf16.mxu0 0
    %944 = vmatpush1.bf16.xpose.msra.mxu0 0
    %945 = vmatprep.subr.bf16.mxu0 0
    %946 = vmatpush1.bf16.xpose.msra.mxu0 0
    %947 = vmatprep.subr.bf16.mxu0 0
    %948 = vmatpush1.bf16.xpose.msra.mxu0 0
    %949 = vmatprep.mubr.bf16.mxu0 0
    %950 = vmatmul.mubr.bf16.gmra.mrb[0].mxu0 %v912
    %v951 = vpop.f32.mrb[0].mxu0
    %v952 = vadd.f32 %v244, %v951
    %v953 = vpop.f32.mrb[0].mxu0
    %v954 = vpop.f32.mrb[0].mxu0
    %v955 = vpop.f32.mrb[0].mxu0
    %956 = vdwg.mxu0
    %957 = vrot.lane.b32.xlu0 %v366, 112
    %v958 = vpop.permute.xlu0 %957
    %959 = vrot.lane.b32.xlu0 %v368, 80
    %v960 = vpop.permute.xlu0 %959
    %v962 = vsel %vm372, %v958, 0
    %v965 = vsel %vm372, %v960, 0
    %967 = vmatprep.subr.bf16.mxu0 0
    %968 = vmatpush1.bf16.xpose.msra.mxu0 %v965
    %969 = vmatprep.subr.bf16.mxu0 0
    %970 = vmatpush1.bf16.xpose.msra.mxu0 0
    %971 = vmatprep.subr.bf16.mxu0 0
    %972 = vmatpush1.bf16.xpose.msra.mxu0 0
    %973 = vmatprep.subr.bf16.mxu0 0
    %974 = vmatpush1.bf16.xpose.msra.mxu0 0
    %975 = vmatprep.subr.bf16.mxu0 0
    %976 = vmatpush1.bf16.xpose.msra.mxu0 0
    %977 = vmatprep.subr.bf16.mxu0 0
    %978 = vmatpush1.bf16.xpose.msra.mxu0 0
    %979 = vmatprep.subr.bf16.mxu0 0
    %980 = vmatpush1.bf16.xpose.msra.mxu0 0
    %981 = vmatprep.subr.bf16.mxu0 0
    %982 = vmatpush1.bf16.xpose.msra.mxu0 0
    %983 = vmatprep.subr.bf16.mxu0 0
    %984 = vmatpush1.bf16.xpose.msra.mxu0 0
    %985 = vmatprep.subr.bf16.mxu0 0
    %986 = vmatpush1.bf16.xpose.msra.mxu0 0
    %987 = vmatprep.subr.bf16.mxu0 0
    %988 = vmatpush1.bf16.xpose.msra.mxu0 0
    %989 = vmatprep.subr.bf16.mxu0 0
    %990 = vmatpush1.bf16.xpose.msra.mxu0 0
    %991 = vmatprep.subr.bf16.mxu0 0
    %992 = vmatpush1.bf16.xpose.msra.mxu0 0
    %993 = vmatprep.subr.bf16.mxu0 0
    %994 = vmatpush1.bf16.xpose.msra.mxu0 0
    %995 = vmatprep.subr.bf16.mxu0 0
    %996 = vmatpush1.bf16.xpose.msra.mxu0 0
    %997 = vmatprep.subr.bf16.mxu0 0
    %998 = vmatpush1.bf16.xpose.msra.mxu0 0
    %999 = vmatprep.mubr.bf16.mxu0 0
    %1000 = vmatmul.mubr.bf16.gmra.mrb[0].mxu0 %v962
    %v1001 = vpop.f32.mrb[0].mxu0
    %v1002 = vadd.f32 %v244, %v1001
    %v1003 = vpop.f32.mrb[0].mxu0
    %v1004 = vpop.f32.mrb[0].mxu0
    %v1005 = vpop.f32.mrb[0].mxu0
    %1006 = vdwg.mxu0
    %v1007 = vsel %vm372, %v952, -inf
    %1008 = vmax.xlane.f32.xlu0 %v1007
    %v1009 = vpop.xlane.xlu0 %1008
    %v1010 = vsel %vm372, %v1002, -inf
    %1011 = vmax.xlane.f32.xlu0 %v1010
    %v1012 = vpop.xlane.xlu0 %1011
    %v1013 = vsub.f32 %v952, %v1009
    %v1014 = vsub.f32 %v1002, %v1012
    %v1015 = vmul.f32 %v1013, 1.442695
    %v1016 = vpow.pop %v1015
    %v1017 = vmul.f32 %v1014, 1.442695
    %v1018 = vpow.pop %v1017
    %v1019 = vsel %vm372, %v1016, 0.0
    %1020 = vadd.xlane.f32.xlu0 %v1019
    %v1021 = vpop.xlane.xlu0 %1020
    %v1022 = vsel %vm372, %v1018, 0.0
    %1023 = vadd.xlane.f32.xlu0 %v1022
    %v1024 = vpop.xlane.xlu0 %1023
    %v1025 = vrcp.pop %v1021
    %v1026 = vrcp.pop %v1024
    %v1027 = vmul.f32 %v1016, %v1025
    %v1028 = vmul.f32 %v1018, %v1026
    %v1029 = vpack.c.bf16 %v1027, %v1027
    %v1030 = vpack.c.bf16 %v1028, %v1028
    %1031 = vrot.lane.b32.xlu0 %v367, 48
    %v1032 = vpop.permute.xlu0 %1031
    %v1034 = vsel %vm372, %v1029, 0
    %v1037 = vsel %vm497, %v1032, 0
    %1039 = vmatprep.subr.bf16.mxu0 0
    %1040 = vmatpush1.bf16.msra.mxu0 %v1037
    %1041 = vmatprep.subr.bf16.mxu0 0
    %1042 = vmatpush1.bf16.msra.mxu0 0
    %1043 = vmatprep.subr.bf16.mxu0 0
    %1044 = vmatpush1.bf16.msra.mxu0 0
    %1045 = vmatprep.subr.bf16.mxu0 0
    %1046 = vmatpush1.bf16.msra.mxu0 0
    %1047 = vmatprep.subr.bf16.mxu0 0
    %1048 = vmatpush1.bf16.msra.mxu0 0
    %1049 = vmatprep.subr.bf16.mxu0 0
    %1050 = vmatpush1.bf16.msra.mxu0 0
    %1051 = vmatprep.subr.bf16.mxu0 0
    %1052 = vmatpush1.bf16.msra.mxu0 0
    %1053 = vmatprep.subr.bf16.mxu0 0
    %1054 = vmatpush1.bf16.msra.mxu0 0
    %1055 = vmatprep.subr.bf16.mxu0 0
    %1056 = vmatpush1.bf16.msra.mxu0 0
    %1057 = vmatprep.subr.bf16.mxu0 0
    %1058 = vmatpush1.bf16.msra.mxu0 0
    %1059 = vmatprep.subr.bf16.mxu0 0
    %1060 = vmatpush1.bf16.msra.mxu0 0
    %1061 = vmatprep.subr.bf16.mxu0 0
    %1062 = vmatpush1.bf16.msra.mxu0 0
    %1063 = vmatprep.subr.bf16.mxu0 0
    %1064 = vmatpush1.bf16.msra.mxu0 0
    %1065 = vmatprep.subr.bf16.mxu0 0
    %1066 = vmatpush1.bf16.msra.mxu0 0
    %1067 = vmatprep.subr.bf16.mxu0 0
    %1068 = vmatpush1.bf16.msra.mxu0 0
    %1069 = vmatprep.subr.bf16.mxu0 0
    %1070 = vmatpush1.bf16.msra.mxu0 0
    %1071 = vmatprep.mubr.bf16.mxu0 0
    %1072 = vmatmul.mubr.bf16.gmra.mrb[0].mxu0 %v1034
    %v1073 = vpop.f32.mrb[0].mxu0
    %v1074 = vadd.f32 0.0, %v1073
    %v1075 = vpop.f32.mrb[0].mxu0
    %v1076 = vpop.f32.mrb[0].mxu0
    %v1077 = vpop.f32.mrb[0].mxu0
    %1078 = vdwg.mxu0
    %1079 = vrot.lane.b32.xlu0 %v368, 48
    %v1080 = vpop.permute.xlu0 %1079
    %v1082 = vsel %vm372, %v1030, 0
    %v1085 = vsel %vm497, %v1080, 0
    %1087 = vmatprep.subr.bf16.mxu0 0
    %1088 = vmatpush1.bf16.msra.mxu0 %v1085
    %1089 = vmatprep.subr.bf16.mxu0 0
    %1090 = vmatpush1.bf16.msra.mxu0 0
    %1091 = vmatprep.subr.bf16.mxu0 0
    %1092 = vmatpush1.bf16.msra.mxu0 0
    %1093 = vmatprep.subr.bf16.mxu0 0
    %1094 = vmatpush1.bf16.msra.mxu0 0
    %1095 = vmatprep.subr.bf16.mxu0 0
    %1096 = vmatpush1.bf16.msra.mxu0 0
    %1097 = vmatprep.subr.bf16.mxu0 0
    %1098 = vmatpush1.bf16.msra.mxu0 0
    %1099 = vmatprep.subr.bf16.mxu0 0
    %1100 = vmatpush1.bf16.msra.mxu0 0
    %1101 = vmatprep.subr.bf16.mxu0 0
    %1102 = vmatpush1.bf16.msra.mxu0 0
    %1103 = vmatprep.subr.bf16.mxu0 0
    %1104 = vmatpush1.bf16.msra.mxu0 0
    %1105 = vmatprep.subr.bf16.mxu0 0
    %1106 = vmatpush1.bf16.msra.mxu0 0
    %1107 = vmatprep.subr.bf16.mxu0 0
    %1108 = vmatpush1.bf16.msra.mxu0 0
    %1109 = vmatprep.subr.bf16.mxu0 0
    %1110 = vmatpush1.bf16.msra.mxu0 0
    %1111 = vmatprep.subr.bf16.mxu0 0
    %1112 = vmatpush1.bf16.msra.mxu0 0
    %1113 = vmatprep.subr.bf16.mxu0 0
    %1114 = vmatpush1.bf16.msra.mxu0 0
    %1115 = vmatprep.subr.bf16.mxu0 0
    %1116 = vmatpush1.bf16.msra.mxu0 0
    %1117 = vmatprep.subr.bf16.mxu0 0
    %1118 = vmatpush1.bf16.msra.mxu0 0
    %1119 = vmatprep.mubr.bf16.mxu0 0
    %1120 = vmatmul.mubr.bf16.gmra.mrb[0].mxu0 %v1082
    %v1121 = vpop.f32.mrb[0].mxu0
    %v1122 = vadd.f32 0.0, %v1121
    %v1123 = vpop.f32.mrb[0].mxu0
    %v1124 = vpop.f32.mrb[0].mxu0
    %v1125 = vpop.f32.mrb[0].mxu0
    %1126 = vdwg.mxu0
    %v1127 = vpack.c.bf16 %v1122, %v1074
    %v1129 = vsel %vm372, %v1127, 0
    %v1132 = vsel %vm497, %v363, 0
    %1134 = vmatprep.subr.bf16.mxu0 0
    %1135 = vmatpush1.bf16.msra.mxu0 %v1132
    %1136 = vmatprep.subr.bf16.mxu0 0
    %1137 = vmatpush1.bf16.msra.mxu0 0
    %1138 = vmatprep.subr.bf16.mxu0 0
    %1139 = vmatpush1.bf16.msra.mxu0 0
    %1140 = vmatprep.subr.bf16.mxu0 0
    %1141 = vmatpush1.bf16.msra.mxu0 0
    %1142 = vmatprep.subr.bf16.mxu0 0
    %1143 = vmatpush1.bf16.msra.mxu0 0
    %1144 = vmatprep.subr.bf16.mxu0 0
    %1145 = vmatpush1.bf16.msra.mxu0 0
    %1146 = vmatprep.subr.bf16.mxu0 0
    %1147 = vmatpush1.bf16.msra.mxu0 0
    %1148 = vmatprep.subr.bf16.mxu0 0
    %1149 = vmatpush1.bf16.msra.mxu0 0
    %1150 = vmatprep.subr.bf16.mxu0 0
    %1151 = vmatpush1.bf16.msra.mxu0 0
    %1152 = vmatprep.subr.bf16.mxu0 0
    %1153 = vmatpush1.bf16.msra.mxu0 0
    %1154 = vmatprep.subr.bf16.mxu0 0
    %1155 = vmatpush1.bf16.msra.mxu0 0
    %1156 = vmatprep.subr.bf16.mxu0 0
    %1157 = vmatpush1.bf16.msra.mxu0 0
    %1158 = vmatprep.subr.bf16.mxu0 0
    %1159 = vmatpush1.bf16.msra.mxu0 0
    %1160 = vmatprep.subr.bf16.mxu0 0
    %1161 = vmatpush1.bf16.msra.mxu0 0
    %1162 = vmatprep.subr.bf16.mxu0 0
    %1163 = vmatpush1.bf16.msra.mxu0 0
    %1164 = vmatprep.subr.bf16.mxu0 0
    %1165 = vmatpush1.bf16.msra.mxu0 0
    %1166 = vmatprep.mubr.bf16.mxu0 0
    %1167 = vmatmul.mubr.bf16.gmra.mrb[0].mxu0 %v1129
    %v1168 = vpop.f32.mrb[0].mxu0
    %v1169 = vadd.f32 0.0, %v1168
    %v1170 = vpop.f32.mrb[0].mxu0
    %v1171 = vpop.f32.mrb[0].mxu0
    %v1172 = vadd.f32 0.0, %v1171
    %v1173 = vpop.f32.mrb[0].mxu0
    %1174 = vdwg.mxu0
    %v1175 = vadd.f32 %v901, %v1169
    %v1176 = vadd.f32 %v904, %v1172
    %1177 = vrot.lane.b32.xlu0 %v365, 104
    %v1178 = vpop.permute.xlu0 %1177
    %1179 = vrot.lane.b32.xlu0 %v367, 72
    %v1180 = vpop.permute.xlu0 %1179
    %v1182 = vsel %vm372, %v1178, 0
    %v1185 = vsel %vm372, %v1180, 0
    %1187 = vmatprep.subr.bf16.mxu0 0
    %1188 = vmatpush1.bf16.xpose.msra.mxu0 %v1185
    %1189 = vmatprep.subr.bf16.mxu0 0
    %1190 = vmatpush1.bf16.xpose.msra.mxu0 0
    %1191 = vmatprep.subr.bf16.mxu0 0
    %1192 = vmatpush1.bf16.xpose.msra.mxu0 0
    %1193 = vmatprep.subr.bf16.mxu0 0
    %1194 = vmatpush1.bf16.xpose.msra.mxu0 0
    %1195 = vmatprep.subr.bf16.mxu0 0
    %1196 = vmatpush1.bf16.xpose.msra.mxu0 0
    %1197 = vmatprep.subr.bf16.mxu0 0
    %1198 = vmatpush1.bf16.xpose.msra.mxu0 0
    %1199 = vmatprep.subr.bf16.mxu0 0
    %1200 = vmatpush1.bf16.xpose.msra.mxu0 0
    %1201 = vmatprep.subr.bf16.mxu0 0
    %1202 = vmatpush1.bf16.xpose.msra.mxu0 0
    %1203 = vmatprep.subr.bf16.mxu0 0
    %1204 = vmatpush1.bf16.xpose.msra.mxu0 0
    %1205 = vmatprep.subr.bf16.mxu0 0
    %1206 = vmatpush1.bf16.xpose.msra.mxu0 0
    %1207 = vmatprep.subr.bf16.mxu0 0
    %1208 = vmatpush1.bf16.xpose.msra.mxu0 0
    %1209 = vmatprep.subr.bf16.mxu0 0
    %1210 = vmatpush1.bf16.xpose.msra.mxu0 0
    %1211 = vmatprep.subr.bf16.mxu0 0
    %1212 = vmatpush1.bf16.xpose.msra.mxu0 0
    %1213 = vmatprep.subr.bf16.mxu0 0
    %1214 = vmatpush1.bf16.xpose.msra.mxu0 0
    %1215 = vmatprep.subr.bf16.mxu0 0
    %1216 = vmatpush1.bf16.xpose.msra.mxu0 0
    %1217 = vmatprep.subr.bf16.mxu0 0
    %1218 = vmatpush1.bf16.xpose.msra.mxu0 0
    %1219 = vmatprep.mubr.bf16.mxu0 0
    %1220 = vmatmul.mubr.bf16.gmra.mrb[0].mxu0 %v1182
    %v1221 = vpop.f32.mrb[0].mxu0
    %v1222 = vadd.f32 %v244, %v1221
    %v1223 = vpop.f32.mrb[0].mxu0
    %v1224 = vpop.f32.mrb[0].mxu0
    %v1225 = vpop.f32.mrb[0].mxu0
    %1226 = vdwg.mxu0
    %1227 = vrot.lane.b32.xlu0 %v366, 104
    %v1228 = vpop.permute.xlu0 %1227
    %1229 = vrot.lane.b32.xlu0 %v368, 72
    %v1230 = vpop.permute.xlu0 %1229
    %v1232 = vsel %vm372, %v1228, 0
    %v1235 = vsel %vm372, %v1230, 0
    %1237 = vmatprep.subr.bf16.mxu0 0
    %1238 = vmatpush1.bf16.xpose.msra.mxu0 %v1235
    %1239 = vmatprep.subr.bf16.mxu0 0
    %1240 = vmatpush1.bf16.xpose.msra.mxu0 0
    %1241 = vmatprep.subr.bf16.mxu0 0
    %1242 = vmatpush1.bf16.xpose.msra.mxu0 0
    %1243 = vmatprep.subr.bf16.mxu0 0
    %1244 = vmatpush1.bf16.xpose.msra.mxu0 0
    %1245 = vmatprep.subr.bf16.mxu0 0
    %1246 = vmatpush1.bf16.xpose.msra.mxu0 0
    %1247 = vmatprep.subr.bf16.mxu0 0
    %1248 = vmatpush1.bf16.xpose.msra.mxu0 0
    %1249 = vmatprep.subr.bf16.mxu0 0
    %1250 = vmatpush1.bf16.xpose.msra.mxu0 0
    %1251 = vmatprep.subr.bf16.mxu0 0
    %1252 = vmatpush1.bf16.xpose.msra.mxu0 0
    %1253 = vmatprep.subr.bf16.mxu0 0
    %1254 = vmatpush1.bf16.xpose.msra.mxu0 0
    %1255 = vmatprep.subr.bf16.mxu0 0
    %1256 = vmatpush1.bf16.xpose.msra.mxu0 0
    %1257 = vmatprep.subr.bf16.mxu0 0
    %1258 = vmatpush1.bf16.xpose.msra.mxu0 0
    %1259 = vmatprep.subr.bf16.mxu0 0
    %1260 = vmatpush1.bf16.xpose.msra.mxu0 0
    %1261 = vmatprep.subr.bf16.mxu0 0
    %1262 = vmatpush1.bf16.xpose.msra.mxu0 0
    %1263 = vmatprep.subr.bf16.mxu0 0
    %1264 = vmatpush1.bf16.xpose.msra.mxu0 0
    %1265 = vmatprep.subr.bf16.mxu0 0
    %1266 = vmatpush1.bf16.xpose.msra.mxu0 0
    %1267 = vmatprep.subr.bf16.mxu0 0
    %1268 = vmatpush1.bf16.xpose.msra.mxu0 0
    %1269 = vmatprep.mubr.bf16.mxu0 0
    %1270 = vmatmul.mubr.bf16.gmra.mrb[0].mxu0 %v1232
    %v1271 = vpop.f32.mrb[0].mxu0
    %v1272 = vadd.f32 %v244, %v1271
    %v1273 = vpop.f32.mrb[0].mxu0
    %v1274 = vpop.f32.mrb[0].mxu0
    %v1275 = vpop.f32.mrb[0].mxu0
    %1276 = vdwg.mxu0
    %v1277 = vsel %vm372, %v1222, -inf
    %1278 = vmax.xlane.f32.xlu0 %v1277
    %v1279 = vpop.xlane.xlu0 %1278
    %v1280 = vsel %vm372, %v1272, -inf
    %1281 = vmax.xlane.f32.xlu0 %v1280
    %v1282 = vpop.xlane.xlu0 %1281
    %v1283 = vsub.f32 %v1222, %v1279
    %v1284 = vsub.f32 %v1272, %v1282
    %v1285 = vmul.f32 %v1283, 1.442695
    %v1286 = vpow.pop %v1285
    %v1287 = vmul.f32 %v1284, 1.442695
    %v1288 = vpow.pop %v1287
    %v1289 = vsel %vm372, %v1286, 0.0
    %1290 = vadd.xlane.f32.xlu0 %v1289
    %v1291 = vpop.xlane.xlu0 %1290
    %v1292 = vsel %vm372, %v1288, 0.0
    %1293 = vadd.xlane.f32.xlu0 %v1292
    %v1294 = vpop.xlane.xlu0 %1293
    %v1295 = vrcp.pop %v1291
    %v1296 = vrcp.pop %v1294
    %v1297 = vmul.f32 %v1286, %v1295
    %v1298 = vmul.f32 %v1288, %v1296
    %v1299 = vpack.c.bf16 %v1297, %v1297
    %v1300 = vpack.c.bf16 %v1298, %v1298
    %1301 = vrot.lane.b32.xlu0 %v367, 40
    %v1302 = vpop.permute.xlu0 %1301
    %v1304 = vsel %vm372, %v1299, 0
    %v1307 = vsel %vm497, %v1302, 0
    %1309 = vmatprep.subr.bf16.mxu0 0
    %1310 = vmatpush1.bf16.msra.mxu0 %v1307
    %1311 = vmatprep.subr.bf16.mxu0 0
    %1312 = vmatpush1.bf16.msra.mxu0 0
    %1313 = vmatprep.subr.bf16.mxu0 0
    %1314 = vmatpush1.bf16.msra.mxu0 0
    %1315 = vmatprep.subr.bf16.mxu0 0
    %1316 = vmatpush1.bf16.msra.mxu0 0
    %1317 = vmatprep.subr.bf16.mxu0 0
    %1318 = vmatpush1.bf16.msra.mxu0 0
    %1319 = vmatprep.subr.bf16.mxu0 0
    %1320 = vmatpush1.bf16.msra.mxu0 0
    %1321 = vmatprep.subr.bf16.mxu0 0
    %1322 = vmatpush1.bf16.msra.mxu0 0
    %1323 = vmatprep.subr.bf16.mxu0 0
    %1324 = vmatpush1.bf16.msra.mxu0 0
    %1325 = vmatprep.subr.bf16.mxu0 0
    %1326 = vmatpush1.bf16.msra.mxu0 0
    %1327 = vmatprep.subr.bf16.mxu0 0
    %1328 = vmatpush1.bf16.msra.mxu0 0
    %1329 = vmatprep.subr.bf16.mxu0 0
    %1330 = vmatpush1.bf16.msra.mxu0 0
    %1331 = vmatprep.subr.bf16.mxu0 0
    %1332 = vmatpush1.bf16.msra.mxu0 0
    %1333 = vmatprep.subr.bf16.mxu0 0
    %1334 = vmatpush1.bf16.msra.mxu0 0
    %1335 = vmatprep.subr.bf16.mxu0 0
    %1336 = vmatpush1.bf16.msra.mxu0 0
    %1337 = vmatprep.subr.bf16.mxu0 0
    %1338 = vmatpush1.bf16.msra.mxu0 0
    %1339 = vmatprep.subr.bf16.mxu0 0
    %1340 = vmatpush1.bf16.msra.mxu0 0
    %1341 = vmatprep.mubr.bf16.mxu0 0
    %1342 = vmatmul.mubr.bf16.gmra.mrb[0].mxu0 %v1304
    %v1343 = vpop.f32.mrb[0].mxu0
    %v1344 = vadd.f32 0.0, %v1343
    %v1345 = vpop.f32.mrb[0].mxu0
    %v1346 = vpop.f32.mrb[0].mxu0
    %v1347 = vpop.f32.mrb[0].mxu0
    %1348 = vdwg.mxu0
    %1349 = vrot.lane.b32.xlu0 %v368, 40
    %v1350 = vpop.permute.xlu0 %1349
    %v1352 = vsel %vm372, %v1300, 0
    %v1355 = vsel %vm497, %v1350, 0
    %1357 = vmatprep.subr.bf16.mxu0 0
    %1358 = vmatpush1.bf16.msra.mxu0 %v1355
    %1359 = vmatprep.subr.bf16.mxu0 0
    %1360 = vmatpush1.bf16.msra.mxu0 0
    %1361 = vmatprep.subr.bf16.mxu0 0
    %1362 = vmatpush1.bf16.msra.mxu0 0
    %1363 = vmatprep.subr.bf16.mxu0 0
    %1364 = vmatpush1.bf16.msra.mxu0 0
    %1365 = vmatprep.subr.bf16.mxu0 0
    %1366 = vmatpush1.bf16.msra.mxu0 0
    %1367 = vmatprep.subr.bf16.mxu0 0
    %1368 = vmatpush1.bf16.msra.mxu0 0
    %1369 = vmatprep.subr.bf16.mxu0 0
    %1370 = vmatpush1.bf16.msra.mxu0 0
    %1371 = vmatprep.subr.bf16.mxu0 0
    %1372 = vmatpush1.bf16.msra.mxu0 0
    %1373 = vmatprep.subr.bf16.mxu0 0
    %1374 = vmatpush1.bf16.msra.mxu0 0
    %1375 = vmatprep.subr.bf16.mxu0 0
    %1376 = vmatpush1.bf16.msra.mxu0 0
    %1377 = vmatprep.subr.bf16.mxu0 0
    %1378 = vmatpush1.bf16.msra.mxu0 0
    %1379 = vmatprep.subr.bf16.mxu0 0
    %1380 = vmatpush1.bf16.msra.mxu0 0
    %1381 = vmatprep.subr.bf16.mxu0 0
    %1382 = vmatpush1.bf16.msra.mxu0 0
    %1383 = vmatprep.subr.bf16.mxu0 0
    %1384 = vmatpush1.bf16.msra.mxu0 0
    %1385 = vmatprep.subr.bf16.mxu0 0
    %1386 = vmatpush1.bf16.msra.mxu0 0
    %1387 = vmatprep.subr.bf16.mxu0 0
    %1388 = vmatpush1.bf16.msra.mxu0 0
    %1389 = vmatprep.mubr.bf16.mxu0 0
    %1390 = vmatmul.mubr.bf16.gmra.mrb[0].mxu0 %v1352
    %v1391 = vpop.f32.mrb[0].mxu0
    %v1392 = vadd.f32 0.0, %v1391
    %v1393 = vpop.f32.mrb[0].mxu0
    %v1394 = vpop.f32.mrb[0].mxu0
    %v1395 = vpop.f32.mrb[0].mxu0
    %1396 = vdwg.mxu0
    %v1397 = vpack.c.bf16 %v1392, %v1344
    %v1399 = vsel %vm372, %v1397, 0
    %v1402 = vsel %vm497, %v364, 0
    %1404 = vmatprep.subr.bf16.mxu0 0
    %1405 = vmatpush1.bf16.msra.mxu0 %v1402
    %1406 = vmatprep.subr.bf16.mxu0 0
    %1407 = vmatpush1.bf16.msra.mxu0 0
    %1408 = vmatprep.subr.bf16.mxu0 0
    %1409 = vmatpush1.bf16.msra.mxu0 0
    %1410 = vmatprep.subr.bf16.mxu0 0
    %1411 = vmatpush1.bf16.msra.mxu0 0
    %1412 = vmatprep.subr.bf16.mxu0 0
    %1413 = vmatpush1.bf16.msra.mxu0 0
    %1414 = vmatprep.subr.bf16.mxu0 0
    %1415 = vmatpush1.bf16.msra.mxu0 0
    %1416 = vmatprep.subr.bf16.mxu0 0
    %1417 = vmatpush1.bf16.msra.mxu0 0
    %1418 = vmatprep.subr.bf16.mxu0 0
    %1419 = vmatpush1.bf16.msra.mxu0 0
    %1420 = vmatprep.subr.bf16.mxu0 0
    %1421 = vmatpush1.bf16.msra.mxu0 0
    %1422 = vmatprep.subr.bf16.mxu0 0
    %1423 = vmatpush1.bf16.msra.mxu0 0
    %1424 = vmatprep.subr.bf16.mxu0 0
    %1425 = vmatpush1.bf16.msra.mxu0 0
    %1426 = vmatprep.subr.bf16.mxu0 0
    %1427 = vmatpush1.bf16.msra.mxu0 0
    %1428 = vmatprep.subr.bf16.mxu0 0
    %1429 = vmatpush1.bf16.msra.mxu0 0
    %1430 = vmatprep.subr.bf16.mxu0 0
    %1431 = vmatpush1.bf16.msra.mxu0 0
    %1432 = vmatprep.subr.bf16.mxu0 0
    %1433 = vmatpush1.bf16.msra.mxu0 0
    %1434 = vmatprep.subr.bf16.mxu0 0
    %1435 = vmatpush1.bf16.msra.mxu0 0
    %1436 = vmatprep.mubr.bf16.mxu0 0
    %1437 = vmatmul.mubr.bf16.gmra.mrb[0].mxu0 %v1399
    %v1438 = vpop.f32.mrb[0].mxu0
    %v1439 = vadd.f32 0.0, %v1438
    %v1440 = vpop.f32.mrb[0].mxu0
    %v1441 = vpop.f32.mrb[0].mxu0
    %v1442 = vadd.f32 0.0, %v1441
    %v1443 = vpop.f32.mrb[0].mxu0
    %1444 = vdwg.mxu0
    %v1445 = vadd.f32 %v1175, %v1439
    %v1446 = vadd.f32 %v1176, %v1442
    %v1447 = vadd.f32 %v239, %v1445
    %v1448 = vadd.f32 %v240, %v1446
    %v1449 = vld [vmem:[%s17] sm:$0x1]
    %v1451 = vlaneseq
    %v1452 = vshrl.u32 %v1451, 7
    %v1453 = vsub.s32 0, %v1452
    %v1454 = vrot.slane %v1449, %v1453
    %v1456 = vadd.f32 %v1447, %v1454
    %v1457 = vadd.f32 %v1448, %v1454
    %v1458 = vld [vmem:[%s19] sm:$0x1]
    %v1459 = vld [vmem:[%s21] sm:$0x1]
    %v1460 = vsel %vm247, %v1456, 0.0
    %1461 = vadd.xlane.f32.xlu0 %v1460
    %v1462 = vpop.xlane.xlu0 %1461
    %v1463 = vsel %vm247, %v1457, 0.0
    %1464 = vadd.xlane.f32.xlu0 %v1463
    %v1465 = vpop.xlane.xlu0 %1464
    %v1466 = vmul.f32 %v1462, %v254
    %v1467 = vmul.f32 %v1465, %v254
    %v1468 = vsub.f32 %v1456, %v1466
    %v1469 = vsub.f32 %v1457, %v1467
    %v1470 = vmul.f32 %v1468, %v1468
    %v1471 = vmul.f32 %v1469, %v1469
    %v1472 = vsel %vm247, %v1470, 0.0
    %1473 = vadd.xlane.f32.xlu0 %v1472
    %v1474 = vpop.xlane.xlu0 %1473
    %v1475 = vsel %vm247, %v1471, 0.0
    %1476 = vadd.xlane.f32.xlu0 %v1475
    %v1477 = vpop.xlane.xlu0 %1476
    %v1478 = vmul.f32 %v1474, %v254
    %v1479 = vmul.f32 %v1477, %v254
    %v1480 = vadd.f32 %v1478, 1e-05
    %v1481 = vadd.f32 %v1479, 1e-05
    %v1482 = vrsqrt.pop %v1480
    %v1483 = vrsqrt.pop %v1481
    %v1484 = vmul.f32 %v1468, %v1482
    %v1485 = vmul.f32 %v1469, %v1483
    %v1487 = vlaneseq
    %v1488 = vshrl.u32 %v1487, 7
    %v1489 = vsub.s32 0, %v1488
    %v1490 = vrot.slane %v1458, %v1489
    %v1492 = vmul.f32 %v1484, %v1490
    %v1493 = vmul.f32 %v1485, %v1490
    %v1495 = vlaneseq
    %v1496 = vshrl.u32 %v1495, 7
    %v1497 = vsub.s32 0, %v1496
    %v1498 = vrot.slane %v1459, %v1497
    %v1500 = vadd.f32 %v1492, %v1498
    %v1501 = vadd.f32 %v1493, %v1498
    %v1502 = vpack.c.bf16 %v1501, %v1500
    %v1503 = vld [vmem:[%s23] sm:$0xf]
    %v1504 = vld [vmem:[%s23 + $0x4] sm:$0xf]
    %v1505 = vld [vmem:[%s23 + $0x8] sm:$0xf]
    %v1506 = vld [vmem:[%s23 + $0xc] sm:$0xf]
    %v1507 = vld [vmem:[%s25] sm:$0x1]
    %v1509 = vlaneseq
    %v1510 = vshrl.u32 %v1509, 7
    %v1511 = vsub.s32 0, %v1510
    %v1512 = vrot.slane %v1507, %v1511
    %v1518 = vunpack.c.l.b16 %v1503
    %v1519 = vunpack.c.l.b16 %v1504
    %v1520 = vunpack.c.l.b16 %v1505
    %v1521 = vunpack.c.l.b16 %v1506
    %v1522 = vpack.c.b16 %v1519, %v1518
    %v1523 = vpack.c.b16 %v1521, %v1520
    %v1527 = vsel %vm247, %v1502, 0
    %1529 = vmatprep.subr.bf16.mxu0 0
    %1530 = vmatpush1.bf16.msra.mxu0 %v1522
    %1531 = vmatprep.subr.bf16.mxu0 0
    %1532 = vmatpush1.bf16.msra.mxu0 %v1523
    %1533 = vmatprep.subr.bf16.mxu0 0
    %1534 = vmatpush1.bf16.msra.mxu0 0
    %1535 = vmatprep.subr.bf16.mxu0 0
    %1536 = vmatpush1.bf16.msra.mxu0 0
    %1537 = vmatprep.subr.bf16.mxu0 0
    %1538 = vmatpush1.bf16.msra.mxu0 0
    %1539 = vmatprep.subr.bf16.mxu0 0
    %1540 = vmatpush1.bf16.msra.mxu0 0
    %1541 = vmatprep.subr.bf16.mxu0 0
    %1542 = vmatpush1.bf16.msra.mxu0 0
    %1543 = vmatprep.subr.bf16.mxu0 0
    %1544 = vmatpush1.bf16.msra.mxu0 0
    %1545 = vmatprep.subr.bf16.mxu0 0
    %1546 = vmatpush1.bf16.msra.mxu0 0
    %1547 = vmatprep.subr.bf16.mxu0 0
    %1548 = vmatpush1.bf16.msra.mxu0 0
    %1549 = vmatprep.subr.bf16.mxu0 0
    %1550 = vmatpush1.bf16.msra.mxu0 0
    %1551 = vmatprep.subr.bf16.mxu0 0
    %1552 = vmatpush1.bf16.msra.mxu0 0
    %1553 = vmatprep.subr.bf16.mxu0 0
    %1554 = vmatpush1.bf16.msra.mxu0 0
    %1555 = vmatprep.subr.bf16.mxu0 0
    %1556 = vmatpush1.bf16.msra.mxu0 0
    %1557 = vmatprep.subr.bf16.mxu0 0
    %1558 = vmatpush1.bf16.msra.mxu0 0
    %1559 = vmatprep.subr.bf16.mxu0 0
    %1560 = vmatpush1.bf16.msra.mxu0 0
    %1561 = vmatprep.mubr.bf16.mxu0 0
    %1562 = vmatmul.mubr.bf16.gmra.mrb[0].mxu0 %v1527
    %v1563 = vpop.f32.mrb[0].mxu0
    %v1564 = vadd.f32 %v1512, %v1563
    %v1565 = vpop.f32.mrb[0].mxu0
    %v1566 = vpop.f32.mrb[0].mxu0
    %v1567 = vadd.f32 %v1512, %v1566
    %v1568 = vpop.f32.mrb[0].mxu0
    %1569 = vdwg.mxu0
    %v1570 = vmax.f32 %v1564, 0.0
    %v1571 = vmax.f32 %v1567, 0.0
    %v1572 = vpack.c.bf16 %v1571, %v1570
    %v1573 = vld [vmem:[%s27] sm:$0xf]
    %v1574 = vld [vmem:[%s27 + $0x4] sm:$0xf]
    %v1575 = vld [vmem:[%s27 + $0x8] sm:$0xf]
    %v1576 = vld [vmem:[%s27 + $0xc] sm:$0xf]
    %v1577 = vld [vmem:[%s27 + $0x10] sm:$0xf]
    %v1578 = vld [vmem:[%s27 + $0x14] sm:$0xf]
    %v1579 = vld [vmem:[%s27 + $0x18] sm:$0xf]
    %v1580 = vld [vmem:[%s27 + $0x1c] sm:$0xf]
    %v1581 = vld [vmem:[%s27 + $0x20] sm:$0xf]
    %v1582 = vld [vmem:[%s27 + $0x24] sm:$0xf]
    %v1583 = vld [vmem:[%s27 + $0x28] sm:$0xf]
    %v1584 = vld [vmem:[%s27 + $0x2c] sm:$0xf]
    %v1585 = vld [vmem:[%s27 + $0x30] sm:$0xf]
    %v1586 = vld [vmem:[%s27 + $0x34] sm:$0xf]
    %v1587 = vld [vmem:[%s27 + $0x38] sm:$0xf]
    %v1588 = vld [vmem:[%s27 + $0x3c] sm:$0xf]
    %v1605 = vunpack.c.l.b16 %v1573
    %v1606 = vunpack.c.l.b16 %v1574
    %v1607 = vunpack.c.l.b16 %v1575
    %v1608 = vunpack.c.l.b16 %v1576
    %v1609 = vunpack.c.l.b16 %v1577
    %v1610 = vunpack.c.l.b16 %v1578
    %v1611 = vunpack.c.l.b16 %v1579
    %v1612 = vunpack.c.l.b16 %v1580
    %v1613 = vunpack.c.l.b16 %v1581
    %v1614 = vunpack.c.l.b16 %v1582
    %v1615 = vunpack.c.l.b16 %v1583
    %v1616 = vunpack.c.l.b16 %v1584
    %v1617 = vunpack.c.l.b16 %v1585
    %v1618 = vunpack.c.l.b16 %v1586
    %v1619 = vunpack.c.l.b16 %v1587
    %v1620 = vunpack.c.l.b16 %v1588
    %v1621 = vpack.c.b16 %v1606, %v1605
    %v1622 = vpack.c.b16 %v1608, %v1607
    %v1623 = vpack.c.b16 %v1610, %v1609
    %v1624 = vpack.c.b16 %v1612, %v1611
    %v1625 = vpack.c.b16 %v1614, %v1613
    %v1626 = vpack.c.b16 %v1616, %v1615
    %v1627 = vpack.c.b16 %v1618, %v1617
    %v1628 = vpack.c.b16 %v1620, %v1619
    %1637 = vmatprep.subr.bf16.mxu0 0
    %1638 = vmatpush1.bf16.msra.mxu0 %v1621
    %1639 = vmatprep.subr.bf16.mxu0 0
    %1640 = vmatpush1.bf16.msra.mxu0 %v1622
    %1641 = vmatprep.subr.bf16.mxu0 0
    %1642 = vmatpush1.bf16.msra.mxu0 %v1623
    %1643 = vmatprep.subr.bf16.mxu0 0
    %1644 = vmatpush1.bf16.msra.mxu0 %v1624
    %1645 = vmatprep.subr.bf16.mxu0 0
    %1646 = vmatpush1.bf16.msra.mxu0 %v1625
    %1647 = vmatprep.subr.bf16.mxu0 0
    %1648 = vmatpush1.bf16.msra.mxu0 %v1626
    %1649 = vmatprep.subr.bf16.mxu0 0
    %1650 = vmatpush1.bf16.msra.mxu0 %v1627
    %1651 = vmatprep.subr.bf16.mxu0 0
    %1652 = vmatpush1.bf16.msra.mxu0 %v1628
    %1653 = vmatprep.subr.bf16.mxu0 0
    %1654 = vmatpush1.bf16.msra.mxu0 0
    %1655 = vmatprep.subr.bf16.mxu0 0
    %1656 = vmatpush1.bf16.msra.mxu0 0
    %1657 = vmatprep.subr.bf16.mxu0 0
    %1658 = vmatpush1.bf16.msra.mxu0 0
    %1659 = vmatprep.subr.bf16.mxu0 0
    %1660 = vmatpush1.bf16.msra.mxu0 0
    %1661 = vmatprep.subr.bf16.mxu0 0
    %1662 = vmatpush1.bf16.msra.mxu0 0
    %1663 = vmatprep.subr.bf16.mxu0 0
    %1664 = vmatpush1.bf16.msra.mxu0 0
    %1665 = vmatprep.subr.bf16.mxu0 0
    %1666 = vmatpush1.bf16.msra.mxu0 0
    %1667 = vmatprep.subr.bf16.mxu0 0
    %1668 = vmatpush1.bf16.msra.mxu0 0
    %1669 = vmatprep.mubr.bf16.mxu0 0
    %1670 = vmatmul.mubr.bf16.gmra.mrb[0].mxu0 %v1572
    %v1671 = vpop.f32.mrb[0].mxu0
    %v1672 = vadd.f32 0.0, %v1671
    %v1673 = vpop.f32.mrb[0].mxu0
    %v1674 = vpop.f32.mrb[0].mxu0
    %v1675 = vadd.f32 0.0, %v1674
    %v1676 = vpop.f32.mrb[0].mxu0
    %1677 = vdwg.mxu0
    %v1678 = vadd.f32 %v1456, %v1672
    %v1679 = vadd.f32 %v1457, %v1675
    %v1680 = vld [vmem:[%s29] sm:$0x1]
    %v1682 = vlaneseq
    %v1683 = vshrl.u32 %v1682, 7
    %v1684 = vsub.s32 0, %v1683
    %v1685 = vrot.slane %v1680, %v1684
    %v1687 = vadd.f32 %v1678, %v1685
    %v1688 = vadd.f32 %v1679, %v1685
    %v1689 = vld [vmem:[%s31] sm:$0x1]
    %v1690 = vld [vmem:[%s33] sm:$0x1]
    %v1691 = vsel %vm247, %v1687, 0.0
    %1692 = vadd.xlane.f32.xlu0 %v1691
    %v1693 = vpop.xlane.xlu0 %1692
    %v1694 = vsel %vm247, %v1688, 0.0
    %1695 = vadd.xlane.f32.xlu0 %v1694
    %v1696 = vpop.xlane.xlu0 %1695
    %v1697 = vmul.f32 %v1693, %v254
    %v1698 = vmul.f32 %v1696, %v254
    %v1699 = vsub.f32 %v1687, %v1697
    %v1700 = vsub.f32 %v1688, %v1698
    %v1701 = vmul.f32 %v1699, %v1699
    %v1702 = vmul.f32 %v1700, %v1700
    %v1703 = vsel %vm247, %v1701, 0.0
    %1704 = vadd.xlane.f32.xlu0 %v1703
    %v1705 = vpop.xlane.xlu0 %1704
    %v1706 = vsel %vm247, %v1702, 0.0
    %1707 = vadd.xlane.f32.xlu0 %v1706
    %v1708 = vpop.xlane.xlu0 %1707
    %v1709 = vmul.f32 %v1705, %v254
    %v1710 = vmul.f32 %v1708, %v254
    %v1711 = vadd.f32 %v1709, 1e-05
    %v1712 = vadd.f32 %v1710, 1e-05
    %v1713 = vrsqrt.pop %v1711
    %v1714 = vrsqrt.pop %v1712
    %v1715 = vmul.f32 %v1699, %v1713
    %v1716 = vmul.f32 %v1700, %v1714
    %v1718 = vlaneseq
    %v1719 = vshrl.u32 %v1718, 7
    %v1720 = vsub.s32 0, %v1719
    %v1721 = vrot.slane %v1689, %v1720
    %v1723 = vmul.f32 %v1715, %v1721
    %v1724 = vmul.f32 %v1716, %v1721
    %v1726 = vlaneseq
    %v1727 = vshrl.u32 %v1726, 7
    %v1728 = vsub.s32 0, %v1727
    %v1729 = vrot.slane %v1690, %v1728
    %v1731 = vadd.f32 %v1723, %v1729
    %v1732 = vadd.f32 %v1724, %v1729
    %v1733 = vpack.c.bf16 %v1732, %v1731
    %v1734 = vld [vmem:[%s35] sm:$0xf]
    %v1735 = vld [vmem:[%s35 + $0x4] sm:$0xf]
    %v1736 = vld [vmem:[%s35 + $0x8] sm:$0xf]
    %v1737 = vld [vmem:[%s35 + $0xc] sm:$0xf]
    %v1738 = vld [vmem:[%s37] sm:$0x1]
    %v1740 = vlaneseq
    %v1741 = vshrl.u32 %v1740, 7
    %v1742 = vsub.s32 0, %v1741
    %v1743 = vrot.slane %v1738, %v1742
    %v1749 = vunpack.c.l.b16 %v1734
    %v1750 = vunpack.c.l.b16 %v1735
    %v1751 = vunpack.c.l.b16 %v1736
    %v1752 = vunpack.c.l.b16 %v1737
    %v1753 = vpack.c.b16 %v1750, %v1749
    %v1754 = vpack.c.b16 %v1752, %v1751
    %v1758 = vsel %vm247, %v1733, 0
    %1760 = vmatprep.subr.bf16.mxu0 0
    %1761 = vmatpush1.bf16.msra.mxu0 %v1753
    %1762 = vmatprep.subr.bf16.mxu0 0
    %1763 = vmatpush1.bf16.msra.mxu0 %v1754
    %1764 = vmatprep.subr.bf16.mxu0 0
    %1765 = vmatpush1.bf16.msra.mxu0 0
    %1766 = vmatprep.subr.bf16.mxu0 0
    %1767 = vmatpush1.bf16.msra.mxu0 0
    %1768 = vmatprep.subr.bf16.mxu0 0
    %1769 = vmatpush1.bf16.msra.mxu0 0
    %1770 = vmatprep.subr.bf16.mxu0 0
    %1771 = vmatpush1.bf16.msra.mxu0 0
    %1772 = vmatprep.subr.bf16.mxu0 0
    %1773 = vmatpush1.bf16.msra.mxu0 0
    %1774 = vmatprep.subr.bf16.mxu0 0
    %1775 = vmatpush1.bf16.msra.mxu0 0
    %1776 = vmatprep.subr.bf16.mxu0 0
    %1777 = vmatpush1.bf16.msra.mxu0 0
    %1778 = vmatprep.subr.bf16.mxu0 0
    %1779 = vmatpush1.bf16.msra.mxu0 0
    %1780 = vmatprep.subr.bf16.mxu0 0
    %1781 = vmatpush1.bf16.msra.mxu0 0
    %1782 = vmatprep.subr.bf16.mxu0 0
    %1783 = vmatpush1.bf16.msra.mxu0 0
    %1784 = vmatprep.subr.bf16.mxu0 0
    %1785 = vmatpush1.bf16.msra.mxu0 0
    %1786 = vmatprep.subr.bf16.mxu0 0
    %1787 = vmatpush1.bf16.msra.mxu0 0
    %1788 = vmatprep.subr.bf16.mxu0 0
    %1789 = vmatpush1.bf16.msra.mxu0 0
    %1790 = vmatprep.subr.bf16.mxu0 0
    %1791 = vmatpush1.bf16.msra.mxu0 0
    %1792 = vmatprep.mubr.bf16.mxu0 0
    %1793 = vmatmul.mubr.bf16.gmra.mrb[0].mxu0 %v1758
    %v1794 = vpop.f32.mrb[0].mxu0
    %v1795 = vadd.f32 %v1743, %v1794
    %v1796 = vpop.f32.mrb[0].mxu0
    %v1797 = vpop.f32.mrb[0].mxu0
    %v1798 = vadd.f32 %v1743, %v1797
    %v1799 = vpop.f32.mrb[0].mxu0
    %1800 = vdwg.mxu0
    %v1801 = vmul.f32 %v1795, 0.35355338
    %v1802 = vmul.f32 %v1798, 0.35355338
    %v1803 = vld [vmem:[%s39] sm:$0xf]
    %v1804 = vld [vmem:[%s39 + $0x4] sm:$0xf]
    %v1805 = vld [vmem:[%s39 + $0x8] sm:$0xf]
    %v1806 = vld [vmem:[%s39 + $0xc] sm:$0xf]
    %v1807 = vpack.c.bf16 %v1801, %v1801
    %v1808 = vpack.c.bf16 %v1802, %v1802
    %v1809 = vpack.c.bf16 %v1795, %v1795
    %v1810 = vpack.c.bf16 %v1798, %v1798
    %1812 = vrot.lane.b32.xlu0 %v1809, 96
    %v1813 = vpop.permute.xlu0 %1812
    %v1815 = vsel %vm372, %v1807, 0
    %v1818 = vsel %vm372, %v1813, 0
    %1820 = vmatprep.subr.bf16.mxu0 0
    %1821 = vmatpush1.bf16.xpose.msra.mxu0 %v1818
    %1822 = vmatprep.subr.bf16.mxu0 0
    %1823 = vmatpush1.bf16.xpose.msra.mxu0 0
    %1824 = vmatprep.subr.bf16.mxu0 0
    %1825 = vmatpush1.bf16.xpose.msra.mxu0 0
    %1826 = vmatprep.subr.bf16.mxu0 0
    %1827 = vmatpush1.bf16.xpose.msra.mxu0 0
    %1828 = vmatprep.subr.bf16.mxu0 0
    %1829 = vmatpush1.bf16.xpose.msra.mxu0 0
    %1830 = vmatprep.subr.bf16.mxu0 0
    %1831 = vmatpush1.bf16.xpose.msra.mxu0 0
    %1832 = vmatprep.subr.bf16.mxu0 0
    %1833 = vmatpush1.bf16.xpose.msra.mxu0 0
    %1834 = vmatprep.subr.bf16.mxu0 0
    %1835 = vmatpush1.bf16.xpose.msra.mxu0 0
    %1836 = vmatprep.subr.bf16.mxu0 0
    %1837 = vmatpush1.bf16.xpose.msra.mxu0 0
    %1838 = vmatprep.subr.bf16.mxu0 0
    %1839 = vmatpush1.bf16.xpose.msra.mxu0 0
    %1840 = vmatprep.subr.bf16.mxu0 0
    %1841 = vmatpush1.bf16.xpose.msra.mxu0 0
    %1842 = vmatprep.subr.bf16.mxu0 0
    %1843 = vmatpush1.bf16.xpose.msra.mxu0 0
    %1844 = vmatprep.subr.bf16.mxu0 0
    %1845 = vmatpush1.bf16.xpose.msra.mxu0 0
    %1846 = vmatprep.subr.bf16.mxu0 0
    %1847 = vmatpush1.bf16.xpose.msra.mxu0 0
    %1848 = vmatprep.subr.bf16.mxu0 0
    %1849 = vmatpush1.bf16.xpose.msra.mxu0 0
    %1850 = vmatprep.subr.bf16.mxu0 0
    %1851 = vmatpush1.bf16.xpose.msra.mxu0 0
    %1852 = vmatprep.mubr.bf16.mxu0 0
    %1853 = vmatmul.mubr.bf16.gmra.mrb[0].mxu0 %v1815
    %v1854 = vpop.f32.mrb[0].mxu0
    %v1855 = vadd.f32 %v244, %v1854
    %v1856 = vpop.f32.mrb[0].mxu0
    %v1857 = vpop.f32.mrb[0].mxu0
    %v1858 = vpop.f32.mrb[0].mxu0
    %1859 = vdwg.mxu0
    %1861 = vrot.lane.b32.xlu0 %v1810, 96
    %v1862 = vpop.permute.xlu0 %1861
    %v1864 = vsel %vm372, %v1808, 0
    %v1867 = vsel %vm372, %v1862, 0
    %1869 = vmatprep.subr.bf16.mxu0 0
    %1870 = vmatpush1.bf16.xpose.msra.mxu0 %v1867
    %1871 = vmatprep.subr.bf16.mxu0 0
    %1872 = vmatpush1.bf16.xpose.msra.mxu0 0
    %1873 = vmatprep.subr.bf16.mxu0 0
    %1874 = vmatpush1.bf16.xpose.msra.mxu0 0
    %1875 = vmatprep.subr.bf16.mxu0 0
    %1876 = vmatpush1.bf16.xpose.msra.mxu0 0
    %1877 = vmatprep.subr.bf16.mxu0 0
    %1878 = vmatpush1.bf16.xpose.msra.mxu0 0
    %1879 = vmatprep.subr.bf16.mxu0 0
    %1880 = vmatpush1.bf16.xpose.msra.mxu0 0
    %1881 = vmatprep.subr.bf16.mxu0 0
    %1882 = vmatpush1.bf16.xpose.msra.mxu0 0
    %1883 = vmatprep.subr.bf16.mxu0 0
    %1884 = vmatpush1.bf16.xpose.msra.mxu0 0
    %1885 = vmatprep.subr.bf16.mxu0 0
    %1886 = vmatpush1.bf16.xpose.msra.mxu0 0
    %1887 = vmatprep.subr.bf16.mxu0 0
    %1888 = vmatpush1.bf16.xpose.msra.mxu0 0
    %1889 = vmatprep.subr.bf16.mxu0 0
    %1890 = vmatpush1.bf16.xpose.msra.mxu0 0
    %1891 = vmatprep.subr.bf16.mxu0 0
    %1892 = vmatpush1.bf16.xpose.msra.mxu0 0
    %1893 = vmatprep.subr.bf16.mxu0 0
    %1894 = vmatpush1.bf16.xpose.msra.mxu0 0
    %1895 = vmatprep.subr.bf16.mxu0 0
    %1896 = vmatpush1.bf16.xpose.msra.mxu0 0
    %1897 = vmatprep.subr.bf16.mxu0 0
    %1898 = vmatpush1.bf16.xpose.msra.mxu0 0
    %1899 = vmatprep.subr.bf16.mxu0 0
    %1900 = vmatpush1.bf16.xpose.msra.mxu0 0
    %1901 = vmatprep.mubr.bf16.mxu0 0
    %1902 = vmatmul.mubr.bf16.gmra.mrb[0].mxu0 %v1864
    %v1903 = vpop.f32.mrb[0].mxu0
    %v1904 = vadd.f32 %v244, %v1903
    %v1905 = vpop.f32.mrb[0].mxu0
    %v1906 = vpop.f32.mrb[0].mxu0
    %v1907 = vpop.f32.mrb[0].mxu0
    %1908 = vdwg.mxu0
    %v1909 = vsel %vm372, %v1855, -inf
    %1910 = vmax.xlane.f32.xlu0 %v1909
    %v1911 = vpop.xlane.xlu0 %1910
    %v1912 = vsel %vm372, %v1904, -inf
    %1913 = vmax.xlane.f32.xlu0 %v1912
    %v1914 = vpop.xlane.xlu0 %1913
    %v1915 = vsub.f32 %v1855, %v1911
    %v1916 = vsub.f32 %v1904, %v1914
    %v1917 = vmul.f32 %v1915, 1.442695
    %v1918 = vpow.pop %v1917
    %v1919 = vmul.f32 %v1916, 1.442695
    %v1920 = vpow.pop %v1919
    %v1921 = vsel %vm372, %v1918, 0.0
    %1922 = vadd.xlane.f32.xlu0 %v1921
    %v1923 = vpop.xlane.xlu0 %1922
    %v1924 = vsel %vm372, %v1920, 0.0
    %1925 = vadd.xlane.f32.xlu0 %v1924
    %v1926 = vpop.xlane.xlu0 %1925
    %v1927 = vrcp.pop %v1923
    %v1928 = vrcp.pop %v1926
    %v1929 = vmul.f32 %v1918, %v1927
    %v1930 = vmul.f32 %v1920, %v1928
    %v1931 = vpack.c.bf16 %v1929, %v1929
    %v1932 = vpack.c.bf16 %v1930, %v1930
    %1933 = vrot.lane.b32.xlu0 %v1809, 64
    %v1934 = vpop.permute.xlu0 %1933
    %v1936 = vsel %vm372, %v1931, 0
    %v1939 = vsel %vm497, %v1934, 0
    %1941 = vmatprep.subr.bf16.mxu0 0
    %1942 = vmatpush1.bf16.msra.mxu0 %v1939
    %1943 = vmatprep.subr.bf16.mxu0 0
    %1944 = vmatpush1.bf16.msra.mxu0 0
    %1945 = vmatprep.subr.bf16.mxu0 0
    %1946 = vmatpush1.bf16.msra.mxu0 0
    %1947 = vmatprep.subr.bf16.mxu0 0
    %1948 = vmatpush1.bf16.msra.mxu0 0
    %1949 = vmatprep.subr.bf16.mxu0 0
    %1950 = vmatpush1.bf16.msra.mxu0 0
    %1951 = vmatprep.subr.bf16.mxu0 0
    %1952 = vmatpush1.bf16.msra.mxu0 0
    %1953 = vmatprep.subr.bf16.mxu0 0
    %1954 = vmatpush1.bf16.msra.mxu0 0
    %1955 = vmatprep.subr.bf16.mxu0 0
    %1956 = vmatpush1.bf16.msra.mxu0 0
    %1957 = vmatprep.subr.bf16.mxu0 0
    %1958 = vmatpush1.bf16.msra.mxu0 0
    %1959 = vmatprep.subr.bf16.mxu0 0
    %1960 = vmatpush1.bf16.msra.mxu0 0
    %1961 = vmatprep.subr.bf16.mxu0 0
    %1962 = vmatpush1.bf16.msra.mxu0 0
    %1963 = vmatprep.subr.bf16.mxu0 0
    %1964 = vmatpush1.bf16.msra.mxu0 0
    %1965 = vmatprep.subr.bf16.mxu0 0
    %1966 = vmatpush1.bf16.msra.mxu0 0
    %1967 = vmatprep.subr.bf16.mxu0 0
    %1968 = vmatpush1.bf16.msra.mxu0 0
    %1969 = vmatprep.subr.bf16.mxu0 0
    %1970 = vmatpush1.bf16.msra.mxu0 0
    %1971 = vmatprep.subr.bf16.mxu0 0
    %1972 = vmatpush1.bf16.msra.mxu0 0
    %1973 = vmatprep.mubr.bf16.mxu0 0
    %1974 = vmatmul.mubr.bf16.gmra.mrb[0].mxu0 %v1936
    %v1975 = vpop.f32.mrb[0].mxu0
    %v1976 = vadd.f32 0.0, %v1975
    %v1977 = vpop.f32.mrb[0].mxu0
    %v1978 = vpop.f32.mrb[0].mxu0
    %v1979 = vpop.f32.mrb[0].mxu0
    %1980 = vdwg.mxu0
    %1981 = vrot.lane.b32.xlu0 %v1810, 64
    %v1982 = vpop.permute.xlu0 %1981
    %v1984 = vsel %vm372, %v1932, 0
    %v1987 = vsel %vm497, %v1982, 0
    %1989 = vmatprep.subr.bf16.mxu0 0
    %1990 = vmatpush1.bf16.msra.mxu0 %v1987
    %1991 = vmatprep.subr.bf16.mxu0 0
    %1992 = vmatpush1.bf16.msra.mxu0 0
    %1993 = vmatprep.subr.bf16.mxu0 0
    %1994 = vmatpush1.bf16.msra.mxu0 0
    %1995 = vmatprep.subr.bf16.mxu0 0
    %1996 = vmatpush1.bf16.msra.mxu0 0
    %1997 = vmatprep.subr.bf16.mxu0 0
    %1998 = vmatpush1.bf16.msra.mxu0 0
    %1999 = vmatprep.subr.bf16.mxu0 0
    %2000 = vmatpush1.bf16.msra.mxu0 0
    %2001 = vmatprep.subr.bf16.mxu0 0
    %2002 = vmatpush1.bf16.msra.mxu0 0
    %2003 = vmatprep.subr.bf16.mxu0 0
    %2004 = vmatpush1.bf16.msra.mxu0 0
    %2005 = vmatprep.subr.bf16.mxu0 0
    %2006 = vmatpush1.bf16.msra.mxu0 0
    %2007 = vmatprep.subr.bf16.mxu0 0
    %2008 = vmatpush1.bf16.msra.mxu0 0
    %2009 = vmatprep.subr.bf16.mxu0 0
    %2010 = vmatpush1.bf16.msra.mxu0 0
    %2011 = vmatprep.subr.bf16.mxu0 0
    %2012 = vmatpush1.bf16.msra.mxu0 0
    %2013 = vmatprep.subr.bf16.mxu0 0
    %2014 = vmatpush1.bf16.msra.mxu0 0
    %2015 = vmatprep.subr.bf16.mxu0 0
    %2016 = vmatpush1.bf16.msra.mxu0 0
    %2017 = vmatprep.subr.bf16.mxu0 0
    %2018 = vmatpush1.bf16.msra.mxu0 0
    %2019 = vmatprep.subr.bf16.mxu0 0
    %2020 = vmatpush1.bf16.msra.mxu0 0
    %2021 = vmatprep.mubr.bf16.mxu0 0
    %2022 = vmatmul.mubr.bf16.gmra.mrb[0].mxu0 %v1984
    %v2023 = vpop.f32.mrb[0].mxu0
    %v2024 = vadd.f32 0.0, %v2023
    %v2025 = vpop.f32.mrb[0].mxu0
    %v2026 = vpop.f32.mrb[0].mxu0
    %v2027 = vpop.f32.mrb[0].mxu0
    %2028 = vdwg.mxu0
    %v2029 = vpack.c.bf16 %v2024, %v1976
    %2031 = vrot.lane.b32.xlu0 %v1807, 120
    %v2032 = vpop.permute.xlu0 %2031
    %2033 = vrot.lane.b32.xlu0 %v1809, 88
    %v2034 = vpop.permute.xlu0 %2033
    %v2036 = vsel %vm372, %v2032, 0
    %v2039 = vsel %vm372, %v2034, 0
    %2041 = vmatprep.subr.bf16.mxu0 0
    %2042 = vmatpush1.bf16.xpose.msra.mxu0 %v2039
    %2043 = vmatprep.subr.bf16.mxu0 0
    %2044 = vmatpush1.bf16.xpose.msra.mxu0 0
    %2045 = vmatprep.subr.bf16.mxu0 0
    %2046 = vmatpush1.bf16.xpose.msra.mxu0 0
    %2047 = vmatprep.subr.bf16.mxu0 0
    %2048 = vmatpush1.bf16.xpose.msra.mxu0 0
    %2049 = vmatprep.subr.bf16.mxu0 0
    %2050 = vmatpush1.bf16.xpose.msra.mxu0 0
    %2051 = vmatprep.subr.bf16.mxu0 0
    %2052 = vmatpush1.bf16.xpose.msra.mxu0 0
    %2053 = vmatprep.subr.bf16.mxu0 0
    %2054 = vmatpush1.bf16.xpose.msra.mxu0 0
    %2055 = vmatprep.subr.bf16.mxu0 0
    %2056 = vmatpush1.bf16.xpose.msra.mxu0 0
    %2057 = vmatprep.subr.bf16.mxu0 0
    %2058 = vmatpush1.bf16.xpose.msra.mxu0 0
    %2059 = vmatprep.subr.bf16.mxu0 0
    %2060 = vmatpush1.bf16.xpose.msra.mxu0 0
    %2061 = vmatprep.subr.bf16.mxu0 0
    %2062 = vmatpush1.bf16.xpose.msra.mxu0 0
    %2063 = vmatprep.subr.bf16.mxu0 0
    %2064 = vmatpush1.bf16.xpose.msra.mxu0 0
    %2065 = vmatprep.subr.bf16.mxu0 0
    %2066 = vmatpush1.bf16.xpose.msra.mxu0 0
    %2067 = vmatprep.subr.bf16.mxu0 0
    %2068 = vmatpush1.bf16.xpose.msra.mxu0 0
    %2069 = vmatprep.subr.bf16.mxu0 0
    %2070 = vmatpush1.bf16.xpose.msra.mxu0 0
    %2071 = vmatprep.subr.bf16.mxu0 0
    %2072 = vmatpush1.bf16.xpose.msra.mxu0 0
    %2073 = vmatprep.mubr.bf16.mxu0 0
    %2074 = vmatmul.mubr.bf16.gmra.mrb[0].mxu0 %v2036
    %v2075 = vpop.f32.mrb[0].mxu0
    %v2076 = vadd.f32 %v244, %v2075
    %v2077 = vpop.f32.mrb[0].mxu0
    %v2078 = vpop.f32.mrb[0].mxu0
    %v2079 = vpop.f32.mrb[0].mxu0
    %2080 = vdwg.mxu0
    %2082 = vrot.lane.b32.xlu0 %v1808, 120
    %v2083 = vpop.permute.xlu0 %2082
    %2084 = vrot.lane.b32.xlu0 %v1810, 88
    %v2085 = vpop.permute.xlu0 %2084
    %v2087 = vsel %vm372, %v2083, 0
    %v2090 = vsel %vm372, %v2085, 0
    %2092 = vmatprep.subr.bf16.mxu0 0
    %2093 = vmatpush1.bf16.xpose.msra.mxu0 %v2090
    %2094 = vmatprep.subr.bf16.mxu0 0
    %2095 = vmatpush1.bf16.xpose.msra.mxu0 0
    %2096 = vmatprep.subr.bf16.mxu0 0
    %2097 = vmatpush1.bf16.xpose.msra.mxu0 0
    %2098 = vmatprep.subr.bf16.mxu0 0
    %2099 = vmatpush1.bf16.xpose.msra.mxu0 0
    %2100 = vmatprep.subr.bf16.mxu0 0
    %2101 = vmatpush1.bf16.xpose.msra.mxu0 0
    %2102 = vmatprep.subr.bf16.mxu0 0
    %2103 = vmatpush1.bf16.xpose.msra.mxu0 0
    %2104 = vmatprep.subr.bf16.mxu0 0
    %2105 = vmatpush1.bf16.xpose.msra.mxu0 0
    %2106 = vmatprep.subr.bf16.mxu0 0
    %2107 = vmatpush1.bf16.xpose.msra.mxu0 0
    %2108 = vmatprep.subr.bf16.mxu0 0
    %2109 = vmatpush1.bf16.xpose.msra.mxu0 0
    %2110 = vmatprep.subr.bf16.mxu0 0
    %2111 = vmatpush1.bf16.xpose.msra.mxu0 0
    %2112 = vmatprep.subr.bf16.mxu0 0
    %2113 = vmatpush1.bf16.xpose.msra.mxu0 0
    %2114 = vmatprep.subr.bf16.mxu0 0
    %2115 = vmatpush1.bf16.xpose.msra.mxu0 0
    %2116 = vmatprep.subr.bf16.mxu0 0
    %2117 = vmatpush1.bf16.xpose.msra.mxu0 0
    %2118 = vmatprep.subr.bf16.mxu0 0
    %2119 = vmatpush1.bf16.xpose.msra.mxu0 0
    %2120 = vmatprep.subr.bf16.mxu0 0
    %2121 = vmatpush1.bf16.xpose.msra.mxu0 0
    %2122 = vmatprep.subr.bf16.mxu0 0
    %2123 = vmatpush1.bf16.xpose.msra.mxu0 0
    %2124 = vmatprep.mubr.bf16.mxu0 0
    %2125 = vmatmul.mubr.bf16.gmra.mrb[0].mxu0 %v2087
    %v2126 = vpop.f32.mrb[0].mxu0
    %v2127 = vadd.f32 %v244, %v2126
    %v2128 = vpop.f32.mrb[0].mxu0
    %v2129 = vpop.f32.mrb[0].mxu0
    %v2130 = vpop.f32.mrb[0].mxu0
    %2131 = vdwg.mxu0
    %v2132 = vsel %vm372, %v2076, -inf
    %2133 = vmax.xlane.f32.xlu0 %v2132
    %v2134 = vpop.xlane.xlu0 %2133
    %v2135 = vsel %vm372, %v2127, -inf
    %2136 = vmax.xlane.f32.xlu0 %v2135
    %v2137 = vpop.xlane.xlu0 %2136
    %v2138 = vsub.f32 %v2076, %v2134
    %v2139 = vsub.f32 %v2127, %v2137
    %v2140 = vmul.f32 %v2138, 1.442695
    %v2141 = vpow.pop %v2140
    %v2142 = vmul.f32 %v2139, 1.442695
    %v2143 = vpow.pop %v2142
    %v2144 = vsel %vm372, %v2141, 0.0
    %2145 = vadd.xlane.f32.xlu0 %v2144
    %v2146 = vpop.xlane.xlu0 %2145
    %v2147 = vsel %vm372, %v2143, 0.0
    %2148 = vadd.xlane.f32.xlu0 %v2147
    %v2149 = vpop.xlane.xlu0 %2148
    %v2150 = vrcp.pop %v2146
    %v2151 = vrcp.pop %v2149
    %v2152 = vmul.f32 %v2141, %v2150
    %v2153 = vmul.f32 %v2143, %v2151
    %v2154 = vpack.c.bf16 %v2152, %v2152
    %v2155 = vpack.c.bf16 %v2153, %v2153
    %2156 = vrot.lane.b32.xlu0 %v1809, 56
    %v2157 = vpop.permute.xlu0 %2156
    %v2159 = vsel %vm372, %v2154, 0
    %v2162 = vsel %vm497, %v2157, 0
    %2164 = vmatprep.subr.bf16.mxu0 0
    %2165 = vmatpush1.bf16.msra.mxu0 %v2162
    %2166 = vmatprep.subr.bf16.mxu0 0
    %2167 = vmatpush1.bf16.msra.mxu0 0
    %2168 = vmatprep.subr.bf16.mxu0 0
    %2169 = vmatpush1.bf16.msra.mxu0 0
    %2170 = vmatprep.subr.bf16.mxu0 0
    %2171 = vmatpush1.bf16.msra.mxu0 0
    %2172 = vmatprep.subr.bf16.mxu0 0
    %2173 = vmatpush1.bf16.msra.mxu0 0
    %2174 = vmatprep.subr.bf16.mxu0 0
    %2175 = vmatpush1.bf16.msra.mxu0 0
    %2176 = vmatprep.subr.bf16.mxu0 0
    %2177 = vmatpush1.bf16.msra.mxu0 0
    %2178 = vmatprep.subr.bf16.mxu0 0
    %2179 = vmatpush1.bf16.msra.mxu0 0
    %2180 = vmatprep.subr.bf16.mxu0 0
    %2181 = vmatpush1.bf16.msra.mxu0 0
    %2182 = vmatprep.subr.bf16.mxu0 0
    %2183 = vmatpush1.bf16.msra.mxu0 0
    %2184 = vmatprep.subr.bf16.mxu0 0
    %2185 = vmatpush1.bf16.msra.mxu0 0
    %2186 = vmatprep.subr.bf16.mxu0 0
    %2187 = vmatpush1.bf16.msra.mxu0 0
    %2188 = vmatprep.subr.bf16.mxu0 0
    %2189 = vmatpush1.bf16.msra.mxu0 0
    %2190 = vmatprep.subr.bf16.mxu0 0
    %2191 = vmatpush1.bf16.msra.mxu0 0
    %2192 = vmatprep.subr.bf16.mxu0 0
    %2193 = vmatpush1.bf16.msra.mxu0 0
    %2194 = vmatprep.subr.bf16.mxu0 0
    %2195 = vmatpush1.bf16.msra.mxu0 0
    %2196 = vmatprep.mubr.bf16.mxu0 0
    %2197 = vmatmul.mubr.bf16.gmra.mrb[0].mxu0 %v2159
    %v2198 = vpop.f32.mrb[0].mxu0
    %v2199 = vadd.f32 0.0, %v2198
    %v2200 = vpop.f32.mrb[0].mxu0
    %v2201 = vpop.f32.mrb[0].mxu0
    %v2202 = vpop.f32.mrb[0].mxu0
    %2203 = vdwg.mxu0
    %2204 = vrot.lane.b32.xlu0 %v1810, 56
    %v2205 = vpop.permute.xlu0 %2204
    %v2207 = vsel %vm372, %v2155, 0
    %v2210 = vsel %vm497, %v2205, 0
    %2212 = vmatprep.subr.bf16.mxu0 0
    %2213 = vmatpush1.bf16.msra.mxu0 %v2210
    %2214 = vmatprep.subr.bf16.mxu0 0
    %2215 = vmatpush1.bf16.msra.mxu0 0
    %2216 = vmatprep.subr.bf16.mxu0 0
    %2217 = vmatpush1.bf16.msra.mxu0 0
    %2218 = vmatprep.subr.bf16.mxu0 0
    %2219 = vmatpush1.bf16.msra.mxu0 0
    %2220 = vmatprep.subr.bf16.mxu0 0
    %2221 = vmatpush1.bf16.msra.mxu0 0
    %2222 = vmatprep.subr.bf16.mxu0 0
    %2223 = vmatpush1.bf16.msra.mxu0 0
    %2224 = vmatprep.subr.bf16.mxu0 0
    %2225 = vmatpush1.bf16.msra.mxu0 0
    %2226 = vmatprep.subr.bf16.mxu0 0
    %2227 = vmatpush1.bf16.msra.mxu0 0
    %2228 = vmatprep.subr.bf16.mxu0 0
    %2229 = vmatpush1.bf16.msra.mxu0 0
    %2230 = vmatprep.subr.bf16.mxu0 0
    %2231 = vmatpush1.bf16.msra.mxu0 0
    %2232 = vmatprep.subr.bf16.mxu0 0
    %2233 = vmatpush1.bf16.msra.mxu0 0
    %2234 = vmatprep.subr.bf16.mxu0 0
    %2235 = vmatpush1.bf16.msra.mxu0 0
    %2236 = vmatprep.subr.bf16.mxu0 0
    %2237 = vmatpush1.bf16.msra.mxu0 0
    %2238 = vmatprep.subr.bf16.mxu0 0
    %2239 = vmatpush1.bf16.msra.mxu0 0
    %2240 = vmatprep.subr.bf16.mxu0 0
    %2241 = vmatpush1.bf16.msra.mxu0 0
    %2242 = vmatprep.subr.bf16.mxu0 0
    %2243 = vmatpush1.bf16.msra.mxu0 0
    %2244 = vmatprep.mubr.bf16.mxu0 0
    %2245 = vmatmul.mubr.bf16.gmra.mrb[0].mxu0 %v2207
    %v2246 = vpop.f32.mrb[0].mxu0
    %v2247 = vadd.f32 0.0, %v2246
    %v2248 = vpop.f32.mrb[0].mxu0
    %v2249 = vpop.f32.mrb[0].mxu0
    %v2250 = vpop.f32.mrb[0].mxu0
    %2251 = vdwg.mxu0
    %v2252 = vpack.c.bf16 %v2247, %v2199
    %v2254 = vsel %vm372, %v2252, 0
    %v2257 = vsel %vm497, %v1804, 0
    %2259 = vmatprep.subr.bf16.mxu0 0
    %2260 = vmatpush1.bf16.msra.mxu0 %v2257
    %2261 = vmatprep.subr.bf16.mxu0 0
    %2262 = vmatpush1.bf16.msra.mxu0 0
    %2263 = vmatprep.subr.bf16.mxu0 0
    %2264 = vmatpush1.bf16.msra.mxu0 0
    %2265 = vmatprep.subr.bf16.mxu0 0
    %2266 = vmatpush1.bf16.msra.mxu0 0
    %2267 = vmatprep.subr.bf16.mxu0 0
    %2268 = vmatpush1.bf16.msra.mxu0 0
    %2269 = vmatprep.subr.bf16.mxu0 0
    %2270 = vmatpush1.bf16.msra.mxu0 0
    %2271 = vmatprep.subr.bf16.mxu0 0
    %2272 = vmatpush1.bf16.msra.mxu0 0
    %2273 = vmatprep.subr.bf16.mxu0 0
    %2274 = vmatpush1.bf16.msra.mxu0 0
    %2275 = vmatprep.subr.bf16.mxu0 0
    %2276 = vmatpush1.bf16.msra.mxu0 0
    %2277 = vmatprep.subr.bf16.mxu0 0
    %2278 = vmatpush1.bf16.msra.mxu0 0
    %2279 = vmatprep.subr.bf16.mxu0 0
    %2280 = vmatpush1.bf16.msra.mxu0 0
    %2281 = vmatprep.subr.bf16.mxu0 0
    %2282 = vmatpush1.bf16.msra.mxu0 0
    %2283 = vmatprep.subr.bf16.mxu0 0
    %2284 = vmatpush1.bf16.msra.mxu0 0
    %2285 = vmatprep.subr.bf16.mxu0 0
    %2286 = vmatpush1.bf16.msra.mxu0 0
    %2287 = vmatprep.subr.bf16.mxu0 0
    %2288 = vmatpush1.bf16.msra.mxu0 0
    %2289 = vmatprep.subr.bf16.mxu0 0
    %2290 = vmatpush1.bf16.msra.mxu0 0
    %2291 = vmatprep.mubr.bf16.mxu0 0
    %2292 = vmatmul.mubr.bf16.gmra.mrb[0].mxu0 %v2254
    %v2293 = vpop.f32.mrb[0].mxu0
    %v2294 = vadd.f32 0.0, %v2293
    %v2295 = vpop.f32.mrb[0].mxu0
    %v2296 = vpop.f32.mrb[0].mxu0
    %v2297 = vadd.f32 0.0, %v2296
    %v2298 = vpop.f32.mrb[0].mxu0
    %2299 = vdwg.mxu0
    %v2301 = vsel %vm372, %v2029, 0
    %v2304 = vsel %vm497, %v1803, 0
    %2306 = vmatprep.subr.bf16.mxu0 0
    %2307 = vmatpush1.bf16.msra.mxu0 %v2304
    %2308 = vmatprep.subr.bf16.mxu0 0
    %2309 = vmatpush1.bf16.msra.mxu0 0
    %2310 = vmatprep.subr.bf16.mxu0 0
    %2311 = vmatpush1.bf16.msra.mxu0 0
    %2312 = vmatprep.subr.bf16.mxu0 0
    %2313 = vmatpush1.bf16.msra.mxu0 0
    %2314 = vmatprep.subr.bf16.mxu0 0
    %2315 = vmatpush1.bf16.msra.mxu0 0
    %2316 = vmatprep.subr.bf16.mxu0 0
    %2317 = vmatpush1.bf16.msra.mxu0 0
    %2318 = vmatprep.subr.bf16.mxu0 0
    %2319 = vmatpush1.bf16.msra.mxu0 0
    %2320 = vmatprep.subr.bf16.mxu0 0
    %2321 = vmatpush1.bf16.msra.mxu0 0
    %2322 = vmatprep.subr.bf16.mxu0 0
    %2323 = vmatpush1.bf16.msra.mxu0 0
    %2324 = vmatprep.subr.bf16.mxu0 0
    %2325 = vmatpush1.bf16.msra.mxu0 0
    %2326 = vmatprep.subr.bf16.mxu0 0
    %2327 = vmatpush1.bf16.msra.mxu0 0
    %2328 = vmatprep.subr.bf16.mxu0 0
    %2329 = vmatpush1.bf16.msra.mxu0 0
    %2330 = vmatprep.subr.bf16.mxu0 0
    %2331 = vmatpush1.bf16.msra.mxu0 0
    %2332 = vmatprep.subr.bf16.mxu0 0
    %2333 = vmatpush1.bf16.msra.mxu0 0
    %2334 = vmatprep.subr.bf16.mxu0 0
    %2335 = vmatpush1.bf16.msra.mxu0 0
    %2336 = vmatprep.subr.bf16.mxu0 0
    %2337 = vmatpush1.bf16.msra.mxu0 0
    %2338 = vmatprep.mubr.bf16.mxu0 0
    %2339 = vmatmul.mubr.bf16.gmra.mrb[0].mxu0 %v2301
    %v2340 = vpop.f32.mrb[0].mxu0
    %v2341 = vadd.f32 %v2294, %v2340
    %v2342 = vpop.f32.mrb[0].mxu0
    %v2343 = vpop.f32.mrb[0].mxu0
    %v2344 = vadd.f32 %v2297, %v2343
    %v2345 = vpop.f32.mrb[0].mxu0
    %2346 = vdwg.mxu0
    %2347 = vrot.lane.b32.xlu0 %v1807, 112
    %v2348 = vpop.permute.xlu0 %2347
    %2349 = vrot.lane.b32.xlu0 %v1809, 80
    %v2350 = vpop.permute.xlu0 %2349
    %v2352 = vsel %vm372, %v2348, 0
    %v2355 = vsel %vm372, %v2350, 0
    %2357 = vmatprep.subr.bf16.mxu0 0
    %2358 = vmatpush1.bf16.xpose.msra.mxu0 %v2355
    %2359 = vmatprep.subr.bf16.mxu0 0
    %2360 = vmatpush1.bf16.xpose.msra.mxu0 0
    %2361 = vmatprep.subr.bf16.mxu0 0
    %2362 = vmatpush1.bf16.xpose.msra.mxu0 0
    %2363 = vmatprep.subr.bf16.mxu0 0
    %2364 = vmatpush1.bf16.xpose.msra.mxu0 0
    %2365 = vmatprep.subr.bf16.mxu0 0
    %2366 = vmatpush1.bf16.xpose.msra.mxu0 0
    %2367 = vmatprep.subr.bf16.mxu0 0
    %2368 = vmatpush1.bf16.xpose.msra.mxu0 0
    %2369 = vmatprep.subr.bf16.mxu0 0
    %2370 = vmatpush1.bf16.xpose.msra.mxu0 0
    %2371 = vmatprep.subr.bf16.mxu0 0
    %2372 = vmatpush1.bf16.xpose.msra.mxu0 0
    %2373 = vmatprep.subr.bf16.mxu0 0
    %2374 = vmatpush1.bf16.xpose.msra.mxu0 0
    %2375 = vmatprep.subr.bf16.mxu0 0
    %2376 = vmatpush1.bf16.xpose.msra.mxu0 0
    %2377 = vmatprep.subr.bf16.mxu0 0
    %2378 = vmatpush1.bf16.xpose.msra.mxu0 0
    %2379 = vmatprep.subr.bf16.mxu0 0
    %2380 = vmatpush1.bf16.xpose.msra.mxu0 0
    %2381 = vmatprep.subr.bf16.mxu0 0
    %2382 = vmatpush1.bf16.xpose.msra.mxu0 0
    %2383 = vmatprep.subr.bf16.mxu0 0
    %2384 = vmatpush1.bf16.xpose.msra.mxu0 0
    %2385 = vmatprep.subr.bf16.mxu0 0
    %2386 = vmatpush1.bf16.xpose.msra.mxu0 0
    %2387 = vmatprep.subr.bf16.mxu0 0
    %2388 = vmatpush1.bf16.xpose.msra.mxu0 0
    %2389 = vmatprep.mubr.bf16.mxu0 0
    %2390 = vmatmul.mubr.bf16.gmra.mrb[0].mxu0 %v2352
    %v2391 = vpop.f32.mrb[0].mxu0
    %v2392 = vadd.f32 %v244, %v2391
    %v2393 = vpop.f32.mrb[0].mxu0
    %v2394 = vpop.f32.mrb[0].mxu0
    %v2395 = vpop.f32.mrb[0].mxu0
    %2396 = vdwg.mxu0
    %2397 = vrot.lane.b32.xlu0 %v1808, 112
    %v2398 = vpop.permute.xlu0 %2397
    %2399 = vrot.lane.b32.xlu0 %v1810, 80
    %v2400 = vpop.permute.xlu0 %2399
    %v2402 = vsel %vm372, %v2398, 0
    %v2405 = vsel %vm372, %v2400, 0
    %2407 = vmatprep.subr.bf16.mxu0 0
    %2408 = vmatpush1.bf16.xpose.msra.mxu0 %v2405
    %2409 = vmatprep.subr.bf16.mxu0 0
    %2410 = vmatpush1.bf16.xpose.msra.mxu0 0
    %2411 = vmatprep.subr.bf16.mxu0 0
    %2412 = vmatpush1.bf16.xpose.msra.mxu0 0
    %2413 = vmatprep.subr.bf16.mxu0 0
    %2414 = vmatpush1.bf16.xpose.msra.mxu0 0
    %2415 = vmatprep.subr.bf16.mxu0 0
    %2416 = vmatpush1.bf16.xpose.msra.mxu0 0
    %2417 = vmatprep.subr.bf16.mxu0 0
    %2418 = vmatpush1.bf16.xpose.msra.mxu0 0
    %2419 = vmatprep.subr.bf16.mxu0 0
    %2420 = vmatpush1.bf16.xpose.msra.mxu0 0
    %2421 = vmatprep.subr.bf16.mxu0 0
    %2422 = vmatpush1.bf16.xpose.msra.mxu0 0
    %2423 = vmatprep.subr.bf16.mxu0 0
    %2424 = vmatpush1.bf16.xpose.msra.mxu0 0
    %2425 = vmatprep.subr.bf16.mxu0 0
    %2426 = vmatpush1.bf16.xpose.msra.mxu0 0
    %2427 = vmatprep.subr.bf16.mxu0 0
    %2428 = vmatpush1.bf16.xpose.msra.mxu0 0
    %2429 = vmatprep.subr.bf16.mxu0 0
    %2430 = vmatpush1.bf16.xpose.msra.mxu0 0
    %2431 = vmatprep.subr.bf16.mxu0 0
    %2432 = vmatpush1.bf16.xpose.msra.mxu0 0
    %2433 = vmatprep.subr.bf16.mxu0 0
    %2434 = vmatpush1.bf16.xpose.msra.mxu0 0
    %2435 = vmatprep.subr.bf16.mxu0 0
    %2436 = vmatpush1.bf16.xpose.msra.mxu0 0
    %2437 = vmatprep.subr.bf16.mxu0 0
    %2438 = vmatpush1.bf16.xpose.msra.mxu0 0
    %2439 = vmatprep.mubr.bf16.mxu0 0
    %2440 = vmatmul.mubr.bf16.gmra.mrb[0].mxu0 %v2402
    %v2441 = vpop.f32.mrb[0].mxu0
    %v2442 = vadd.f32 %v244, %v2441
    %v2443 = vpop.f32.mrb[0].mxu0
    %v2444 = vpop.f32.mrb[0].mxu0
    %v2445 = vpop.f32.mrb[0].mxu0
    %2446 = vdwg.mxu0
    %v2447 = vsel %vm372, %v2392, -inf
    %2448 = vmax.xlane.f32.xlu0 %v2447
    %v2449 = vpop.xlane.xlu0 %2448
    %v2450 = vsel %vm372, %v2442, -inf
    %2451 = vmax.xlane.f32.xlu0 %v2450
    %v2452 = vpop.xlane.xlu0 %2451
    %v2453 = vsub.f32 %v2392, %v2449
    %v2454 = vsub.f32 %v2442, %v2452
    %v2455 = vmul.f32 %v2453, 1.442695
    %v2456 = vpow.pop %v2455
    %v2457 = vmul.f32 %v2454, 1.442695
    %v2458 = vpow.pop %v2457
    %v2459 = vsel %vm372, %v2456, 0.0
    %2460 = vadd.xlane.f32.xlu0 %v2459
    %v2461 = vpop.xlane.xlu0 %2460
    %v2462 = vsel %vm372, %v2458, 0.0
    %2463 = vadd.xlane.f32.xlu0 %v2462
    %v2464 = vpop.xlane.xlu0 %2463
    %v2465 = vrcp.pop %v2461
    %v2466 = vrcp.pop %v2464
    %v2467 = vmul.f32 %v2456, %v2465
    %v2468 = vmul.f32 %v2458, %v2466
    %v2469 = vpack.c.bf16 %v2467, %v2467
    %v2470 = vpack.c.bf16 %v2468, %v2468
    %2471 = vrot.lane.b32.xlu0 %v1809, 48
    %v2472 = vpop.permute.xlu0 %2471
    %v2474 = vsel %vm372, %v2469, 0
    %v2477 = vsel %vm497, %v2472, 0
    %2479 = vmatprep.subr.bf16.mxu0 0
    %2480 = vmatpush1.bf16.msra.mxu0 %v2477
    %2481 = vmatprep.subr.bf16.mxu0 0
    %2482 = vmatpush1.bf16.msra.mxu0 0
    %2483 = vmatprep.subr.bf16.mxu0 0
    %2484 = vmatpush1.bf16.msra.mxu0 0
    %2485 = vmatprep.subr.bf16.mxu0 0
    %2486 = vmatpush1.bf16.msra.mxu0 0
    %2487 = vmatprep.subr.bf16.mxu0 0
    %2488 = vmatpush1.bf16.msra.mxu0 0
    %2489 = vmatprep.subr.bf16.mxu0 0
    %2490 = vmatpush1.bf16.msra.mxu0 0
    %2491 = vmatprep.subr.bf16.mxu0 0
    %2492 = vmatpush1.bf16.msra.mxu0 0
    %2493 = vmatprep.subr.bf16.mxu0 0
    %2494 = vmatpush1.bf16.msra.mxu0 0
    %2495 = vmatprep.subr.bf16.mxu0 0
    %2496 = vmatpush1.bf16.msra.mxu0 0
    %2497 = vmatprep.subr.bf16.mxu0 0
    %2498 = vmatpush1.bf16.msra.mxu0 0
    %2499 = vmatprep.subr.bf16.mxu0 0
    %2500 = vmatpush1.bf16.msra.mxu0 0
    %2501 = vmatprep.subr.bf16.mxu0 0
    %2502 = vmatpush1.bf16.msra.mxu0 0
    %2503 = vmatprep.subr.bf16.mxu0 0
    %2504 = vmatpush1.bf16.msra.mxu0 0
    %2505 = vmatprep.subr.bf16.mxu0 0
    %2506 = vmatpush1.bf16.msra.mxu0 0
    %2507 = vmatprep.subr.bf16.mxu0 0
    %2508 = vmatpush1.bf16.msra.mxu0 0
    %2509 = vmatprep.subr.bf16.mxu0 0
    %2510 = vmatpush1.bf16.msra.mxu0 0
    %2511 = vmatprep.mubr.bf16.mxu0 0
    %2512 = vmatmul.mubr.bf16.gmra.mrb[0].mxu0 %v2474
    %v2513 = vpop.f32.mrb[0].mxu0
    %v2514 = vadd.f32 0.0, %v2513
    %v2515 = vpop.f32.mrb[0].mxu0
    %v2516 = vpop.f32.mrb[0].mxu0
    %v2517 = vpop.f32.mrb[0].mxu0
    %2518 = vdwg.mxu0
    %2519 = vrot.lane.b32.xlu0 %v1810, 48
    %v2520 = vpop.permute.xlu0 %2519
    %v2522 = vsel %vm372, %v2470, 0
    %v2525 = vsel %vm497, %v2520, 0
    %2527 = vmatprep.subr.bf16.mxu0 0
    %2528 = vmatpush1.bf16.msra.mxu0 %v2525
    %2529 = vmatprep.subr.bf16.mxu0 0
    %2530 = vmatpush1.bf16.msra.mxu0 0
    %2531 = vmatprep.subr.bf16.mxu0 0
    %2532 = vmatpush1.bf16.msra.mxu0 0
    %2533 = vmatprep.subr.bf16.mxu0 0
    %2534 = vmatpush1.bf16.msra.mxu0 0
    %2535 = vmatprep.subr.bf16.mxu0 0
    %2536 = vmatpush1.bf16.msra.mxu0 0
    %2537 = vmatprep.subr.bf16.mxu0 0
    %2538 = vmatpush1.bf16.msra.mxu0 0
    %2539 = vmatprep.subr.bf16.mxu0 0
    %2540 = vmatpush1.bf16.msra.mxu0 0
    %2541 = vmatprep.subr.bf16.mxu0 0
    %2542 = vmatpush1.bf16.msra.mxu0 0
    %2543 = vmatprep.subr.bf16.mxu0 0
    %2544 = vmatpush1.bf16.msra.mxu0 0
    %2545 = vmatprep.subr.bf16.mxu0 0
    %2546 = vmatpush1.bf16.msra.mxu0 0
    %2547 = vmatprep.subr.bf16.mxu0 0
    %2548 = vmatpush1.bf16.msra.mxu0 0
    %2549 = vmatprep.subr.bf16.mxu0 0
    %2550 = vmatpush1.bf16.msra.mxu0 0
    %2551 = vmatprep.subr.bf16.mxu0 0
    %2552 = vmatpush1.bf16.msra.mxu0 0
    %2553 = vmatprep.subr.bf16.mxu0 0
    %2554 = vmatpush1.bf16.msra.mxu0 0
    %2555 = vmatprep.subr.bf16.mxu0 0
    %2556 = vmatpush1.bf16.msra.mxu0 0
    %2557 = vmatprep.subr.bf16.mxu0 0
    %2558 = vmatpush1.bf16.msra.mxu0 0
    %2559 = vmatprep.mubr.bf16.mxu0 0
    %2560 = vmatmul.mubr.bf16.gmra.mrb[0].mxu0 %v2522
    %v2561 = vpop.f32.mrb[0].mxu0
    %v2562 = vadd.f32 0.0, %v2561
    %v2563 = vpop.f32.mrb[0].mxu0
    %v2564 = vpop.f32.mrb[0].mxu0
    %v2565 = vpop.f32.mrb[0].mxu0
    %2566 = vdwg.mxu0
    %v2567 = vpack.c.bf16 %v2562, %v2514
    %v2569 = vsel %vm372, %v2567, 0
    %v2572 = vsel %vm497, %v1805, 0
    %2574 = vmatprep.subr.bf16.mxu0 0
    %2575 = vmatpush1.bf16.msra.mxu0 %v2572
    %2576 = vmatprep.subr.bf16.mxu0 0
    %2577 = vmatpush1.bf16.msra.mxu0 0
    %2578 = vmatprep.subr.bf16.mxu0 0
    %2579 = vmatpush1.bf16.msra.mxu0 0
    %2580 = vmatprep.subr.bf16.mxu0 0
    %2581 = vmatpush1.bf16.msra.mxu0 0
    %2582 = vmatprep.subr.bf16.mxu0 0
    %2583 = vmatpush1.bf16.msra.mxu0 0
    %2584 = vmatprep.subr.bf16.mxu0 0
    %2585 = vmatpush1.bf16.msra.mxu0 0
    %2586 = vmatprep.subr.bf16.mxu0 0
    %2587 = vmatpush1.bf16.msra.mxu0 0
    %2588 = vmatprep.subr.bf16.mxu0 0
    %2589 = vmatpush1.bf16.msra.mxu0 0
    %2590 = vmatprep.subr.bf16.mxu0 0
    %2591 = vmatpush1.bf16.msra.mxu0 0
    %2592 = vmatprep.subr.bf16.mxu0 0
    %2593 = vmatpush1.bf16.msra.mxu0 0
    %2594 = vmatprep.subr.bf16.mxu0 0
    %2595 = vmatpush1.bf16.msra.mxu0 0
    %2596 = vmatprep.subr.bf16.mxu0 0
    %2597 = vmatpush1.bf16.msra.mxu0 0
    %2598 = vmatprep.subr.bf16.mxu0 0
    %2599 = vmatpush1.bf16.msra.mxu0 0
    %2600 = vmatprep.subr.bf16.mxu0 0
    %2601 = vmatpush1.bf16.msra.mxu0 0
    %2602 = vmatprep.subr.bf16.mxu0 0
    %2603 = vmatpush1.bf16.msra.mxu0 0
    %2604 = vmatprep.subr.bf16.mxu0 0
    %2605 = vmatpush1.bf16.msra.mxu0 0
    %2606 = vmatprep.mubr.bf16.mxu0 0
    %2607 = vmatmul.mubr.bf16.gmra.mrb[0].mxu0 %v2569
    %v2608 = vpop.f32.mrb[0].mxu0
    %v2609 = vadd.f32 0.0, %v2608
    %v2610 = vpop.f32.mrb[0].mxu0
    %v2611 = vpop.f32.mrb[0].mxu0
    %v2612 = vadd.f32 0.0, %v2611
    %v2613 = vpop.f32.mrb[0].mxu0
    %2614 = vdwg.mxu0
    %v2615 = vadd.f32 %v2341, %v2609
    %v2616 = vadd.f32 %v2344, %v2612
    %2617 = vrot.lane.b32.xlu0 %v1807, 104
    %v2618 = vpop.permute.xlu0 %2617
    %2619 = vrot.lane.b32.xlu0 %v1809, 72
    %v2620 = vpop.permute.xlu0 %2619
    %v2622 = vsel %vm372, %v2618, 0
    %v2625 = vsel %vm372, %v2620, 0
    %2627 = vmatprep.subr.bf16.mxu0 0
    %2628 = vmatpush1.bf16.xpose.msra.mxu0 %v2625
    %2629 = vmatprep.subr.bf16.mxu0 0
    %2630 = vmatpush1.bf16.xpose.msra.mxu0 0
    %2631 = vmatprep.subr.bf16.mxu0 0
    %2632 = vmatpush1.bf16.xpose.msra.mxu0 0
    %2633 = vmatprep.subr.bf16.mxu0 0
    %2634 = vmatpush1.bf16.xpose.msra.mxu0 0
    %2635 = vmatprep.subr.bf16.mxu0 0
    %2636 = vmatpush1.bf16.xpose.msra.mxu0 0
    %2637 = vmatprep.subr.bf16.mxu0 0
    %2638 = vmatpush1.bf16.xpose.msra.mxu0 0
    %2639 = vmatprep.subr.bf16.mxu0 0
    %2640 = vmatpush1.bf16.xpose.msra.mxu0 0
    %2641 = vmatprep.subr.bf16.mxu0 0
    %2642 = vmatpush1.bf16.xpose.msra.mxu0 0
    %2643 = vmatprep.subr.bf16.mxu0 0
    %2644 = vmatpush1.bf16.xpose.msra.mxu0 0
    %2645 = vmatprep.subr.bf16.mxu0 0
    %2646 = vmatpush1.bf16.xpose.msra.mxu0 0
    %2647 = vmatprep.subr.bf16.mxu0 0
    %2648 = vmatpush1.bf16.xpose.msra.mxu0 0
    %2649 = vmatprep.subr.bf16.mxu0 0
    %2650 = vmatpush1.bf16.xpose.msra.mxu0 0
    %2651 = vmatprep.subr.bf16.mxu0 0
    %2652 = vmatpush1.bf16.xpose.msra.mxu0 0
    %2653 = vmatprep.subr.bf16.mxu0 0
    %2654 = vmatpush1.bf16.xpose.msra.mxu0 0
    %2655 = vmatprep.subr.bf16.mxu0 0
    %2656 = vmatpush1.bf16.xpose.msra.mxu0 0
    %2657 = vmatprep.subr.bf16.mxu0 0
    %2658 = vmatpush1.bf16.xpose.msra.mxu0 0
    %2659 = vmatprep.mubr.bf16.mxu0 0
    %2660 = vmatmul.mubr.bf16.gmra.mrb[0].mxu0 %v2622
    %v2661 = vpop.f32.mrb[0].mxu0
    %v2662 = vadd.f32 %v244, %v2661
    %v2663 = vpop.f32.mrb[0].mxu0
    %v2664 = vpop.f32.mrb[0].mxu0
    %v2665 = vpop.f32.mrb[0].mxu0
    %2666 = vdwg.mxu0
    %2667 = vrot.lane.b32.xlu0 %v1808, 104
    %v2668 = vpop.permute.xlu0 %2667
    %2669 = vrot.lane.b32.xlu0 %v1810, 72
    %v2670 = vpop.permute.xlu0 %2669
    %v2672 = vsel %vm372, %v2668, 0
    %v2675 = vsel %vm372, %v2670, 0
    %2677 = vmatprep.subr.bf16.mxu0 0
    %2678 = vmatpush1.bf16.xpose.msra.mxu0 %v2675
    %2679 = vmatprep.subr.bf16.mxu0 0
    %2680 = vmatpush1.bf16.xpose.msra.mxu0 0
    %2681 = vmatprep.subr.bf16.mxu0 0
    %2682 = vmatpush1.bf16.xpose.msra.mxu0 0
    %2683 = vmatprep.subr.bf16.mxu0 0
    %2684 = vmatpush1.bf16.xpose.msra.mxu0 0
    %2685 = vmatprep.subr.bf16.mxu0 0
    %2686 = vmatpush1.bf16.xpose.msra.mxu0 0
    %2687 = vmatprep.subr.bf16.mxu0 0
    %2688 = vmatpush1.bf16.xpose.msra.mxu0 0
    %2689 = vmatprep.subr.bf16.mxu0 0
    %2690 = vmatpush1.bf16.xpose.msra.mxu0 0
    %2691 = vmatprep.subr.bf16.mxu0 0
    %2692 = vmatpush1.bf16.xpose.msra.mxu0 0
    %2693 = vmatprep.subr.bf16.mxu0 0
    %2694 = vmatpush1.bf16.xpose.msra.mxu0 0
    %2695 = vmatprep.subr.bf16.mxu0 0
    %2696 = vmatpush1.bf16.xpose.msra.mxu0 0
    %2697 = vmatprep.subr.bf16.mxu0 0
    %2698 = vmatpush1.bf16.xpose.msra.mxu0 0
    %2699 = vmatprep.subr.bf16.mxu0 0
    %2700 = vmatpush1.bf16.xpose.msra.mxu0 0
    %2701 = vmatprep.subr.bf16.mxu0 0
    %2702 = vmatpush1.bf16.xpose.msra.mxu0 0
    %2703 = vmatprep.subr.bf16.mxu0 0
    %2704 = vmatpush1.bf16.xpose.msra.mxu0 0
    %2705 = vmatprep.subr.bf16.mxu0 0
    %2706 = vmatpush1.bf16.xpose.msra.mxu0 0
    %2707 = vmatprep.subr.bf16.mxu0 0
    %2708 = vmatpush1.bf16.xpose.msra.mxu0 0
    %2709 = vmatprep.mubr.bf16.mxu0 0
    %2710 = vmatmul.mubr.bf16.gmra.mrb[0].mxu0 %v2672
    %v2711 = vpop.f32.mrb[0].mxu0
    %v2712 = vadd.f32 %v244, %v2711
    %v2713 = vpop.f32.mrb[0].mxu0
    %v2714 = vpop.f32.mrb[0].mxu0
    %v2715 = vpop.f32.mrb[0].mxu0
    %2716 = vdwg.mxu0
    %v2717 = vsel %vm372, %v2662, -inf
    %2718 = vmax.xlane.f32.xlu0 %v2717
    %v2719 = vpop.xlane.xlu0 %2718
    %v2720 = vsel %vm372, %v2712, -inf
    %2721 = vmax.xlane.f32.xlu0 %v2720
    %v2722 = vpop.xlane.xlu0 %2721
    %v2723 = vsub.f32 %v2662, %v2719
    %v2724 = vsub.f32 %v2712, %v2722
    %v2725 = vmul.f32 %v2723, 1.442695
    %v2726 = vpow.pop %v2725
    %v2727 = vmul.f32 %v2724, 1.442695
    %v2728 = vpow.pop %v2727
    %v2729 = vsel %vm372, %v2726, 0.0
    %2730 = vadd.xlane.f32.xlu0 %v2729
    %v2731 = vpop.xlane.xlu0 %2730
    %v2732 = vsel %vm372, %v2728, 0.0
    %2733 = vadd.xlane.f32.xlu0 %v2732
    %v2734 = vpop.xlane.xlu0 %2733
    %v2735 = vrcp.pop %v2731
    %v2736 = vrcp.pop %v2734
    %v2737 = vmul.f32 %v2726, %v2735
    %v2738 = vmul.f32 %v2728, %v2736
    %v2739 = vpack.c.bf16 %v2737, %v2737
    %v2740 = vpack.c.bf16 %v2738, %v2738
    %2741 = vrot.lane.b32.xlu0 %v1809, 40
    %v2742 = vpop.permute.xlu0 %2741
    %v2744 = vsel %vm372, %v2739, 0
    %v2747 = vsel %vm497, %v2742, 0
    %2749 = vmatprep.subr.bf16.mxu0 0
    %2750 = vmatpush1.bf16.msra.mxu0 %v2747
    %2751 = vmatprep.subr.bf16.mxu0 0
    %2752 = vmatpush1.bf16.msra.mxu0 0
    %2753 = vmatprep.subr.bf16.mxu0 0
    %2754 = vmatpush1.bf16.msra.mxu0 0
    %2755 = vmatprep.subr.bf16.mxu0 0
    %2756 = vmatpush1.bf16.msra.mxu0 0
    %2757 = vmatprep.subr.bf16.mxu0 0
    %2758 = vmatpush1.bf16.msra.mxu0 0
    %2759 = vmatprep.subr.bf16.mxu0 0
    %2760 = vmatpush1.bf16.msra.mxu0 0
    %2761 = vmatprep.subr.bf16.mxu0 0
    %2762 = vmatpush1.bf16.msra.mxu0 0
    %2763 = vmatprep.subr.bf16.mxu0 0
    %2764 = vmatpush1.bf16.msra.mxu0 0
    %2765 = vmatprep.subr.bf16.mxu0 0
    %2766 = vmatpush1.bf16.msra.mxu0 0
    %2767 = vmatprep.subr.bf16.mxu0 0
    %2768 = vmatpush1.bf16.msra.mxu0 0
    %2769 = vmatprep.subr.bf16.mxu0 0
    %2770 = vmatpush1.bf16.msra.mxu0 0
    %2771 = vmatprep.subr.bf16.mxu0 0
    %2772 = vmatpush1.bf16.msra.mxu0 0
    %2773 = vmatprep.subr.bf16.mxu0 0
    %2774 = vmatpush1.bf16.msra.mxu0 0
    %2775 = vmatprep.subr.bf16.mxu0 0
    %2776 = vmatpush1.bf16.msra.mxu0 0
    %2777 = vmatprep.subr.bf16.mxu0 0
    %2778 = vmatpush1.bf16.msra.mxu0 0
    %2779 = vmatprep.subr.bf16.mxu0 0
    %2780 = vmatpush1.bf16.msra.mxu0 0
    %2781 = vmatprep.mubr.bf16.mxu0 0
    %2782 = vmatmul.mubr.bf16.gmra.mrb[0].mxu0 %v2744
    %v2783 = vpop.f32.mrb[0].mxu0
    %v2784 = vadd.f32 0.0, %v2783
    %v2785 = vpop.f32.mrb[0].mxu0
    %v2786 = vpop.f32.mrb[0].mxu0
    %v2787 = vpop.f32.mrb[0].mxu0
    %2788 = vdwg.mxu0
    %2789 = vrot.lane.b32.xlu0 %v1810, 40
    %v2790 = vpop.permute.xlu0 %2789
    %v2792 = vsel %vm372, %v2740, 0
    %v2795 = vsel %vm497, %v2790, 0
    %2797 = vmatprep.subr.bf16.mxu0 0
    %2798 = vmatpush1.bf16.msra.mxu0 %v2795
    %2799 = vmatprep.subr.bf16.mxu0 0
    %2800 = vmatpush1.bf16.msra.mxu0 0
    %2801 = vmatprep.subr.bf16.mxu0 0
    %2802 = vmatpush1.bf16.msra.mxu0 0
    %2803 = vmatprep.subr.bf16.mxu0 0
    %2804 = vmatpush1.bf16.msra.mxu0 0
    %2805 = vmatprep.subr.bf16.mxu0 0
    %2806 = vmatpush1.bf16.msra.mxu0 0
    %2807 = vmatprep.subr.bf16.mxu0 0
    %2808 = vmatpush1.bf16.msra.mxu0 0
    %2809 = vmatprep.subr.bf16.mxu0 0
    %2810 = vmatpush1.bf16.msra.mxu0 0
    %2811 = vmatprep.subr.bf16.mxu0 0
    %2812 = vmatpush1.bf16.msra.mxu0 0
    %2813 = vmatprep.subr.bf16.mxu0 0
    %2814 = vmatpush1.bf16.msra.mxu0 0
    %2815 = vmatprep.subr.bf16.mxu0 0
    %2816 = vmatpush1.bf16.msra.mxu0 0
    %2817 = vmatprep.subr.bf16.mxu0 0
    %2818 = vmatpush1.bf16.msra.mxu0 0
    %2819 = vmatprep.subr.bf16.mxu0 0
    %2820 = vmatpush1.bf16.msra.mxu0 0
    %2821 = vmatprep.subr.bf16.mxu0 0
    %2822 = vmatpush1.bf16.msra.mxu0 0
    %2823 = vmatprep.subr.bf16.mxu0 0
    %2824 = vmatpush1.bf16.msra.mxu0 0
    %2825 = vmatprep.subr.bf16.mxu0 0
    %2826 = vmatpush1.bf16.msra.mxu0 0
    %2827 = vmatprep.subr.bf16.mxu0 0
    %2828 = vmatpush1.bf16.msra.mxu0 0
    %2829 = vmatprep.mubr.bf16.mxu0 0
    %2830 = vmatmul.mubr.bf16.gmra.mrb[0].mxu0 %v2792
    %v2831 = vpop.f32.mrb[0].mxu0
    %v2832 = vadd.f32 0.0, %v2831
    %v2833 = vpop.f32.mrb[0].mxu0
    %v2834 = vpop.f32.mrb[0].mxu0
    %v2835 = vpop.f32.mrb[0].mxu0
    %2836 = vdwg.mxu0
    %v2837 = vpack.c.bf16 %v2832, %v2784
    %v2839 = vsel %vm372, %v2837, 0
    %v2842 = vsel %vm497, %v1806, 0
    %2844 = vmatprep.subr.bf16.mxu0 0
    %2845 = vmatpush1.bf16.msra.mxu0 %v2842
    %2846 = vmatprep.subr.bf16.mxu0 0
    %2847 = vmatpush1.bf16.msra.mxu0 0
    %2848 = vmatprep.subr.bf16.mxu0 0
    %2849 = vmatpush1.bf16.msra.mxu0 0
    %2850 = vmatprep.subr.bf16.mxu0 0
    %2851 = vmatpush1.bf16.msra.mxu0 0
    %2852 = vmatprep.subr.bf16.mxu0 0
    %2853 = vmatpush1.bf16.msra.mxu0 0
    %2854 = vmatprep.subr.bf16.mxu0 0
    %2855 = vmatpush1.bf16.msra.mxu0 0
    %2856 = vmatprep.subr.bf16.mxu0 0
    %2857 = vmatpush1.bf16.msra.mxu0 0
    %2858 = vmatprep.subr.bf16.mxu0 0
    %2859 = vmatpush1.bf16.msra.mxu0 0
    %2860 = vmatprep.subr.bf16.mxu0 0
    %2861 = vmatpush1.bf16.msra.mxu0 0
    %2862 = vmatprep.subr.bf16.mxu0 0
    %2863 = vmatpush1.bf16.msra.mxu0 0
    %2864 = vmatprep.subr.bf16.mxu0 0
    %2865 = vmatpush1.bf16.msra.mxu0 0
    %2866 = vmatprep.subr.bf16.mxu0 0
    %2867 = vmatpush1.bf16.msra.mxu0 0
    %2868 = vmatprep.subr.bf16.mxu0 0
    %2869 = vmatpush1.bf16.msra.mxu0 0
    %2870 = vmatprep.subr.bf16.mxu0 0
    %2871 = vmatpush1.bf16.msra.mxu0 0
    %2872 = vmatprep.subr.bf16.mxu0 0
    %2873 = vmatpush1.bf16.msra.mxu0 0
    %2874 = vmatprep.subr.bf16.mxu0 0
    %2875 = vmatpush1.bf16.msra.mxu0 0
    %2876 = vmatprep.mubr.bf16.mxu0 0
    %2877 = vmatmul.mubr.bf16.gmra.mrb[0].mxu0 %v2839
    %v2878 = vpop.f32.mrb[0].mxu0
    %v2879 = vadd.f32 0.0, %v2878
    %v2880 = vpop.f32.mrb[0].mxu0
    %v2881 = vpop.f32.mrb[0].mxu0
    %v2882 = vadd.f32 0.0, %v2881
    %v2883 = vpop.f32.mrb[0].mxu0
    %2884 = vdwg.mxu0
    %v2885 = vadd.f32 %v2615, %v2879
    %v2886 = vadd.f32 %v2616, %v2882
    %v2887 = vadd.f32 %v1687, %v2885
    %v2888 = vadd.f32 %v1688, %v2886
    %v2889 = vld [vmem:[%s41] sm:$0x1]
    %v2891 = vlaneseq
    %v2892 = vshrl.u32 %v2891, 7
    %v2893 = vsub.s32 0, %v2892
    %v2894 = vrot.slane %v2889, %v2893
    %v2896 = vadd.f32 %v2887, %v2894
    %v2897 = vadd.f32 %v2888, %v2894
    %v2898 = vld [vmem:[%s43] sm:$0x1]
    %v2899 = vld [vmem:[%s45] sm:$0x1]
    %v2900 = vsel %vm247, %v2896, 0.0
    %2901 = vadd.xlane.f32.xlu0 %v2900
    %v2902 = vpop.xlane.xlu0 %2901
    %v2903 = vsel %vm247, %v2897, 0.0
    %2904 = vadd.xlane.f32.xlu0 %v2903
    %v2905 = vpop.xlane.xlu0 %2904
    %v2906 = vmul.f32 %v2902, %v254
    %v2907 = vmul.f32 %v2905, %v254
    %v2908 = vsub.f32 %v2896, %v2906
    %v2909 = vsub.f32 %v2897, %v2907
    %v2910 = vmul.f32 %v2908, %v2908
    %v2911 = vmul.f32 %v2909, %v2909
    %v2912 = vsel %vm247, %v2910, 0.0
    %2913 = vadd.xlane.f32.xlu0 %v2912
    %v2914 = vpop.xlane.xlu0 %2913
    %v2915 = vsel %vm247, %v2911, 0.0
    %2916 = vadd.xlane.f32.xlu0 %v2915
    %v2917 = vpop.xlane.xlu0 %2916
    %v2918 = vmul.f32 %v2914, %v254
    %v2919 = vmul.f32 %v2917, %v254
    %v2920 = vadd.f32 %v2918, 1e-05
    %v2921 = vadd.f32 %v2919, 1e-05
    %v2922 = vrsqrt.pop %v2920
    %v2923 = vrsqrt.pop %v2921
    %v2924 = vmul.f32 %v2908, %v2922
    %v2925 = vmul.f32 %v2909, %v2923
    %v2927 = vlaneseq
    %v2928 = vshrl.u32 %v2927, 7
    %v2929 = vsub.s32 0, %v2928
    %v2930 = vrot.slane %v2898, %v2929
    %v2932 = vmul.f32 %v2924, %v2930
    %v2933 = vmul.f32 %v2925, %v2930
    %v2935 = vlaneseq
    %v2936 = vshrl.u32 %v2935, 7
    %v2937 = vsub.s32 0, %v2936
    %v2938 = vrot.slane %v2899, %v2937
    %v2940 = vadd.f32 %v2932, %v2938
    %v2941 = vadd.f32 %v2933, %v2938
    %v2942 = vpack.c.bf16 %v2941, %v2940
    %v2943 = vld [vmem:[%s47] sm:$0xf]
    %v2944 = vld [vmem:[%s47 + $0x4] sm:$0xf]
    %v2945 = vld [vmem:[%s47 + $0x8] sm:$0xf]
    %v2946 = vld [vmem:[%s47 + $0xc] sm:$0xf]
    %v2947 = vld [vmem:[%s49] sm:$0x1]
    %v2949 = vlaneseq
    %v2950 = vshrl.u32 %v2949, 7
    %v2951 = vsub.s32 0, %v2950
    %v2952 = vrot.slane %v2947, %v2951
    %v2958 = vunpack.c.l.b16 %v2943
    %v2959 = vunpack.c.l.b16 %v2944
    %v2960 = vunpack.c.l.b16 %v2945
    %v2961 = vunpack.c.l.b16 %v2946
    %v2962 = vpack.c.b16 %v2959, %v2958
    %v2963 = vpack.c.b16 %v2961, %v2960
    %v2967 = vsel %vm247, %v2942, 0
    %2969 = vmatprep.subr.bf16.mxu0 0
    %2970 = vmatpush1.bf16.msra.mxu0 %v2962
    %2971 = vmatprep.subr.bf16.mxu0 0
    %2972 = vmatpush1.bf16.msra.mxu0 %v2963
    %2973 = vmatprep.subr.bf16.mxu0 0
    %2974 = vmatpush1.bf16.msra.mxu0 0
    %2975 = vmatprep.subr.bf16.mxu0 0
    %2976 = vmatpush1.bf16.msra.mxu0 0
    %2977 = vmatprep.subr.bf16.mxu0 0
    %2978 = vmatpush1.bf16.msra.mxu0 0
    %2979 = vmatprep.subr.bf16.mxu0 0
    %2980 = vmatpush1.bf16.msra.mxu0 0
    %2981 = vmatprep.subr.bf16.mxu0 0
    %2982 = vmatpush1.bf16.msra.mxu0 0
    %2983 = vmatprep.subr.bf16.mxu0 0
    %2984 = vmatpush1.bf16.msra.mxu0 0
    %2985 = vmatprep.subr.bf16.mxu0 0
    %2986 = vmatpush1.bf16.msra.mxu0 0
    %2987 = vmatprep.subr.bf16.mxu0 0
    %2988 = vmatpush1.bf16.msra.mxu0 0
    %2989 = vmatprep.subr.bf16.mxu0 0
    %2990 = vmatpush1.bf16.msra.mxu0 0
    %2991 = vmatprep.subr.bf16.mxu0 0
    %2992 = vmatpush1.bf16.msra.mxu0 0
    %2993 = vmatprep.subr.bf16.mxu0 0
    %2994 = vmatpush1.bf16.msra.mxu0 0
    %2995 = vmatprep.subr.bf16.mxu0 0
    %2996 = vmatpush1.bf16.msra.mxu0 0
    %2997 = vmatprep.subr.bf16.mxu0 0
    %2998 = vmatpush1.bf16.msra.mxu0 0
    %2999 = vmatprep.subr.bf16.mxu0 0
    %3000 = vmatpush1.bf16.msra.mxu0 0
    %3001 = vmatprep.mubr.bf16.mxu0 0
    %3002 = vmatmul.mubr.bf16.gmra.mrb[0].mxu0 %v2967
    %v3003 = vpop.f32.mrb[0].mxu0
    %v3004 = vadd.f32 %v2952, %v3003
    %v3005 = vpop.f32.mrb[0].mxu0
    %v3006 = vpop.f32.mrb[0].mxu0
    %v3007 = vadd.f32 %v2952, %v3006
    %v3008 = vpop.f32.mrb[0].mxu0
    %3009 = vdwg.mxu0
    %v3010 = vmax.f32 %v3004, 0.0
    %v3011 = vmax.f32 %v3007, 0.0
    %v3012 = vpack.c.bf16 %v3011, %v3010
    %v3013 = vld [vmem:[%s51] sm:$0xf]
    %v3014 = vld [vmem:[%s51 + $0x4] sm:$0xf]
    %v3015 = vld [vmem:[%s51 + $0x8] sm:$0xf]
    %v3016 = vld [vmem:[%s51 + $0xc] sm:$0xf]
    %v3017 = vld [vmem:[%s51 + $0x10] sm:$0xf]
    %v3018 = vld [vmem:[%s51 + $0x14] sm:$0xf]
    %v3019 = vld [vmem:[%s51 + $0x18] sm:$0xf]
    %v3020 = vld [vmem:[%s51 + $0x1c] sm:$0xf]
    %v3021 = vld [vmem:[%s51 + $0x20] sm:$0xf]
    %v3022 = vld [vmem:[%s51 + $0x24] sm:$0xf]
    %v3023 = vld [vmem:[%s51 + $0x28] sm:$0xf]
    %v3024 = vld [vmem:[%s51 + $0x2c] sm:$0xf]
    %v3025 = vld [vmem:[%s51 + $0x30] sm:$0xf]
    %v3026 = vld [vmem:[%s51 + $0x34] sm:$0xf]
    %v3027 = vld [vmem:[%s51 + $0x38] sm:$0xf]
    %v3028 = vld [vmem:[%s51 + $0x3c] sm:$0xf]
    %v3045 = vunpack.c.l.b16 %v3013
    %v3046 = vunpack.c.l.b16 %v3014
    %v3047 = vunpack.c.l.b16 %v3015
    %v3048 = vunpack.c.l.b16 %v3016
    %v3049 = vunpack.c.l.b16 %v3017
    %v3050 = vunpack.c.l.b16 %v3018
    %v3051 = vunpack.c.l.b16 %v3019
    %v3052 = vunpack.c.l.b16 %v3020
    %v3053 = vunpack.c.l.b16 %v3021
    %v3054 = vunpack.c.l.b16 %v3022
    %v3055 = vunpack.c.l.b16 %v3023
    %v3056 = vunpack.c.l.b16 %v3024
    %v3057 = vunpack.c.l.b16 %v3025
    %v3058 = vunpack.c.l.b16 %v3026
    %v3059 = vunpack.c.l.b16 %v3027
    %v3060 = vunpack.c.l.b16 %v3028
    %v3061 = vpack.c.b16 %v3046, %v3045
    %v3062 = vpack.c.b16 %v3048, %v3047
    %v3063 = vpack.c.b16 %v3050, %v3049
    %v3064 = vpack.c.b16 %v3052, %v3051
    %v3065 = vpack.c.b16 %v3054, %v3053
    %v3066 = vpack.c.b16 %v3056, %v3055
    %v3067 = vpack.c.b16 %v3058, %v3057
    %v3068 = vpack.c.b16 %v3060, %v3059
    %3077 = vmatprep.subr.bf16.mxu0 0
    %3078 = vmatpush1.bf16.msra.mxu0 %v3061
    %3079 = vmatprep.subr.bf16.mxu0 0
    %3080 = vmatpush1.bf16.msra.mxu0 %v3062
    %3081 = vmatprep.subr.bf16.mxu0 0
    %3082 = vmatpush1.bf16.msra.mxu0 %v3063
    %3083 = vmatprep.subr.bf16.mxu0 0
    %3084 = vmatpush1.bf16.msra.mxu0 %v3064
    %3085 = vmatprep.subr.bf16.mxu0 0
    %3086 = vmatpush1.bf16.msra.mxu0 %v3065
    %3087 = vmatprep.subr.bf16.mxu0 0
    %3088 = vmatpush1.bf16.msra.mxu0 %v3066
    %3089 = vmatprep.subr.bf16.mxu0 0
    %3090 = vmatpush1.bf16.msra.mxu0 %v3067
    %3091 = vmatprep.subr.bf16.mxu0 0
    %3092 = vmatpush1.bf16.msra.mxu0 %v3068
    %3093 = vmatprep.subr.bf16.mxu0 0
    %3094 = vmatpush1.bf16.msra.mxu0 0
    %3095 = vmatprep.subr.bf16.mxu0 0
    %3096 = vmatpush1.bf16.msra.mxu0 0
    %3097 = vmatprep.subr.bf16.mxu0 0
    %3098 = vmatpush1.bf16.msra.mxu0 0
    %3099 = vmatprep.subr.bf16.mxu0 0
    %3100 = vmatpush1.bf16.msra.mxu0 0
    %3101 = vmatprep.subr.bf16.mxu0 0
    %3102 = vmatpush1.bf16.msra.mxu0 0
    %3103 = vmatprep.subr.bf16.mxu0 0
    %3104 = vmatpush1.bf16.msra.mxu0 0
    %3105 = vmatprep.subr.bf16.mxu0 0
    %3106 = vmatpush1.bf16.msra.mxu0 0
    %3107 = vmatprep.subr.bf16.mxu0 0
    %3108 = vmatpush1.bf16.msra.mxu0 0
    %3109 = vmatprep.mubr.bf16.mxu0 0
    %3110 = vmatmul.mubr.bf16.gmra.mrb[0].mxu0 %v3012
    %v3111 = vpop.f32.mrb[0].mxu0
    %v3112 = vadd.f32 0.0, %v3111
    %v3113 = vpop.f32.mrb[0].mxu0
    %v3114 = vpop.f32.mrb[0].mxu0
    %v3115 = vadd.f32 0.0, %v3114
    %v3116 = vpop.f32.mrb[0].mxu0
    %3117 = vdwg.mxu0
    %v3118 = vadd.f32 %v2896, %v3112
    %v3119 = vadd.f32 %v2897, %v3115
    %v3120 = vld [vmem:[%s53] sm:$0x1]
    %v3122 = vlaneseq
    %v3123 = vshrl.u32 %v3122, 7
    %v3124 = vsub.s32 0, %v3123
    %v3125 = vrot.slane %v3120, %v3124
    %v3127 = vadd.f32 %v3118, %v3125
    %v3128 = vadd.f32 %v3119, %v3125
    %v3129 = vld [vmem:[%s55] sm:$0x1]
    %v3130 = vld [vmem:[%s57] sm:$0x1]
    %v3131 = vsel %vm247, %v3127, 0.0
    %3132 = vadd.xlane.f32.xlu0 %v3131
    %v3133 = vpop.xlane.xlu0 %3132
    %v3134 = vsel %vm247, %v3128, 0.0
    %3135 = vadd.xlane.f32.xlu0 %v3134
    %v3136 = vpop.xlane.xlu0 %3135
    %v3137 = vmul.f32 %v3133, %v254
    %v3138 = vmul.f32 %v3136, %v254
    %v3139 = vsub.f32 %v3127, %v3137
    %v3140 = vsub.f32 %v3128, %v3138
    %v3141 = vmul.f32 %v3139, %v3139
    %v3142 = vmul.f32 %v3140, %v3140
    %v3143 = vsel %vm247, %v3141, 0.0
    %3144 = vadd.xlane.f32.xlu0 %v3143
    %v3145 = vpop.xlane.xlu0 %3144
    %v3146 = vsel %vm247, %v3142, 0.0
    %3147 = vadd.xlane.f32.xlu0 %v3146
    %v3148 = vpop.xlane.xlu0 %3147
    %v3149 = vmul.f32 %v3145, %v254
    %v3150 = vmul.f32 %v3148, %v254
    %v3151 = vadd.f32 %v3149, 1e-05
    %v3152 = vadd.f32 %v3150, 1e-05
    %v3153 = vrsqrt.pop %v3151
    %v3154 = vrsqrt.pop %v3152
    %v3155 = vmul.f32 %v3139, %v3153
    %v3156 = vmul.f32 %v3140, %v3154
    %v3158 = vlaneseq
    %v3159 = vshrl.u32 %v3158, 7
    %v3160 = vsub.s32 0, %v3159
    %v3161 = vrot.slane %v3129, %v3160
    %v3163 = vmul.f32 %v3155, %v3161
    %v3164 = vmul.f32 %v3156, %v3161
    %v3166 = vlaneseq
    %v3167 = vshrl.u32 %v3166, 7
    %v3168 = vsub.s32 0, %v3167
    %v3169 = vrot.slane %v3130, %v3168
    %v3171 = vadd.f32 %v3163, %v3169
    %v3172 = vadd.f32 %v3164, %v3169
    %v3173 = vpack.c.bf16 %v3172, %v3171
    %v3174 = vld [vmem:[%s59] sm:$0xf]
    %v3175 = vld [vmem:[%s59 + $0x4] sm:$0xf]
    %v3176 = vld [vmem:[%s59 + $0x8] sm:$0xf]
    %v3177 = vld [vmem:[%s59 + $0xc] sm:$0xf]
    %v3178 = vld [vmem:[%s61] sm:$0x1]
    %v3180 = vlaneseq
    %v3181 = vshrl.u32 %v3180, 7
    %v3182 = vsub.s32 0, %v3181
    %v3183 = vrot.slane %v3178, %v3182
    %v3189 = vunpack.c.l.b16 %v3174
    %v3190 = vunpack.c.l.b16 %v3175
    %v3191 = vunpack.c.l.b16 %v3176
    %v3192 = vunpack.c.l.b16 %v3177
    %v3193 = vpack.c.b16 %v3190, %v3189
    %v3194 = vpack.c.b16 %v3192, %v3191
    %v3198 = vsel %vm247, %v3173, 0
    %3200 = vmatprep.subr.bf16.mxu0 0
    %3201 = vmatpush1.bf16.msra.mxu0 %v3193
    %3202 = vmatprep.subr.bf16.mxu0 0
    %3203 = vmatpush1.bf16.msra.mxu0 %v3194
    %3204 = vmatprep.subr.bf16.mxu0 0
    %3205 = vmatpush1.bf16.msra.mxu0 0
    %3206 = vmatprep.subr.bf16.mxu0 0
    %3207 = vmatpush1.bf16.msra.mxu0 0
    %3208 = vmatprep.subr.bf16.mxu0 0
    %3209 = vmatpush1.bf16.msra.mxu0 0
    %3210 = vmatprep.subr.bf16.mxu0 0
    %3211 = vmatpush1.bf16.msra.mxu0 0
    %3212 = vmatprep.subr.bf16.mxu0 0
    %3213 = vmatpush1.bf16.msra.mxu0 0
    %3214 = vmatprep.subr.bf16.mxu0 0
    %3215 = vmatpush1.bf16.msra.mxu0 0
    %3216 = vmatprep.subr.bf16.mxu0 0
    %3217 = vmatpush1.bf16.msra.mxu0 0
    %3218 = vmatprep.subr.bf16.mxu0 0
    %3219 = vmatpush1.bf16.msra.mxu0 0
    %3220 = vmatprep.subr.bf16.mxu0 0
    %3221 = vmatpush1.bf16.msra.mxu0 0
    %3222 = vmatprep.subr.bf16.mxu0 0
    %3223 = vmatpush1.bf16.msra.mxu0 0
    %3224 = vmatprep.subr.bf16.mxu0 0
    %3225 = vmatpush1.bf16.msra.mxu0 0
    %3226 = vmatprep.subr.bf16.mxu0 0
    %3227 = vmatpush1.bf16.msra.mxu0 0
    %3228 = vmatprep.subr.bf16.mxu0 0
    %3229 = vmatpush1.bf16.msra.mxu0 0
    %3230 = vmatprep.subr.bf16.mxu0 0
    %3231 = vmatpush1.bf16.msra.mxu0 0
    %3232 = vmatprep.mubr.bf16.mxu0 0
    %3233 = vmatmul.mubr.bf16.gmra.mrb[0].mxu0 %v3198
    %v3234 = vpop.f32.mrb[0].mxu0
    %v3235 = vadd.f32 %v3183, %v3234
    %v3236 = vpop.f32.mrb[0].mxu0
    %v3237 = vpop.f32.mrb[0].mxu0
    %v3238 = vadd.f32 %v3183, %v3237
    %v3239 = vpop.f32.mrb[0].mxu0
    %3240 = vdwg.mxu0
    %3241 = vst [vmem:[#allocation2] sm:$0xff] %v3235
    %3242 = vst [vmem:[#allocation2 + $0x8] sm:$0xff] %v3238
    // Predicated region
    $region126: #{gpt_forward.1} parent=1 // pred_check
      _
    $region127: #{gpt_forward.1} parent=1 // pred_check_branch
      %3244 = sbr.rel (0) target = $region129
    $region128: #{gpt_forward.1} parent=1 // pred_region
      %s3246 = ssub.s32 256, 256
      %3247 = vsyncadd [#allocation3], %s3246
      %s3248 = sshll.u32 [#allocation2], 4
      %s3249 = int_to_ptr.vmem [resolvable:$true] %s3248
      %3254 = dma.vmem_to_hbm [thread:$0]  %s3249, 256, %s63, [#allocation3], 128, 128, 8
    $region129: #{gpt_forward.1} parent=1 // pred_fallthru
      _
    // Predicated region
    $region130: #{gpt_forward.1} parent=1 // pred_check
      _
    $region131: #{gpt_forward.1} parent=1 // pred_check_branch
      %3256 = sbr.rel (0) target = $region133
    $region132: #{gpt_forward.1} parent=1 // pred_region
      %3257 = dma.done [#allocation3], 256
    $region133: #{gpt_forward.1} parent=1 // pred_fallthru
      _
    %3258 = vsyncpa [#allocation3], 1

</llo_original>
